<compile_context>
chip_gen: v7x
topology: tpu7x:2x2x1
jax: 0.10.0
libtpu: 0.0.40
codegen_flags: <defaults>
</compile_context>

<pallas_src>
import jax
import jax.numpy as jnp
from jax import lax
from jax.experimental import pallas as pl
from jax.experimental.pallas import tpu as pltpu

_F32 = jnp.float32
_TAPS = tuple((dy, dx) for dy in (-1, 0, 1) for dx in (-1, 0, 1))   # tap t = (dy+1)*3+(dx+1)


def _stack_w3x3(w):
    """PyTorch (Cout, Cin, 3, 3) -> (Cout, 9*Cin) with tap-major column blocks."""
    cout, cin = w.shape[0], w.shape[1]
    return jnp.transpose(w, (0, 2, 3, 1)).reshape(cout, 9 * cin).astype(_F32)


def _idiv_mod(x, d):
    """Exact (floor(x/d), x % d) for a non-negative int32 vector, d a positive python int.

    f32 quotient estimate (exact-integer float math) + one fixup round, so it is exact
    for x < 2**23 without relying on vector integer division support.
    """
    q = jnp.floor(x.astype(_F32) * (1.0 / float(d))).astype(jnp.int32)
    r = x - q * d
    q = jnp.where(r < 0, q - 1, q)
    r = jnp.where(r < 0, r + d, r)
    q = jnp.where(r >= d, q + 1, q)
    r = jnp.where(r >= d, r - d, r)
    return q, r


def _make_flow_kernel(n, h, w, ct):
    P = h * w
    nP = n * P

    def kernel(tcat_ref, wdown_ref, w1_ref, gamma_ref, beta_ref, w2_ref,
               out_ref, stk1_ref, stk2_ref):
        wdown = wdown_ref[...].astype(_F32)     # (2*Ct, 2*Cin) block-diagonal
        w1 = w1_ref[...].astype(_F32)           # (Ct, 9*2*Ct)
        w2 = w2_ref[...].astype(_F32)           # (2, 9*Ct)
        gamma = gamma_ref[...].astype(_F32)     # (Ct, 1)
        beta = beta_ref[...].astype(_F32)

        # Integer-exact per-lane pixel coordinates over the batch-folded lane axis.
        lane = lax.broadcasted_iota(jnp.int32, (1, nP), 1)
        row_g, ox = _idiv_mod(lane, w)          # global row in [0, n*h), col in [0, w)
        _, oy = _idiv_mod(row_g, h)             # row within the image, in [0, h)

        # Per-tap zero-padding masks; they also zero pltpu.roll's wrap-around lanes
        # (including wraps across the folded batch boundaries).
        tap_masks = []
        for dy, dx in _TAPS:
            conds = []
            if dx > 0:
                conds.append(ox < (w - dx))
            if dx < 0:
                conds.append(ox >= -dx)
            if dy > 0:
                conds.append(oy < (h - dy))
            if dy < 0:
                conds.append(oy >= -dy)
            if not conds:
                tap_masks.append(None)
            else:
                m = conds[0]
                for extra in conds[1:]:
                    m = m & extra
                tap_masks.append(m.astype(_F32))

        def conv3x3(f, w_stk, stk_ref):
            # Stack the 9 rolled+masked taps along K into a VMEM scratch, then the whole
            # 3x3 conv is ONE (Cout, 9*Cin) x (9*Cin, nP) MXU matmul.
            ci = f.shape[0]
            for t, (dy, dx) in enumerate(_TAPS):
                s = dy * w + dx
                g = f if s == 0 else pltpu.roll(f, (-s) % nP, 1)
                if tap_masks[t] is not None:
                    g = g * tap_masks[t]
                stk_ref[t * ci:(t + 1) * ci, :] = g
            return jnp.dot(w_stk, stk_ref[...], preferred_element_type=_F32)

        # stage 1: both 1x1 down-convs as a single block-diagonal matmul, then first 3x3.
        f12 = jnp.dot(wdown, tcat_ref[...].astype(_F32), preferred_element_type=_F32)
        y1 = conv3x3(f12, w1, stk1_ref)                               # (Ct, nP)

        # stage 2: BatchNorm2d training-mode batch stats (biased var, eps=1e-5) in ONE pass
        # (E[x^2] - E[x]^2), then ReLU.
        inv_cnt = 1.0 / float(nP)
        mean = y1.sum(axis=-1, keepdims=True) * inv_cnt
        var = jnp.maximum((y1 * y1).sum(axis=-1, keepdims=True) * inv_cnt - mean * mean, 0.0)
        scale = gamma * lax.rsqrt(var + 1e-5)
        shift = beta - mean * scale
        y = jnp.maximum(y1 * scale + shift, 0.0)

        # stage 3: second 3x3 conv -> flow, un-fold the batch axis for the warp kernel.
        flow = conv3x3(y, w2, stk2_ref)                               # (2, nP)
        for m in range(n):
            out_ref[m] = flow[:, m * P:(m + 1) * P]

    return kernel


def _make_warp_kernel(h, w, h_o, w_o, p_tile):
    Q = h_o * w_o
    step_x = (2.0 / (w - 1)) if w > 1 else 0.0     # torch.linspace(-1, 1, dim) spacing
    step_y = (2.0 / (h - 1)) if h > 1 else 0.0

    def kernel(pred_ref, flow_ref, out_ref):
        p0 = pl.program_id(1) * p_tile
        lane = lax.broadcasted_iota(jnp.int32, (1, p_tile), 1) + p0   # output pixel index
        oy, ox = _idiv_mod(lane, w)
        base_x = ox.astype(_F32) * step_x - 1.0
        base_y = oy.astype(_F32) * step_y - 1.0

        fx = flow_ref[0:1, :].astype(_F32)
        fy = flow_ref[1:2, :].astype(_F32)
        gx = base_x + fx * (1.0 / w)           # flow normalized by (out_w, out_h)
        gy = base_y + fy * (1.0 / h)
        xp = ((gx + 1.0) * w_o - 1.0) * 0.5    # align_corners=False unnormalization
        yp = ((gy + 1.0) * h_o - 1.0) * 0.5
        x0f = jnp.floor(xp)
        y0f = jnp.floor(yp)
        wx1 = xp - x0f
        wx0 = 1.0 - wx1
        wy1 = yp - y0f
        wy0 = 1.0 - wy1
        x0 = x0f.astype(jnp.int32)
        y0 = y0f.astype(jnp.int32)

        # Fuse the 4 bilinear corners into ONE (Q, p_tile) gather matrix, then apply it to
        # every (sublane-padded) pred row of this flow group with a single MXU matmul.
        q_iota = lax.broadcasted_iota(jnp.int32, (Q, p_tile), 0)
        gather = None
        for yi, xi, wgt in ((y0, x0, wy0 * wx0), (y0, x0 + 1, wy0 * wx1),
                            (y0 + 1, x0, wy1 * wx0), (y0 + 1, x0 + 1, wy1 * wx1)):
            valid = (xi >= 0) & (xi < w_o) & (yi >= 0) & (yi < h_o)
            wgt = jnp.where(valid, wgt, 0.0)                      # zeros padding
            piece = jnp.where(q_iota == yi * w_o + xi, wgt, 0.0)
            gather = piece if gather is None else gather + piece

        out_ref[...] = jnp.dot(pred_ref[...].astype(_F32), gather,
                               preferred_element_type=_F32).astype(out_ref.dtype)

    return kernel


def _pick_p_tile(P, max_tile=2048):
    """Largest lane tile that is a multiple of 128, divides P, and is <= max_tile."""
    if P <= max_tile or P % 128 != 0:
        return P
    t = (max_tile // 128) * 128
    while t >= 128:
        if P % t == 0:
            return t
        t -= 128
    return P


def align_module_full_forward(params, t1_nchw, t2_nchw, t2_pred_nchw):
    n, cin, h, w = t1_nchw.shape
    _, _, h2, w2 = t2_nchw.shape
    # TODO(synk): bilinear F.interpolate of t2_feature when spatial sizes differ is not
    # implemented; with matching sizes (as here) the reference skips that branch.
    assert (h2, w2) == (h, w)
    _, c_pred, h_o, w_o = t2_pred_nchw.shape
    ct = params["w_down_t1"].shape[0]
    P, Q = h * w, h_o * w_o
    nP = n * P

    # Fold the batch into the lane axis (lane-dense (C, n*H*W) layout).
    t1_all = jnp.transpose(t1_nchw, (1, 0, 2, 3)).reshape(cin, nP).astype(_F32)
    t2_all = jnp.transpose(t2_nchw, (1, 0, 2, 3)).reshape(cin, nP).astype(_F32)
    tcat = jnp.concatenate([t1_all, t2_all], axis=0)                  # (2*Cin, nP)
    w_down = jnp.zeros((2 * ct, 2 * cin), _F32)
    w_down = w_down.at[:ct, :cin].set(params["w_down_t1"].astype(_F32))
    w_down = w_down.at[ct:, cin:].set(params["w_down_t2"].astype(_F32))

    # Kernel 1: flow = flow_make(cat(down_t1(t1), down_t2(t2))) with training-mode BN.
    # TODO(synk): for very large images, tile this stage's lane axis with a two-pass BN
    # reduction; the warp stage below is already gridded / lane-tiled.
    flow = pl.pallas_call(
        _make_flow_kernel(n, h, w, ct),
        out_shape=jax.ShapeDtypeStruct((n, 2, P), jnp.float32),
        scratch_shapes=[pltpu.VMEM((9 * 2 * ct, nP), jnp.float32),
                        pltpu.VMEM((9 * ct, nP), jnp.float32)],
        compiler_params=pltpu.CompilerParams(vmem_limit_bytes=64 * 1024 * 1024),
    )(tcat, w_down, _stack_w3x3(params["w_flow1"]),
      params["bn_gamma"].reshape(ct, 1).astype(_F32),
      params["bn_beta"].reshape(ct, 1).astype(_F32),
      _stack_w3x3(params["w_flow2"]))

    # Kernel 2: flow_warp (grid_sample).  Pred row with original flat index k = b*c + ch
    # uses flow[k % n] (the reference's flow.repeat(c,1,1,1) pairing, incl. cross-batch
    # mixing for n > 1).  Rows are grouped by flow index and padded to 8 sublanes so the
    # per-group loads/stores and the gather matmul LHS are unmasked.
    c_pad = ((c_pred + 7) // 8) * 8
    group_rows = (jnp.arange(n)[:, None] + jnp.arange(c_pred)[None, :] * n).reshape(-1)
    pred_grp = t2_pred_nchw.reshape(n * c_pred, Q)[group_rows].reshape(n, c_pred, Q)
    if c_pad > c_pred:
        pred_grp = jnp.concatenate(
            [pred_grp, jnp.zeros((n, c_pad - c_pred, Q), pred_grp.dtype)], axis=1)
    pred_grp = pred_grp.reshape(n * c_pad, Q)

    p_tile = _pick_p_tile(P)
    num_pt = P // p_tile
    out_grp = pl.pallas_call(
        _make_warp_kernel(h, w, h_o, w_o, p_tile),
        out_shape=jax.ShapeDtypeStruct((n * c_pad, P), t2_pred_nchw.dtype),
        grid_spec=pltpu.PrefetchScalarGridSpec(
            num_scalar_prefetch=0,
            grid=(n, num_pt),
            in_specs=[pl.BlockSpec((c_pad, Q), lambda m, t: (m, 0)),
                      pl.BlockSpec((None, 2, p_tile), lambda m, t: (m, 0, t))],
            out_specs=pl.BlockSpec((c_pad, p_tile), lambda m, t: (m, t))),
        compiler_params=pltpu.CompilerParams(
            dimension_semantics=("parallel", "parallel"),
            vmem_limit_bytes=64 * 1024 * 1024),
    )(pred_grp, flow)

    k = jnp.arange(n * c_pred)
    out_rows = (k % n) * c_pad + (k // n)
    return out_grp[out_rows].reshape(n, c_pred, h, w)


def init_params(key, in_channels, tmp_channels):
    ks = jax.random.split(key, 6)
    return {
        "w_down_t1": 0.2 * jax.random.normal(ks[0], (tmp_channels, in_channels), jnp.float32),
        "w_down_t2": 0.2 * jax.random.normal(ks[1], (tmp_channels, in_channels), jnp.float32),
        "w_flow1":   0.2 * jax.random.normal(ks[2], (tmp_channels, 2 * tmp_channels, 3, 3), jnp.float32),
        "bn_gamma":  1.0 + 0.1 * jax.random.normal(ks[3], (tmp_channels,), jnp.float32),
        "bn_beta":   0.1 * jax.random.normal(ks[4], (tmp_channels,), jnp.float32),
        "w_flow2":   0.2 * jax.random.normal(ks[5], (2, tmp_channels, 3, 3), jnp.float32),
    }


if __name__ == "__main__":
    key = jax.random.PRNGKey(0)
    k1, k2, k3, kp = jax.random.split(key, 4)
    in_channels, tmp_channels = 4, 4
    n, h, w = 2, 16, 16
    c_pred = 3
    t1 = jax.random.normal(k1, (n, in_channels, h, w), jnp.float32)
    t2 = jax.random.normal(k2, (n, in_channels, h, w), jnp.float32)
    t2_pred = jax.random.normal(k3, (n, c_pred, h, w), jnp.float32)
    params = init_params(kp, in_channels, tmp_channels)

    out = jax.jit(align_module_full_forward)(params, t1, t2, t2_pred)
    out = jax.block_until_ready(out)
    assert out.shape == (n, c_pred, h, w), out.shape
    assert bool(jnp.all(jnp.isfinite(out)))
    print("KERNEL_OK")
</pallas_src>

<mosaic_0001>
module attributes {stable_mosaic.version = 11 : i64} {
  func.func @kernel(%arg0: memref<8x512xf32, #tpu.memory_space<vmem>>, %arg1: memref<8x8xf32, #tpu.memory_space<vmem>>, %arg2: memref<4x72xf32, #tpu.memory_space<vmem>>, %arg3: memref<4x1xf32, #tpu.memory_space<vmem>>, %arg4: memref<4x1xf32, #tpu.memory_space<vmem>>, %arg5: memref<2x36xf32, #tpu.memory_space<vmem>>, %arg6: memref<2x2x256xf32, #tpu.memory_space<vmem>>, %arg7: memref<72x512xf32, #tpu.memory_space<vmem>>, %arg8: memref<36x512xf32, #tpu.memory_space<vmem>>) attributes {dimension_semantics = [], scalar_prefetch = 0 : i64, scratch_operands = 2 : i64, tpu.core_type = #tpu.core_type<tc>} {
    %c0 = arith.constant 0 : index
    %c0_0 = arith.constant 0 : index
    %0 = vector.load %arg1[%c0, %c0_0] : memref<8x8xf32, #tpu.memory_space<vmem>>, vector<8x8xf32>
    %c0_1 = arith.constant 0 : index
    %c0_2 = arith.constant 0 : index
    %1 = vector.load %arg2[%c0_1, %c0_2] : memref<4x72xf32, #tpu.memory_space<vmem>>, vector<4x72xf32>
    %c0_3 = arith.constant 0 : index
    %c0_4 = arith.constant 0 : index
    %2 = vector.load %arg5[%c0_3, %c0_4] : memref<2x36xf32, #tpu.memory_space<vmem>>, vector<2x36xf32>
    %c0_5 = arith.constant 0 : index
    %c0_6 = arith.constant 0 : index
    %3 = vector.load %arg3[%c0_5, %c0_6] : memref<4x1xf32, #tpu.memory_space<vmem>>, vector<4x1xf32>
    %c0_7 = arith.constant 0 : index
    %c0_8 = arith.constant 0 : index
    %4 = vector.load %arg4[%c0_7, %c0_8] : memref<4x1xf32, #tpu.memory_space<vmem>>, vector<4x1xf32>
    %5 = tpu.iota {dimensions = array<i32: 1>} : vector<1x512xi32>
    %6 = arith.sitofp %5 : vector<1x512xi32> to vector<1x512xf32>
    %cst = arith.constant 6.250000e-02 : f32
    %7 = vector.broadcast %cst : f32 to vector<1x512xf32>
    %8 = arith.mulf %6, %7 : vector<1x512xf32>
    %9 = math.floor %8 : vector<1x512xf32>
    %10 = arith.fptosi %9 : vector<1x512xf32> to vector<1x512xi32>
    %c16_i32 = arith.constant 16 : i32
    %11 = vector.broadcast %c16_i32 : i32 to vector<1x512xi32>
    %12 = arith.muli %10, %11 : vector<1x512xi32>
    %13 = arith.subi %5, %12 : vector<1x512xi32>
    %c0_i32 = arith.constant 0 : i32
    %14 = vector.broadcast %c0_i32 : i32 to vector<1x512xi32>
    %15 = arith.cmpi slt, %13, %14 : vector<1x512xi32>
    %c1_i32 = arith.constant 1 : i32
    %16 = vector.broadcast %c1_i32 : i32 to vector<1x512xi32>
    %17 = arith.subi %10, %16 : vector<1x512xi32>
    %18 = arith.select %15, %17, %10 : vector<1x512xi1>, vector<1x512xi32>
    %c0_i32_9 = arith.constant 0 : i32
    %19 = vector.broadcast %c0_i32_9 : i32 to vector<1x512xi32>
    %20 = arith.cmpi slt, %13, %19 : vector<1x512xi32>
    %c16_i32_10 = arith.constant 16 : i32
    %21 = vector.broadcast %c16_i32_10 : i32 to vector<1x512xi32>
    %22 = arith.addi %13, %21 : vector<1x512xi32>
    %23 = arith.select %20, %22, %13 : vector<1x512xi1>, vector<1x512xi32>
    %c16_i32_11 = arith.constant 16 : i32
    %24 = vector.broadcast %c16_i32_11 : i32 to vector<1x512xi32>
    %25 = arith.cmpi sge, %23, %24 : vector<1x512xi32>
    %c1_i32_12 = arith.constant 1 : i32
    %26 = vector.broadcast %c1_i32_12 : i32 to vector<1x512xi32>
    %27 = arith.addi %18, %26 : vector<1x512xi32>
    %28 = arith.select %25, %27, %18 : vector<1x512xi1>, vector<1x512xi32>
    %c16_i32_13 = arith.constant 16 : i32
    %29 = vector.broadcast %c16_i32_13 : i32 to vector<1x512xi32>
    %30 = arith.cmpi sge, %23, %29 : vector<1x512xi32>
    %c16_i32_14 = arith.constant 16 : i32
    %31 = vector.broadcast %c16_i32_14 : i32 to vector<1x512xi32>
    %32 = arith.subi %23, %31 : vector<1x512xi32>
    %33 = arith.select %30, %32, %23 : vector<1x512xi1>, vector<1x512xi32>
    %34 = arith.sitofp %28 : vector<1x512xi32> to vector<1x512xf32>
    %cst_15 = arith.constant 6.250000e-02 : f32
    %35 = vector.broadcast %cst_15 : f32 to vector<1x512xf32>
    %36 = arith.mulf %34, %35 : vector<1x512xf32>
    %37 = math.floor %36 : vector<1x512xf32>
    %38 = arith.fptosi %37 : vector<1x512xf32> to vector<1x512xi32>
    %c16_i32_16 = arith.constant 16 : i32
    %39 = vector.broadcast %c16_i32_16 : i32 to vector<1x512xi32>
    %40 = arith.muli %38, %39 : vector<1x512xi32>
    %41 = arith.subi %28, %40 : vector<1x512xi32>
    %c0_i32_17 = arith.constant 0 : i32
    %42 = vector.broadcast %c0_i32_17 : i32 to vector<1x512xi32>
    %43 = arith.cmpi slt, %41, %42 : vector<1x512xi32>
    %c16_i32_18 = arith.constant 16 : i32
    %44 = vector.broadcast %c16_i32_18 : i32 to vector<1x512xi32>
    %45 = arith.addi %41, %44 : vector<1x512xi32>
    %46 = arith.select %43, %45, %41 : vector<1x512xi1>, vector<1x512xi32>
    %c16_i32_19 = arith.constant 16 : i32
    %47 = vector.broadcast %c16_i32_19 : i32 to vector<1x512xi32>
    %48 = arith.cmpi sge, %46, %47 : vector<1x512xi32>
    %c16_i32_20 = arith.constant 16 : i32
    %49 = vector.broadcast %c16_i32_20 : i32 to vector<1x512xi32>
    %50 = arith.subi %46, %49 : vector<1x512xi32>
    %51 = arith.select %48, %50, %46 : vector<1x512xi1>, vector<1x512xi32>
    %c1_i32_21 = arith.constant 1 : i32
    %52 = vector.broadcast %c1_i32_21 : i32 to vector<1x512xi32>
    %53 = arith.cmpi sge, %33, %52 : vector<1x512xi32>
    %c1_i32_22 = arith.constant 1 : i32
    %54 = vector.broadcast %c1_i32_22 : i32 to vector<1x512xi32>
    %55 = arith.cmpi sge, %51, %54 : vector<1x512xi32>
    %56 = arith.andi %53, %55 : vector<1x512xi1>
    %57 = arith.extui %56 : vector<1x512xi1> to vector<1x512xi32>
    %58 = arith.sitofp %57 : vector<1x512xi32> to vector<1x512xf32>
    %c1_i32_23 = arith.constant 1 : i32
    %59 = vector.broadcast %c1_i32_23 : i32 to vector<1x512xi32>
    %60 = arith.cmpi sge, %51, %59 : vector<1x512xi32>
    %61 = arith.extui %60 : vector<1x512xi1> to vector<1x512xi32>
    %62 = arith.sitofp %61 : vector<1x512xi32> to vector<1x512xf32>
    %c15_i32 = arith.constant 15 : i32
    %63 = vector.broadcast %c15_i32 : i32 to vector<1x512xi32>
    %64 = arith.cmpi slt, %33, %63 : vector<1x512xi32>
    %c1_i32_24 = arith.constant 1 : i32
    %65 = vector.broadcast %c1_i32_24 : i32 to vector<1x512xi32>
    %66 = arith.cmpi sge, %51, %65 : vector<1x512xi32>
    %67 = arith.andi %64, %66 : vector<1x512xi1>
    %68 = arith.extui %67 : vector<1x512xi1> to vector<1x512xi32>
    %69 = arith.sitofp %68 : vector<1x512xi32> to vector<1x512xf32>
    %c1_i32_25 = arith.constant 1 : i32
    %70 = vector.broadcast %c1_i32_25 : i32 to vector<1x512xi32>
    %71 = arith.cmpi sge, %33, %70 : vector<1x512xi32>
    %72 = arith.extui %71 : vector<1x512xi1> to vector<1x512xi32>
    %73 = arith.sitofp %72 : vector<1x512xi32> to vector<1x512xf32>
    %c15_i32_26 = arith.constant 15 : i32
    %74 = vector.broadcast %c15_i32_26 : i32 to vector<1x512xi32>
    %75 = arith.cmpi slt, %33, %74 : vector<1x512xi32>
    %76 = arith.extui %75 : vector<1x512xi1> to vector<1x512xi32>
    %77 = arith.sitofp %76 : vector<1x512xi32> to vector<1x512xf32>
    %c1_i32_27 = arith.constant 1 : i32
    %78 = vector.broadcast %c1_i32_27 : i32 to vector<1x512xi32>
    %79 = arith.cmpi sge, %33, %78 : vector<1x512xi32>
    %c15_i32_28 = arith.constant 15 : i32
    %80 = vector.broadcast %c15_i32_28 : i32 to vector<1x512xi32>
    %81 = arith.cmpi slt, %51, %80 : vector<1x512xi32>
    %82 = arith.andi %79, %81 : vector<1x512xi1>
    %83 = arith.extui %82 : vector<1x512xi1> to vector<1x512xi32>
    %84 = arith.sitofp %83 : vector<1x512xi32> to vector<1x512xf32>
    %c15_i32_29 = arith.constant 15 : i32
    %85 = vector.broadcast %c15_i32_29 : i32 to vector<1x512xi32>
    %86 = arith.cmpi slt, %51, %85 : vector<1x512xi32>
    %87 = arith.extui %86 : vector<1x512xi1> to vector<1x512xi32>
    %88 = arith.sitofp %87 : vector<1x512xi32> to vector<1x512xf32>
    %c15_i32_30 = arith.constant 15 : i32
    %89 = vector.broadcast %c15_i32_30 : i32 to vector<1x512xi32>
    %90 = arith.cmpi slt, %33, %89 : vector<1x512xi32>
    %c15_i32_31 = arith.constant 15 : i32
    %91 = vector.broadcast %c15_i32_31 : i32 to vector<1x512xi32>
    %92 = arith.cmpi slt, %51, %91 : vector<1x512xi32>
    %93 = arith.andi %90, %92 : vector<1x512xi1>
    %94 = arith.extui %93 : vector<1x512xi1> to vector<1x512xi32>
    %95 = arith.sitofp %94 : vector<1x512xi32> to vector<1x512xf32>
    %c0_32 = arith.constant 0 : index
    %c0_33 = arith.constant 0 : index
    %96 = vector.load %arg0[%c0_32, %c0_33] : memref<8x512xf32, #tpu.memory_space<vmem>>, vector<8x512xf32>
    %cst_34 = arith.constant dense<0.000000e+00> : vector<8x512xf32>
    %97 = tpu.matmul %0, %96, %cst_34 {dimension_numbers = #tpu.dot_dimension_numbers<[1], [0], [0], [1], [0, 0, 1, 1], [], []>} : vector<8x8xf32>, vector<8x512xf32>, vector<8x512xf32> -> vector<8x512xf32>
    %c17_i32 = arith.constant 17 : i32
    %98 = tpu.dynamic_rotate %97 by %c17_i32 dim 1 : vector<8x512xf32>, i32 -> vector<8x512xf32>
    %99 = vector.broadcast %58 : vector<1x512xf32> to vector<8x512xf32>
    %100 = arith.mulf %98, %99 : vector<8x512xf32>
    %c0_35 = arith.constant 0 : index
    %c0_36 = arith.constant 0 : index
    %101 = vector.load %arg7[%c0_35, %c0_36] : memref<72x512xf32, #tpu.memory_space<vmem>>, vector<8x512xf32>
    tpu.vector_store %arg7[%c0_35, %c0_36], %100 {strides = array<i32>} : memref<72x512xf32, #tpu.memory_space<vmem>>, vector<8x512xf32>,
    %c16_i32_37 = arith.constant 16 : i32
    %102 = tpu.dynamic_rotate %97 by %c16_i32_37 dim 1 : vector<8x512xf32>, i32 -> vector<8x512xf32>
    %103 = vector.broadcast %62 : vector<1x512xf32> to vector<8x512xf32>
    %104 = arith.mulf %102, %103 : vector<8x512xf32>
    %c8 = arith.constant 8 : index
    %c0_38 = arith.constant 0 : index
    %105 = vector.load %arg7[%c8, %c0_38] : memref<72x512xf32, #tpu.memory_space<vmem>>, vector<8x512xf32>
    tpu.vector_store %arg7[%c8, %c0_38], %104 {strides = array<i32>} : memref<72x512xf32, #tpu.memory_space<vmem>>, vector<8x512xf32>,
    %c15_i32_39 = arith.constant 15 : i32
    %106 = tpu.dynamic_rotate %97 by %c15_i32_39 dim 1 : vector<8x512xf32>, i32 -> vector<8x512xf32>
    %107 = vector.broadcast %69 : vector<1x512xf32> to vector<8x512xf32>
    %108 = arith.mulf %106, %107 : vector<8x512xf32>
    %c16 = arith.constant 16 : index
    %c0_40 = arith.constant 0 : index
    %109 = vector.load %arg7[%c16, %c0_40] : memref<72x512xf32, #tpu.memory_space<vmem>>, vector<8x512xf32>
    tpu.vector_store %arg7[%c16, %c0_40], %108 {strides = array<i32>} : memref<72x512xf32, #tpu.memory_space<vmem>>, vector<8x512xf32>,
    %c1_i32_41 = arith.constant 1 : i32
    %110 = tpu.dynamic_rotate %97 by %c1_i32_41 dim 1 : vector<8x512xf32>, i32 -> vector<8x512xf32>
    %111 = vector.broadcast %73 : vector<1x512xf32> to vector<8x512xf32>
    %112 = arith.mulf %110, %111 : vector<8x512xf32>
    %c24 = arith.constant 24 : index
    %c0_42 = arith.constant 0 : index
    %113 = vector.load %arg7[%c24, %c0_42] : memref<72x512xf32, #tpu.memory_space<vmem>>, vector<8x512xf32>
    tpu.vector_store %arg7[%c24, %c0_42], %112 {strides = array<i32>} : memref<72x512xf32, #tpu.memory_space<vmem>>, vector<8x512xf32>,
    %c32 = arith.constant 32 : index
    %c0_43 = arith.constant 0 : index
    %114 = vector.load %arg7[%c32, %c0_43] : memref<72x512xf32, #tpu.memory_space<vmem>>, vector<8x512xf32>
    tpu.vector_store %arg7[%c32, %c0_43], %97 {strides = array<i32>} : memref<72x512xf32, #tpu.memory_space<vmem>>, vector<8x512xf32>,
    %c511_i32 = arith.constant 511 : i32
    %115 = tpu.dynamic_rotate %97 by %c511_i32 dim 1 : vector<8x512xf32>, i32 -> vector<8x512xf32>
    %116 = vector.broadcast %77 : vector<1x512xf32> to vector<8x512xf32>
    %117 = arith.mulf %115, %116 : vector<8x512xf32>
    %c40 = arith.constant 40 : index
    %c0_44 = arith.constant 0 : index
    %118 = vector.load %arg7[%c40, %c0_44] : memref<72x512xf32, #tpu.memory_space<vmem>>, vector<8x512xf32>
    tpu.vector_store %arg7[%c40, %c0_44], %117 {strides = array<i32>} : memref<72x512xf32, #tpu.memory_space<vmem>>, vector<8x512xf32>,
    %c497_i32 = arith.constant 497 : i32
    %119 = tpu.dynamic_rotate %97 by %c497_i32 dim 1 : vector<8x512xf32>, i32 -> vector<8x512xf32>
    %120 = vector.broadcast %84 : vector<1x512xf32> to vector<8x512xf32>
    %121 = arith.mulf %119, %120 : vector<8x512xf32>
    %c48 = arith.constant 48 : index
    %c0_45 = arith.constant 0 : index
    %122 = vector.load %arg7[%c48, %c0_45] : memref<72x512xf32, #tpu.memory_space<vmem>>, vector<8x512xf32>
    tpu.vector_store %arg7[%c48, %c0_45], %121 {strides = array<i32>} : memref<72x512xf32, #tpu.memory_space<vmem>>, vector<8x512xf32>,
    %c496_i32 = arith.constant 496 : i32
    %123 = tpu.dynamic_rotate %97 by %c496_i32 dim 1 : vector<8x512xf32>, i32 -> vector<8x512xf32>
    %124 = vector.broadcast %88 : vector<1x512xf32> to vector<8x512xf32>
    %125 = arith.mulf %123, %124 : vector<8x512xf32>
    %c56 = arith.constant 56 : index
    %c0_46 = arith.constant 0 : index
    %126 = vector.load %arg7[%c56, %c0_46] : memref<72x512xf32, #tpu.memory_space<vmem>>, vector<8x512xf32>
    tpu.vector_store %arg7[%c56, %c0_46], %125 {strides = array<i32>} : memref<72x512xf32, #tpu.memory_space<vmem>>, vector<8x512xf32>,
    %c495_i32 = arith.constant 495 : i32
    %127 = tpu.dynamic_rotate %97 by %c495_i32 dim 1 : vector<8x512xf32>, i32 -> vector<8x512xf32>
    %128 = vector.broadcast %95 : vector<1x512xf32> to vector<8x512xf32>
    %129 = arith.mulf %127, %128 : vector<8x512xf32>
    %c64 = arith.constant 64 : index
    %c0_47 = arith.constant 0 : index
    %130 = vector.load %arg7[%c64, %c0_47] : memref<72x512xf32, #tpu.memory_space<vmem>>, vector<8x512xf32>
    tpu.vector_store %arg7[%c64, %c0_47], %129 {strides = array<i32>} : memref<72x512xf32, #tpu.memory_space<vmem>>, vector<8x512xf32>,
    %c0_48 = arith.constant 0 : index
    %c0_49 = arith.constant 0 : index
    %131 = vector.load %arg7[%c0_48, %c0_49] : memref<72x512xf32, #tpu.memory_space<vmem>>, vector<72x512xf32>
    %cst_50 = arith.constant dense<0.000000e+00> : vector<4x512xf32>
    %132 = tpu.matmul %1, %131, %cst_50 {dimension_numbers = #tpu.dot_dimension_numbers<[1], [0], [0], [1], [0, 0, 1, 1], [], []>} : vector<4x72xf32>, vector<72x512xf32>, vector<4x512xf32> -> vector<4x512xf32>
    %cst_51 = arith.constant dense<0.000000e+00> : vector<4xf32>
    %133 = vector.multi_reduction <add>, %132, %cst_51 [1] : vector<4x512xf32> to vector<4xf32>
    %134 = vector.shape_cast %133 : vector<4xf32> to vector<4x1xf32>
    %cst_52 = arith.constant 0.001953125 : f32
    %135 = vector.broadcast %cst_52 : f32 to vector<4x1xf32>
    %136 = arith.mulf %134, %135 : vector<4x1xf32>
    %137 = arith.mulf %132, %132 : vector<4x512xf32>
    %cst_53 = arith.constant dense<0.000000e+00> : vector<4xf32>
    %138 = vector.multi_reduction <add>, %137, %cst_53 [1] : vector<4x512xf32> to vector<4xf32>
    %139 = vector.shape_cast %138 : vector<4xf32> to vector<4x1xf32>
    %cst_54 = arith.constant 0.001953125 : f32
    %140 = vector.broadcast %cst_54 : f32 to vector<4x1xf32>
    %141 = arith.mulf %139, %140 : vector<4x1xf32>
    %142 = arith.mulf %136, %136 : vector<4x1xf32>
    %143 = arith.subf %141, %142 : vector<4x1xf32>
    %cst_55 = arith.constant 0.000000e+00 : f32
    %144 = vector.broadcast %cst_55 : f32 to vector<4x1xf32>
    %145 = arith.maximumf %143, %144 : vector<4x1xf32>
    %cst_56 = arith.constant 9.99999974E-6 : f32
    %146 = vector.broadcast %cst_56 : f32 to vector<4x1xf32>
    %147 = arith.addf %145, %146 : vector<4x1xf32>
    %148 = math.rsqrt %147 : vector<4x1xf32>
    %149 = arith.mulf %3, %148 : vector<4x1xf32>
    %150 = arith.mulf %136, %149 : vector<4x1xf32>
    %151 = arith.subf %4, %150 : vector<4x1xf32>
    %152 = vector.broadcast %149 : vector<4x1xf32> to vector<4x512xf32>
    %153 = arith.mulf %132, %152 : vector<4x512xf32>
    %154 = vector.broadcast %151 : vector<4x1xf32> to vector<4x512xf32>
    %155 = arith.addf %153, %154 : vector<4x512xf32>
    %cst_57 = arith.constant 0.000000e+00 : f32
    %156 = vector.broadcast %cst_57 : f32 to vector<4x512xf32>
    %157 = arith.maximumf %155, %156 : vector<4x512xf32>
    %c17_i32_58 = arith.constant 17 : i32
    %158 = tpu.dynamic_rotate %157 by %c17_i32_58 dim 1 : vector<4x512xf32>, i32 -> vector<4x512xf32>
    %159 = vector.broadcast %58 : vector<1x512xf32> to vector<4x512xf32>
    %160 = arith.mulf %158, %159 : vector<4x512xf32>
    %c0_59 = arith.constant 0 : index
    %c0_60 = arith.constant 0 : index
    %161 = vector.load %arg8[%c0_59, %c0_60] : memref<36x512xf32, #tpu.memory_space<vmem>>, vector<4x512xf32>
    tpu.vector_store %arg8[%c0_59, %c0_60], %160 {strides = array<i32>} : memref<36x512xf32, #tpu.memory_space<vmem>>, vector<4x512xf32>,
    %c16_i32_61 = arith.constant 16 : i32
    %162 = tpu.dynamic_rotate %157 by %c16_i32_61 dim 1 : vector<4x512xf32>, i32 -> vector<4x512xf32>
    %163 = vector.broadcast %62 : vector<1x512xf32> to vector<4x512xf32>
    %164 = arith.mulf %162, %163 : vector<4x512xf32>
    %c4 = arith.constant 4 : index
    %c0_62 = arith.constant 0 : index
    %165 = vector.load %arg8[%c4, %c0_62] : memref<36x512xf32, #tpu.memory_space<vmem>>, vector<4x512xf32>
    tpu.vector_store %arg8[%c4, %c0_62], %164 {strides = array<i32>} : memref<36x512xf32, #tpu.memory_space<vmem>>, vector<4x512xf32>,
    %c15_i32_63 = arith.constant 15 : i32
    %166 = tpu.dynamic_rotate %157 by %c15_i32_63 dim 1 : vector<4x512xf32>, i32 -> vector<4x512xf32>
    %167 = vector.broadcast %69 : vector<1x512xf32> to vector<4x512xf32>
    %168 = arith.mulf %166, %167 : vector<4x512xf32>
    %c8_64 = arith.constant 8 : index
    %c0_65 = arith.constant 0 : index
    %169 = vector.load %arg8[%c8_64, %c0_65] : memref<36x512xf32, #tpu.memory_space<vmem>>, vector<4x512xf32>
    tpu.vector_store %arg8[%c8_64, %c0_65], %168 {strides = array<i32>} : memref<36x512xf32, #tpu.memory_space<vmem>>, vector<4x512xf32>,
    %c1_i32_66 = arith.constant 1 : i32
    %170 = tpu.dynamic_rotate %157 by %c1_i32_66 dim 1 : vector<4x512xf32>, i32 -> vector<4x512xf32>
    %171 = vector.broadcast %73 : vector<1x512xf32> to vector<4x512xf32>
    %172 = arith.mulf %170, %171 : vector<4x512xf32>
    %c12 = arith.constant 12 : index
    %c0_67 = arith.constant 0 : index
    %173 = vector.load %arg8[%c12, %c0_67] : memref<36x512xf32, #tpu.memory_space<vmem>>, vector<4x512xf32>
    tpu.vector_store %arg8[%c12, %c0_67], %172 {strides = array<i32>} : memref<36x512xf32, #tpu.memory_space<vmem>>, vector<4x512xf32>,
    %c16_68 = arith.constant 16 : index
    %c0_69 = arith.constant 0 : index
    %174 = vector.load %arg8[%c16_68, %c0_69] : memref<36x512xf32, #tpu.memory_space<vmem>>, vector<4x512xf32>
    tpu.vector_store %arg8[%c16_68, %c0_69], %157 {strides = array<i32>} : memref<36x512xf32, #tpu.memory_space<vmem>>, vector<4x512xf32>,
    %c511_i32_70 = arith.constant 511 : i32
    %175 = tpu.dynamic_rotate %157 by %c511_i32_70 dim 1 : vector<4x512xf32>, i32 -> vector<4x512xf32>
    %176 = vector.broadcast %77 : vector<1x512xf32> to vector<4x512xf32>
    %177 = arith.mulf %175, %176 : vector<4x512xf32>
    %c20 = arith.constant 20 : index
    %c0_71 = arith.constant 0 : index
    %178 = vector.load %arg8[%c20, %c0_71] : memref<36x512xf32, #tpu.memory_space<vmem>>, vector<4x512xf32>
    tpu.vector_store %arg8[%c20, %c0_71], %177 {strides = array<i32>} : memref<36x512xf32, #tpu.memory_space<vmem>>, vector<4x512xf32>,
    %c497_i32_72 = arith.constant 497 : i32
    %179 = tpu.dynamic_rotate %157 by %c497_i32_72 dim 1 : vector<4x512xf32>, i32 -> vector<4x512xf32>
    %180 = vector.broadcast %84 : vector<1x512xf32> to vector<4x512xf32>
    %181 = arith.mulf %179, %180 : vector<4x512xf32>
    %c24_73 = arith.constant 24 : index
    %c0_74 = arith.constant 0 : index
    %182 = vector.load %arg8[%c24_73, %c0_74] : memref<36x512xf32, #tpu.memory_space<vmem>>, vector<4x512xf32>
    tpu.vector_store %arg8[%c24_73, %c0_74], %181 {strides = array<i32>} : memref<36x512xf32, #tpu.memory_space<vmem>>, vector<4x512xf32>,
    %c496_i32_75 = arith.constant 496 : i32
    %183 = tpu.dynamic_rotate %157 by %c496_i32_75 dim 1 : vector<4x512xf32>, i32 -> vector<4x512xf32>
    %184 = vector.broadcast %88 : vector<1x512xf32> to vector<4x512xf32>
    %185 = arith.mulf %183, %184 : vector<4x512xf32>
    %c28 = arith.constant 28 : index
    %c0_76 = arith.constant 0 : index
    %186 = vector.load %arg8[%c28, %c0_76] : memref<36x512xf32, #tpu.memory_space<vmem>>, vector<4x512xf32>
    tpu.vector_store %arg8[%c28, %c0_76], %185 {strides = array<i32>} : memref<36x512xf32, #tpu.memory_space<vmem>>, vector<4x512xf32>,
    %c495_i32_77 = arith.constant 495 : i32
    %187 = tpu.dynamic_rotate %157 by %c495_i32_77 dim 1 : vector<4x512xf32>, i32 -> vector<4x512xf32>
    %188 = vector.broadcast %95 : vector<1x512xf32> to vector<4x512xf32>
    %189 = arith.mulf %187, %188 : vector<4x512xf32>
    %c32_78 = arith.constant 32 : index
    %c0_79 = arith.constant 0 : index
    %190 = vector.load %arg8[%c32_78, %c0_79] : memref<36x512xf32, #tpu.memory_space<vmem>>, vector<4x512xf32>
    tpu.vector_store %arg8[%c32_78, %c0_79], %189 {strides = array<i32>} : memref<36x512xf32, #tpu.memory_space<vmem>>, vector<4x512xf32>,
    %c0_80 = arith.constant 0 : index
    %c0_81 = arith.constant 0 : index
    %191 = vector.load %arg8[%c0_80, %c0_81] : memref<36x512xf32, #tpu.memory_space<vmem>>, vector<36x512xf32>
    %cst_82 = arith.constant dense<0.000000e+00> : vector<2x512xf32>
    %192 = tpu.matmul %2, %191, %cst_82 {dimension_numbers = #tpu.dot_dimension_numbers<[1], [0], [0], [1], [0, 0, 1, 1], [], []>} : vector<2x36xf32>, vector<36x512xf32>, vector<2x512xf32> -> vector<2x512xf32>
    %193 = vector.extract_strided_slice %192 {offsets = [0, 0], sizes = [2, 256], strides = [1, 1]} : vector<2x512xf32> to vector<2x256xf32>
    %c0_83 = arith.constant 0 : index
    %c0_84 = arith.constant 0 : index
    %c0_85 = arith.constant 0 : index
    %194 = vector.load %arg6[%c0_83, %c0_84, %c0_85] : memref<2x2x256xf32, #tpu.memory_space<vmem>>, vector<1x2x256xf32>
    %195 = vector.shape_cast %194 : vector<1x2x256xf32> to vector<2x256xf32>
    %196 = vector.shape_cast %193 : vector<2x256xf32> to vector<1x2x256xf32>
    tpu.vector_store %arg6[%c0_83, %c0_84, %c0_85], %196 {strides = array<i32>} : memref<2x2x256xf32, #tpu.memory_space<vmem>>, vector<1x2x256xf32>,
    %197 = vector.extract_strided_slice %192 {offsets = [0, 256], sizes = [2, 256], strides = [1, 1]} : vector<2x512xf32> to vector<2x256xf32>
    %c1 = arith.constant 1 : index
    %c0_86 = arith.constant 0 : index
    %c0_87 = arith.constant 0 : index
    %198 = vector.load %arg6[%c1, %c0_86, %c0_87] : memref<2x2x256xf32, #tpu.memory_space<vmem>>, vector<1x2x256xf32>
    %199 = vector.shape_cast %198 : vector<1x2x256xf32> to vector<2x256xf32>
    %200 = vector.shape_cast %197 : vector<2x256xf32> to vector<1x2x256xf32>
    tpu.vector_store %arg6[%c1, %c0_86, %c0_87], %200 {strides = array<i32>} : memref<2x2x256xf32, #tpu.memory_space<vmem>>, vector<1x2x256xf32>,
    return
  }
}

module attributes {stable_mosaic.version = 11 : i64} {
  func.func @kernel(%arg0: i32, %arg1: i32, %arg2: memref<8x256xf32, #tpu.memory_space<vmem>>, %arg3: memref<1x2x256xf32, #tpu.memory_space<vmem>>, %arg4: memref<8x256xf32, #tpu.memory_space<vmem>>) attributes {dimension_semantics = [#tpu.dimension_semantics<parallel>, #tpu.dimension_semantics<parallel>], iteration_bounds = array<i64: 2, 1>, scalar_prefetch = 0 : i64, scratch_operands = 0 : i64, tpu.core_type = #tpu.core_type<tc>, window_params = [{transform_indices = @transform_0, window_bounds = array<i64: 8, 256>}, {transform_indices = @transform_1, window_bounds = array<i64: 1, 2, 256>}, {transform_indices = @transform_2, window_bounds = array<i64: 8, 256>}]} {
    %c256_i32 = arith.constant 256 : i32
    %0 = arith.muli %arg1, %c256_i32 : i32
    %1 = tpu.iota {dimensions = array<i32: 1>} : vector<1x256xi32>
    %2 = vector.broadcast %0 : i32 to vector<1x256xi32>
    %3 = arith.addi %1, %2 : vector<1x256xi32>
    %4 = arith.sitofp %3 : vector<1x256xi32> to vector<1x256xf32>
    %cst = arith.constant 6.250000e-02 : f32
    %5 = vector.broadcast %cst : f32 to vector<1x256xf32>
    %6 = arith.mulf %4, %5 : vector<1x256xf32>
    %7 = math.floor %6 : vector<1x256xf32>
    %8 = arith.fptosi %7 : vector<1x256xf32> to vector<1x256xi32>
    %c16_i32 = arith.constant 16 : i32
    %9 = vector.broadcast %c16_i32 : i32 to vector<1x256xi32>
    %10 = arith.muli %8, %9 : vector<1x256xi32>
    %11 = arith.subi %3, %10 : vector<1x256xi32>
    %c0_i32 = arith.constant 0 : i32
    %12 = vector.broadcast %c0_i32 : i32 to vector<1x256xi32>
    %13 = arith.cmpi slt, %11, %12 : vector<1x256xi32>
    %c1_i32 = arith.constant 1 : i32
    %14 = vector.broadcast %c1_i32 : i32 to vector<1x256xi32>
    %15 = arith.subi %8, %14 : vector<1x256xi32>
    %16 = arith.select %13, %15, %8 : vector<1x256xi1>, vector<1x256xi32>
    %c0_i32_0 = arith.constant 0 : i32
    %17 = vector.broadcast %c0_i32_0 : i32 to vector<1x256xi32>
    %18 = arith.cmpi slt, %11, %17 : vector<1x256xi32>
    %c16_i32_1 = arith.constant 16 : i32
    %19 = vector.broadcast %c16_i32_1 : i32 to vector<1x256xi32>
    %20 = arith.addi %11, %19 : vector<1x256xi32>
    %21 = arith.select %18, %20, %11 : vector<1x256xi1>, vector<1x256xi32>
    %c16_i32_2 = arith.constant 16 : i32
    %22 = vector.broadcast %c16_i32_2 : i32 to vector<1x256xi32>
    %23 = arith.cmpi sge, %21, %22 : vector<1x256xi32>
    %c1_i32_3 = arith.constant 1 : i32
    %24 = vector.broadcast %c1_i32_3 : i32 to vector<1x256xi32>
    %25 = arith.addi %16, %24 : vector<1x256xi32>
    %26 = arith.select %23, %25, %16 : vector<1x256xi1>, vector<1x256xi32>
    %c16_i32_4 = arith.constant 16 : i32
    %27 = vector.broadcast %c16_i32_4 : i32 to vector<1x256xi32>
    %28 = arith.cmpi sge, %21, %27 : vector<1x256xi32>
    %c16_i32_5 = arith.constant 16 : i32
    %29 = vector.broadcast %c16_i32_5 : i32 to vector<1x256xi32>
    %30 = arith.subi %21, %29 : vector<1x256xi32>
    %31 = arith.select %28, %30, %21 : vector<1x256xi1>, vector<1x256xi32>
    %32 = arith.sitofp %31 : vector<1x256xi32> to vector<1x256xf32>
    %cst_6 = arith.constant 0.13333334 : f32
    %33 = vector.broadcast %cst_6 : f32 to vector<1x256xf32>
    %34 = arith.mulf %32, %33 : vector<1x256xf32>
    %cst_7 = arith.constant 1.000000e+00 : f32
    %35 = vector.broadcast %cst_7 : f32 to vector<1x256xf32>
    %36 = arith.subf %34, %35 : vector<1x256xf32>
    %37 = arith.sitofp %26 : vector<1x256xi32> to vector<1x256xf32>
    %cst_8 = arith.constant 0.13333334 : f32
    %38 = vector.broadcast %cst_8 : f32 to vector<1x256xf32>
    %39 = arith.mulf %37, %38 : vector<1x256xf32>
    %cst_9 = arith.constant 1.000000e+00 : f32
    %40 = vector.broadcast %cst_9 : f32 to vector<1x256xf32>
    %41 = arith.subf %39, %40 : vector<1x256xf32>
    %c0 = arith.constant 0 : index
    %c0_10 = arith.constant 0 : index
    %c0_11 = arith.constant 0 : index
    %42 = vector.load %arg3[%c0, %c0_10, %c0_11] : memref<1x2x256xf32, #tpu.memory_space<vmem>>, vector<1x1x256xf32>
    %43 = vector.shape_cast %42 : vector<1x1x256xf32> to vector<1x256xf32>
    %c0_12 = arith.constant 0 : index
    %c1 = arith.constant 1 : index
    %c0_13 = arith.constant 0 : index
    %44 = vector.load %arg3[%c0_12, %c1, %c0_13] : memref<1x2x256xf32, #tpu.memory_space<vmem>>, vector<1x1x256xf32>
    %45 = vector.shape_cast %44 : vector<1x1x256xf32> to vector<1x256xf32>
    %cst_14 = arith.constant 6.250000e-02 : f32
    %46 = vector.broadcast %cst_14 : f32 to vector<1x256xf32>
    %47 = arith.mulf %43, %46 : vector<1x256xf32>
    %48 = arith.addf %36, %47 : vector<1x256xf32>
    %cst_15 = arith.constant 6.250000e-02 : f32
    %49 = vector.broadcast %cst_15 : f32 to vector<1x256xf32>
    %50 = arith.mulf %45, %49 : vector<1x256xf32>
    %51 = arith.addf %41, %50 : vector<1x256xf32>
    %cst_16 = arith.constant 1.000000e+00 : f32
    %52 = vector.broadcast %cst_16 : f32 to vector<1x256xf32>
    %53 = arith.addf %48, %52 : vector<1x256xf32>
    %cst_17 = arith.constant 1.600000e+01 : f32
    %54 = vector.broadcast %cst_17 : f32 to vector<1x256xf32>
    %55 = arith.mulf %53, %54 : vector<1x256xf32>
    %cst_18 = arith.constant 1.000000e+00 : f32
    %56 = vector.broadcast %cst_18 : f32 to vector<1x256xf32>
    %57 = arith.subf %55, %56 : vector<1x256xf32>
    %cst_19 = arith.constant 5.000000e-01 : f32
    %58 = vector.broadcast %cst_19 : f32 to vector<1x256xf32>
    %59 = arith.mulf %57, %58 : vector<1x256xf32>
    %cst_20 = arith.constant 1.000000e+00 : f32
    %60 = vector.broadcast %cst_20 : f32 to vector<1x256xf32>
    %61 = arith.addf %51, %60 : vector<1x256xf32>
    %cst_21 = arith.constant 1.600000e+01 : f32
    %62 = vector.broadcast %cst_21 : f32 to vector<1x256xf32>
    %63 = arith.mulf %61, %62 : vector<1x256xf32>
    %cst_22 = arith.constant 1.000000e+00 : f32
    %64 = vector.broadcast %cst_22 : f32 to vector<1x256xf32>
    %65 = arith.subf %63, %64 : vector<1x256xf32>
    %cst_23 = arith.constant 5.000000e-01 : f32
    %66 = vector.broadcast %cst_23 : f32 to vector<1x256xf32>
    %67 = arith.mulf %65, %66 : vector<1x256xf32>
    %68 = math.floor %59 : vector<1x256xf32>
    %69 = math.floor %67 : vector<1x256xf32>
    %70 = arith.subf %59, %68 : vector<1x256xf32>
    %cst_24 = arith.constant 1.000000e+00 : f32
    %71 = vector.broadcast %cst_24 : f32 to vector<1x256xf32>
    %72 = arith.subf %71, %70 : vector<1x256xf32>
    %73 = arith.subf %67, %69 : vector<1x256xf32>
    %cst_25 = arith.constant 1.000000e+00 : f32
    %74 = vector.broadcast %cst_25 : f32 to vector<1x256xf32>
    %75 = arith.subf %74, %73 : vector<1x256xf32>
    %76 = arith.fptosi %68 : vector<1x256xf32> to vector<1x256xi32>
    %77 = arith.fptosi %69 : vector<1x256xf32> to vector<1x256xi32>
    %78 = tpu.iota {dimensions = array<i32: 0>} : vector<256x256xi32>
    %79 = arith.mulf %75, %72 : vector<1x256xf32>
    %c1_i32_26 = arith.constant 1 : i32
    %80 = vector.broadcast %c1_i32_26 : i32 to vector<1x256xi32>
    %81 = arith.addi %76, %80 : vector<1x256xi32>
    %82 = arith.mulf %75, %70 : vector<1x256xf32>
    %c1_i32_27 = arith.constant 1 : i32
    %83 = vector.broadcast %c1_i32_27 : i32 to vector<1x256xi32>
    %84 = arith.addi %77, %83 : vector<1x256xi32>
    %85 = arith.mulf %73, %72 : vector<1x256xf32>
    %c1_i32_28 = arith.constant 1 : i32
    %86 = vector.broadcast %c1_i32_28 : i32 to vector<1x256xi32>
    %87 = arith.addi %77, %86 : vector<1x256xi32>
    %c1_i32_29 = arith.constant 1 : i32
    %88 = vector.broadcast %c1_i32_29 : i32 to vector<1x256xi32>
    %89 = arith.addi %76, %88 : vector<1x256xi32>
    %90 = arith.mulf %73, %70 : vector<1x256xf32>
    %c0_i32_30 = arith.constant 0 : i32
    %91 = vector.broadcast %c0_i32_30 : i32 to vector<1x256xi32>
    %92 = arith.cmpi sge, %76, %91 : vector<1x256xi32>
    %c16_i32_31 = arith.constant 16 : i32
    %93 = vector.broadcast %c16_i32_31 : i32 to vector<1x256xi32>
    %94 = arith.cmpi slt, %76, %93 : vector<1x256xi32>
    %95 = arith.andi %92, %94 : vector<1x256xi1>
    %c0_i32_32 = arith.constant 0 : i32
    %96 = vector.broadcast %c0_i32_32 : i32 to vector<1x256xi32>
    %97 = arith.cmpi sge, %77, %96 : vector<1x256xi32>
    %98 = arith.andi %95, %97 : vector<1x256xi1>
    %c16_i32_33 = arith.constant 16 : i32
    %99 = vector.broadcast %c16_i32_33 : i32 to vector<1x256xi32>
    %100 = arith.cmpi slt, %77, %99 : vector<1x256xi32>
    %101 = arith.andi %98, %100 : vector<1x256xi1>
    %cst_34 = arith.constant 0.000000e+00 : f32
    %102 = vector.broadcast %cst_34 : f32 to vector<1x256xf32>
    %103 = arith.select %101, %79, %102 : vector<1x256xi1>, vector<1x256xf32>
    %c16_i32_35 = arith.constant 16 : i32
    %104 = vector.broadcast %c16_i32_35 : i32 to vector<1x256xi32>
    %105 = arith.muli %77, %104 : vector<1x256xi32>
    %106 = arith.addi %105, %76 : vector<1x256xi32>
    %107 = vector.broadcast %106 : vector<1x256xi32> to vector<256x256xi32>
    %108 = arith.cmpi eq, %78, %107 : vector<256x256xi32>
    %cst_36 = arith.constant 0.000000e+00 : f32
    %109 = vector.shape_cast %103 : vector<1x256xf32> to vector<1x256xf32>
    %110 = vector.broadcast %109 : vector<1x256xf32> to vector<256x256xf32>
    %111 = vector.broadcast %cst_36 : f32 to vector<256x256xf32>
    %112 = arith.select %108, %110, %111 : vector<256x256xi1>, vector<256x256xf32>
    %c0_i32_37 = arith.constant 0 : i32
    %113 = vector.broadcast %c0_i32_37 : i32 to vector<1x256xi32>
    %114 = arith.cmpi sge, %81, %113 : vector<1x256xi32>
    %c16_i32_38 = arith.constant 16 : i32
    %115 = vector.broadcast %c16_i32_38 : i32 to vector<1x256xi32>
    %116 = arith.cmpi slt, %81, %115 : vector<1x256xi32>
    %117 = arith.andi %114, %116 : vector<1x256xi1>
    %c0_i32_39 = arith.constant 0 : i32
    %118 = vector.broadcast %c0_i32_39 : i32 to vector<1x256xi32>
    %119 = arith.cmpi sge, %77, %118 : vector<1x256xi32>
    %120 = arith.andi %117, %119 : vector<1x256xi1>
    %c16_i32_40 = arith.constant 16 : i32
    %121 = vector.broadcast %c16_i32_40 : i32 to vector<1x256xi32>
    %122 = arith.cmpi slt, %77, %121 : vector<1x256xi32>
    %123 = arith.andi %120, %122 : vector<1x256xi1>
    %cst_41 = arith.constant 0.000000e+00 : f32
    %124 = vector.broadcast %cst_41 : f32 to vector<1x256xf32>
    %125 = arith.select %123, %82, %124 : vector<1x256xi1>, vector<1x256xf32>
    %c16_i32_42 = arith.constant 16 : i32
    %126 = vector.broadcast %c16_i32_42 : i32 to vector<1x256xi32>
    %127 = arith.muli %77, %126 : vector<1x256xi32>
    %128 = arith.addi %127, %81 : vector<1x256xi32>
    %129 = vector.broadcast %128 : vector<1x256xi32> to vector<256x256xi32>
    %130 = arith.cmpi eq, %78, %129 : vector<256x256xi32>
    %cst_43 = arith.constant 0.000000e+00 : f32
    %131 = vector.shape_cast %125 : vector<1x256xf32> to vector<1x256xf32>
    %132 = vector.broadcast %131 : vector<1x256xf32> to vector<256x256xf32>
    %133 = vector.broadcast %cst_43 : f32 to vector<256x256xf32>
    %134 = arith.select %130, %132, %133 : vector<256x256xi1>, vector<256x256xf32>
    %135 = arith.addf %112, %134 : vector<256x256xf32>
    %c0_i32_44 = arith.constant 0 : i32
    %136 = vector.broadcast %c0_i32_44 : i32 to vector<1x256xi32>
    %137 = arith.cmpi sge, %76, %136 : vector<1x256xi32>
    %c16_i32_45 = arith.constant 16 : i32
    %138 = vector.broadcast %c16_i32_45 : i32 to vector<1x256xi32>
    %139 = arith.cmpi slt, %76, %138 : vector<1x256xi32>
    %140 = arith.andi %137, %139 : vector<1x256xi1>
    %c0_i32_46 = arith.constant 0 : i32
    %141 = vector.broadcast %c0_i32_46 : i32 to vector<1x256xi32>
    %142 = arith.cmpi sge, %84, %141 : vector<1x256xi32>
    %143 = arith.andi %140, %142 : vector<1x256xi1>
    %c16_i32_47 = arith.constant 16 : i32
    %144 = vector.broadcast %c16_i32_47 : i32 to vector<1x256xi32>
    %145 = arith.cmpi slt, %84, %144 : vector<1x256xi32>
    %146 = arith.andi %143, %145 : vector<1x256xi1>
    %cst_48 = arith.constant 0.000000e+00 : f32
    %147 = vector.broadcast %cst_48 : f32 to vector<1x256xf32>
    %148 = arith.select %146, %85, %147 : vector<1x256xi1>, vector<1x256xf32>
    %c16_i32_49 = arith.constant 16 : i32
    %149 = vector.broadcast %c16_i32_49 : i32 to vector<1x256xi32>
    %150 = arith.muli %84, %149 : vector<1x256xi32>
    %151 = arith.addi %150, %76 : vector<1x256xi32>
    %152 = vector.broadcast %151 : vector<1x256xi32> to vector<256x256xi32>
    %153 = arith.cmpi eq, %78, %152 : vector<256x256xi32>
    %cst_50 = arith.constant 0.000000e+00 : f32
    %154 = vector.shape_cast %148 : vector<1x256xf32> to vector<1x256xf32>
    %155 = vector.broadcast %154 : vector<1x256xf32> to vector<256x256xf32>
    %156 = vector.broadcast %cst_50 : f32 to vector<256x256xf32>
    %157 = arith.select %153, %155, %156 : vector<256x256xi1>, vector<256x256xf32>
    %158 = arith.addf %135, %157 : vector<256x256xf32>
    %c0_i32_51 = arith.constant 0 : i32
    %159 = vector.broadcast %c0_i32_51 : i32 to vector<1x256xi32>
    %160 = arith.cmpi sge, %89, %159 : vector<1x256xi32>
    %c16_i32_52 = arith.constant 16 : i32
    %161 = vector.broadcast %c16_i32_52 : i32 to vector<1x256xi32>
    %162 = arith.cmpi slt, %89, %161 : vector<1x256xi32>
    %163 = arith.andi %160, %162 : vector<1x256xi1>
    %c0_i32_53 = arith.constant 0 : i32
    %164 = vector.broadcast %c0_i32_53 : i32 to vector<1x256xi32>
    %165 = arith.cmpi sge, %87, %164 : vector<1x256xi32>
    %166 = arith.andi %163, %165 : vector<1x256xi1>
    %c16_i32_54 = arith.constant 16 : i32
    %167 = vector.broadcast %c16_i32_54 : i32 to vector<1x256xi32>
    %168 = arith.cmpi slt, %87, %167 : vector<1x256xi32>
    %169 = arith.andi %166, %168 : vector<1x256xi1>
    %cst_55 = arith.constant 0.000000e+00 : f32
    %170 = vector.broadcast %cst_55 : f32 to vector<1x256xf32>
    %171 = arith.select %169, %90, %170 : vector<1x256xi1>, vector<1x256xf32>
    %c16_i32_56 = arith.constant 16 : i32
    %172 = vector.broadcast %c16_i32_56 : i32 to vector<1x256xi32>
    %173 = arith.muli %87, %172 : vector<1x256xi32>
    %174 = arith.addi %173, %89 : vector<1x256xi32>
    %175 = vector.broadcast %174 : vector<1x256xi32> to vector<256x256xi32>
    %176 = arith.cmpi eq, %78, %175 : vector<256x256xi32>
    %cst_57 = arith.constant 0.000000e+00 : f32
    %177 = vector.shape_cast %171 : vector<1x256xf32> to vector<1x256xf32>
    %178 = vector.broadcast %177 : vector<1x256xf32> to vector<256x256xf32>
    %179 = vector.broadcast %cst_57 : f32 to vector<256x256xf32>
    %180 = arith.select %176, %178, %179 : vector<256x256xi1>, vector<256x256xf32>
    %181 = arith.addf %158, %180 : vector<256x256xf32>
    %c0_58 = arith.constant 0 : index
    %c0_59 = arith.constant 0 : index
    %182 = vector.load %arg2[%c0_58, %c0_59] : memref<8x256xf32, #tpu.memory_space<vmem>>, vector<8x256xf32>
    %cst_60 = arith.constant dense<0.000000e+00> : vector<8x256xf32>
    %183 = tpu.matmul %182, %181, %cst_60 {dimension_numbers = #tpu.dot_dimension_numbers<[1], [0], [0], [1], [0, 0, 1, 1], [], []>} : vector<8x256xf32>, vector<256x256xf32>, vector<8x256xf32> -> vector<8x256xf32>
    %c0_61 = arith.constant 0 : index
    %c0_62 = arith.constant 0 : index
    %184 = vector.load %arg4[%c0_61, %c0_62] : memref<8x256xf32, #tpu.memory_space<vmem>>, vector<8x256xf32>
    tpu.vector_store %arg4[%c0_61, %c0_62], %183 {strides = array<i32>} : memref<8x256xf32, #tpu.memory_space<vmem>>, vector<8x256xf32>,
    return
  }
  func.func @transform_0(%arg0: i32, %arg1: i32) -> (i32, i32) {
    %c0_i32 = arith.constant 0 : i32
    %c0_i32_0 = arith.constant 0 : i32
    return %arg0, %c0_i32 : i32, i32
  }
  func.func @transform_1(%arg0: i32, %arg1: i32) -> (i32, i32, i32) {
    %c0_i32 = arith.constant 0 : i32
    %c0_i32_0 = arith.constant 0 : i32
    return %arg0, %c0_i32, %arg1 : i32, i32, i32
  }
  func.func @transform_2(%arg0: i32, %arg1: i32) -> (i32, i32) {
    %c0_i32 = arith.constant 0 : i32
    return %arg0, %arg1 : i32, i32
  }
}

</mosaic_0001>

<llo_original>
// kernel: align_module_full_forward.3
$region0: #{align_module_full_forward.3}
  #allocation0 [shape = 'u32[]', space=smem, size = 0x4, offset = 0x4, fixed_abs, tag = 'smem constant byte address 0x4 - core index']
  #allocation1 [shape = 'u32[144,128]{1,0:T(1,128)}', space=vmem, size = 0x12000, scoped, tag = 'internal scratch']
  %s0 = inlined_call_operand.hbm [shape: f32[16,256], index: 0, kind: input, shape index: {}]
  %s1 = inlined_call_operand.hbm [shape: f32[2,2,256], index: 1, kind: input, shape index: {}]
  %s2 = inlined_call_operand.hbm [shape: f32[16,256], index: 2, kind: output, shape index: {}]
  %s3 = sld [smem:[#allocation0]]
  $region49: #{align_module_full_forward.3} parent=0
    _
  %s5 = ssub.s32 1, %s3
  %s6 = scalar_select 0, %s5, %s3
  $region1: #{align_module_full_forward.3} parent=0
    #allocation2 [shape = 'u8[16384]{0}', space=vmem, size = 0x4000, scoped, tag = 'input window, operand 0']
    #allocation3 [shape = 's32[2]{0}', space=sflag, size = 0x8, scoped, tag = 'scoped memory for align_module_full_forward.3']
    #allocation4 [shape = 's32[2]{0}', space=sflag, size = 0x8, scoped, tag = 'scoped memory for align_module_full_forward.3']
    #allocation5 [shape = 'u8[4096]{0}', space=vmem, size = 0x1000, scoped, tag = 'input window, operand 1']
    #allocation6 [shape = 's32[2]{0}', space=sflag, size = 0x8, scoped, tag = 'scoped memory for align_module_full_forward.3']
    #allocation7 [shape = 'u8[16384]{0}', space=vmem, size = 0x4000, scoped, tag = 'output window, operand 0']
    %7 = vsyncpa [#allocation3], 0
    %s8 = scalar_lea.sflag [#allocation3], 1
    %9 = vsyncpa %s8, 0
    %10 = vsyncpa [#allocation6], 0
    %s11 = scalar_lea.sflag [#allocation6], 1
    %12 = vsyncpa %s11, 0
    %13 = vsyncpa [#allocation4], 0
    %s14 = scalar_lea.sflag [#allocation4], 1
    %15 = vsyncpa %s14, 0
    loop: start=0, step=1, limit=4
    $region2: #{align_module_full_forward.3} parent=1 // loop_pre_header
      _
    $region3: #{align_module_full_forward.3} parent=1 // loop_header
      %s17 = sphi 0, %s21
      %p18 = scmp.ge.s32.totalorder %s17, 4
      %s24 = sphi 0, %s36
      %s25 = sphi 0, %s32
      %s26 = sphi 0, %s24
      %s27 = sphi 0, %s25
      %s28 = sphi 0, %s26
      %s29 = sphi 0, %s27
      %s39 = sphi 0, %s41
      %s42 = sphi 0, %s39
      %s43 = sphi 0, %s42
      %s59 = sphi 0, %s43
      %s67 = sphi 0, %s69
      %s70 = sphi 0, %s67
      %s71 = sphi 0, %s70
      %s87 = sphi 0, %s71
      %s95 = sphi 0, %s97
      %s98 = sphi 0, %s95
      %s99 = sphi 0, %s98
      %s115 = sphi 0, %s99
    $region4: #{align_module_full_forward.3} parent=1 // loop_header_branch
      %20 = sbr.rel (%p18) target = $region8
    $region5: #{align_module_full_forward.3} parent=1 // loop_body
      %s22 = ssub.s32 %s17, 1
      %s23 = ssub.s32 %s17, 2
      %s30 = sadd.s32 1, %s25
      %p31 = scmp.ge.s32.totalorder %s30, 1
      %s32 = scalar_select %p31, 0, %s30
      %s33 = sadd.s32 1, %s24
      %s34 = scalar_select %p31, %s33, %s24
      %p35 = scmp.ge.s32.totalorder %s34, 2
      %s36 = scalar_select %p35, 0, %s34
      %s37 = ssub.s32 %s24, %s36
      %p38 = scmp.eq.s32.totalorder %s37, 0
      %s40 = sadd.s32 %s39, 1
      %s41 = scalar_select %p38, %s39, %s40
      %p44 = pneg %p38
      %p45 = scmp.eq.s32.totalorder %s17, 1
      %p46 = por %p44, %p45
      %p47 = scmp.ne.s32.totalorder %s39, %s42
      %p48 = scmp.eq.s32.totalorder %s17, 0
      %p49 = por %p47, %p48
      %p50 = scmp.ne.s32.totalorder %s39, %s42
      %p51 = scmp.eq.s32.totalorder %s22, 1
      %p52 = por %p50, %p51
      %p53 = scmp.ne.s32.totalorder %s42, %s43
      %p54 = scmp.eq.s32.totalorder %s22, 0
      %p55 = por %p53, %p54
      %p56 = scmp.ne.s32.totalorder %s42, %s43
      %p57 = scmp.eq.s32.totalorder %s23, 1
      %p58 = por %p56, %p57
      %p60 = scmp.ne.s32.totalorder %s43, %s59
      %p61 = scmp.eq.s32.totalorder %s23, 0
      %p62 = por %p60, %p61
      %s63 = ssub.s32 %s24, %s36
      %s64 = ssub.s32 %s25, %s32
      %s65 = sor.u32 %s63, %s64
      %p66 = scmp.eq.s32.totalorder %s65, 0
      %s68 = sadd.s32 %s67, 1
      %s69 = scalar_select %p66, %s67, %s68
      %p72 = pneg %p66
      %p73 = scmp.eq.s32.totalorder %s17, 1
      %p74 = por %p72, %p73
      %p75 = scmp.ne.s32.totalorder %s67, %s70
      %p76 = scmp.eq.s32.totalorder %s17, 0
      %p77 = por %p75, %p76
      %p78 = scmp.ne.s32.totalorder %s67, %s70
      %p79 = scmp.eq.s32.totalorder %s22, 1
      %p80 = por %p78, %p79
      %p81 = scmp.ne.s32.totalorder %s70, %s71
      %p82 = scmp.eq.s32.totalorder %s22, 0
      %p83 = por %p81, %p82
      %p84 = scmp.ne.s32.totalorder %s70, %s71
      %p85 = scmp.eq.s32.totalorder %s23, 1
      %p86 = por %p84, %p85
      %p88 = scmp.ne.s32.totalorder %s71, %s87
      %p89 = scmp.eq.s32.totalorder %s23, 0
      %p90 = por %p88, %p89
      %s91 = ssub.s32 %s24, %s36
      %s92 = ssub.s32 %s25, %s32
      %s93 = sor.u32 %s91, %s92
      %p94 = scmp.eq.s32.totalorder %s93, 0
      %s96 = sadd.s32 %s95, 1
      %s97 = scalar_select %p94, %s95, %s96
      %p100 = pneg %p94
      %p101 = scmp.eq.s32.totalorder %s17, 1
      %p102 = por %p100, %p101
      %p103 = scmp.ne.s32.totalorder %s95, %s98
      %p104 = scmp.eq.s32.totalorder %s17, 0
      %p105 = por %p103, %p104
      %p106 = scmp.ne.s32.totalorder %s95, %s98
      %p107 = scmp.eq.s32.totalorder %s22, 1
      %p108 = por %p106, %p107
      %p109 = scmp.ne.s32.totalorder %s98, %s99
      %p110 = scmp.eq.s32.totalorder %s22, 0
      %p111 = por %p109, %p110
      %p112 = scmp.ne.s32.totalorder %s98, %s99
      %p113 = scmp.eq.s32.totalorder %s23, 1
      %p114 = por %p112, %p113
      %p116 = scmp.ne.s32.totalorder %s99, %s115
      %p117 = scmp.eq.s32.totalorder %s23, 0
      %p118 = por %p116, %p117
      %p119 = scmp.le.s32.totalorder 1, %s17
      %p120 = scmp.lt.s32.totalorder %s17, 3
      %p121 = pnand %p119, %p120
      %p122 = pneg %p121
      // Predicated region
      $region9: #{align_module_full_forward.3} parent=5 // pred_check
        _
      $region10: #{align_module_full_forward.3} parent=5 // pred_check_branch
        %124 = sbr.rel (%p121) target = $region12
      $region11: #{align_module_full_forward.3} parent=5 // pred_region
        %s125 = ssub.s32 %s17, 1
      $region12: #{align_module_full_forward.3} parent=5 // pred_fallthru
        _
      %p126 = scmp.lt.s32.totalorder %s17, 2
      // Predicated region
      $region13: #{align_module_full_forward.3} parent=5 // pred_check
        %p127 = pneg %p126
      $region14: #{align_module_full_forward.3} parent=5 // pred_check_branch
        %129 = sbr.rel (%p127) target = $region16
      $region15: #{align_module_full_forward.3} parent=5 // pred_region
        // Predicated region
        $region17: #{align_module_full_forward.3} parent=15 // pred_check
          %p130 = pneg %p49
        $region18: #{align_module_full_forward.3} parent=15 // pred_check_branch
          %132 = sbr.rel (%p130) target = $region20
        $region19: #{align_module_full_forward.3} parent=15 // pred_region
          %s133 = sand.u32 %s39, 1
          %s134 = scalar_lea.sflag [#allocation3], %s133
          %s135 = sand.u32 %s39, 1
          %s136 = smul.addr %s135, 16
          %s137 = scalar_lea.vmem [#allocation2], %s136
          %s139 = ssub.s32 256, 256
          %140 = vsyncadd %s134, %s139
          %s141 = smul.addr %s24, 2
          %s142 = smul.addr %s141, 128
          %s143 = scalar_lea.hbm %s0, %s142
          %s145 = sshll.u32 %s137, 4
          %s146 = int_to_ptr.vmem [resolvable:$true] %s145
          %148 = dma.hbm_to_vmem [thread:$0]  %s143, 256, %s146, %s134
        $region20: #{align_module_full_forward.3} parent=15 // pred_fallthru
          _
        // Predicated region
        $region21: #{align_module_full_forward.3} parent=15 // pred_check
          %p149 = pneg %p77
        $region22: #{align_module_full_forward.3} parent=15 // pred_check_branch
          %151 = sbr.rel (%p149) target = $region24
        $region23: #{align_module_full_forward.3} parent=15 // pred_region
          %s152 = sand.u32 %s67, 1
          %s153 = scalar_lea.sflag [#allocation6], %s152
          %s154 = sand.u32 %s67, 1
          %s155 = smul.addr %s154, 4
          %s156 = scalar_lea.vmem [#allocation5], %s155
          %s157 = smul.u32 2, %s25
          %s159 = ssub.s32 64, 64
          %160 = vsyncadd %s153, %s159
          %s161 = smul.addr %s24, 2
          %s162 = sadd.s32 %s157, %s161
          %s163 = smul.addr %s162, 32
          %s164 = scalar_lea.hbm %s1, %s163
          %s166 = sshll.u32 %s156, 4
          %s167 = int_to_ptr.vmem [resolvable:$true] %s166
          %169 = dma.hbm_to_vmem [thread:$0]  %s164, 64, %s167, %s153
        $region24: #{align_module_full_forward.3} parent=15 // pred_fallthru
          _
      $region16: #{align_module_full_forward.3} parent=5 // pred_fallthru
        _
      %p170 = scmp.le.s32.totalorder 1, %s17
      %p171 = scmp.lt.s32.totalorder %s17, 3
      %p172 = pnand %p170, %p171
      %p173 = pneg %p172
      // Predicated region
      $region25: #{align_module_full_forward.3} parent=5 // pred_check
        _
      $region26: #{align_module_full_forward.3} parent=5 // pred_check_branch
        %175 = sbr.rel (%p172) target = $region28
      $region27: #{align_module_full_forward.3} parent=5 // pred_region
        %s176 = ssub.s32 %s17, 1
        %s177 = sand.u32 %s42, 1
        %s178 = scalar_lea.sflag [#allocation3], %s177
        %s179 = sand.u32 %s42, 1
        %s180 = smul.addr %s179, 16
        %s181 = scalar_lea.vmem [#allocation2], %s180
        // Predicated region
        $region29: #{align_module_full_forward.3} parent=27 // pred_check
          %p182 = pneg %p55
        $region30: #{align_module_full_forward.3} parent=27 // pred_check_branch
          %184 = sbr.rel (%p182) target = $region32
        $region31: #{align_module_full_forward.3} parent=27 // pred_region
          %185 = dma.done %s178, 256
        $region32: #{align_module_full_forward.3} parent=27 // pred_fallthru
          _
        %s186 = sand.u32 %s70, 1
        %s187 = scalar_lea.sflag [#allocation6], %s186
        %s188 = sand.u32 %s70, 1
        %s189 = smul.addr %s188, 4
        %s190 = scalar_lea.vmem [#allocation5], %s189
        // Predicated region
        $region33: #{align_module_full_forward.3} parent=27 // pred_check
          %p191 = pneg %p83
        $region34: #{align_module_full_forward.3} parent=27 // pred_check_branch
          %193 = sbr.rel (%p191) target = $region36
        $region35: #{align_module_full_forward.3} parent=27 // pred_region
          %194 = dma.done %s187, 64
        $region36: #{align_module_full_forward.3} parent=27 // pred_fallthru
          _
        %s195 = sand.u32 %s42, 1
        %s196 = scalar_lea.sflag [#allocation3], %s195
        %s197 = sand.u32 %s42, 1
        %s198 = smul.addr %s197, 16
        %s199 = scalar_lea.vmem [#allocation2], %s198
        %p200 = pneg %p55
        %p201 = pneg %p52
        %s202 = sand.u32 %s70, 1
        %s203 = scalar_lea.sflag [#allocation6], %s202
        %s204 = sand.u32 %s70, 1
        %s205 = smul.addr %s204, 4
        %s206 = scalar_lea.vmem [#allocation5], %s205
        %p207 = pneg %p83
        %p208 = pneg %p80
        %p209 = pneg %p111
        %p210 = pneg %p108
        %s211 = sand.u32 %s98, 1
        %s212 = scalar_lea.sflag [#allocation4], %s211
        %s213 = sand.u32 %s98, 1
        %s214 = smul.addr %s213, 16
        %s215 = scalar_lea.vmem [#allocation7], %s214
        %s216 = smul.u32 2, %s27
        %s217 = smul.u32 2, %s27
        %s218 = smul.u32 %s27, 256
        %v219 = vlaneseq
        %v220 = vand.u32 %v219, 127
        %v221 = vadd.s32 %v220, 128
        %v222 = vstv %s218
        %v223 = vadd.s32 %v220, %v222
        %v224 = vadd.s32 %v221, %v222
        %v225 = vcvt.s32.f32 %v223
        %v226 = vcvt.s32.f32 %v224
        %v227 = vmul.f32 %v225, 0.0625
        %v228 = vmul.f32 %v226, 0.0625
        %v229 = vfloor.f32 %v227
        %v230 = vfloor.f32 %v228
        %v231 = vcvt.f32.s32.to.zero.pseudo %v229
        %v232 = vcvt.f32.s32.to.zero.pseudo %v230
        %v233 = vmul.u32 %v231, 16
        %v234 = vmul.u32 %v232, 16
        %v235 = vsub.s32 %v223, %v233
        %v236 = vsub.s32 %v224, %v234
        %vm237 = vcmp.lt.s32.totalorder %v235, 0
        %vm238 = vcmp.lt.s32.totalorder %v236, 0
        %v239 = vsub.s32 %v231, 1
        %v240 = vsub.s32 %v232, 1
        %v241 = vsel %vm237, %v239, %v231
        %v242 = vsel %vm238, %v240, %v232
        %v243 = vadd.s32 %v235, 16
        %v244 = vadd.s32 %v236, 16
        %v245 = vsel %vm237, %v243, %v235
        %v246 = vsel %vm238, %v244, %v236
        %vm247 = vcmp.ge.s32.totalorder %v245, 16
        %vm248 = vcmp.ge.s32.totalorder %v246, 16
        %v249 = vadd.s32 %v241, 1
        %v250 = vadd.s32 %v242, 1
        %v251 = vsel %vm247, %v249, %v241
        %v252 = vsel %vm248, %v250, %v242
        %v253 = vsub.s32 %v245, 16
        %v254 = vsub.s32 %v246, 16
        %v255 = vsel %vm247, %v253, %v245
        %v256 = vsel %vm248, %v254, %v246
        %v257 = vcvt.s32.f32 %v255
        %v258 = vcvt.s32.f32 %v256
        %v259 = vmul.f32 %v257, 0.13333334
        %v260 = vmul.f32 %v258, 0.13333334
        %v261 = vsub.f32 %v259, 1.0
        %v262 = vsub.f32 %v260, 1.0
        %v263 = vcvt.s32.f32 %v251
        %v264 = vcvt.s32.f32 %v252
        %v265 = vmul.f32 %v263, 0.13333334
        %v266 = vmul.f32 %v264, 0.13333334
        %v267 = vsub.f32 %v265, 1.0
        %v268 = vsub.f32 %v266, 1.0
        %v269 = vld [vmem:[%s190] ss:$2 sm:$0x3]
        %s270 = scalar_lea.vmem %s190, 1 [#allocation5]
        %v271 = vld [vmem:[%s270] ss:$2 sm:$0x3]
        %v272 = vmul.f32 %v269, 0.0625
        %v274 = vlaneseq
        %v275 = vshrl.u32 %v274, 7
        %v276 = vsub.s32 0, %v275
        %v277 = vrot.slane %v272, %v276
        %v278 = vlaneseq
        %v279 = vshrl.u32 %v278, 7
        %v280 = vsub.s32 1, %v279
        %v281 = vrot.slane %v272, %v280
        %v284 = vadd.f32 %v261, %v277
        %v285 = vadd.f32 %v262, %v281
        %v286 = vmul.f32 %v271, 0.0625
        %v288 = vlaneseq
        %v289 = vshrl.u32 %v288, 7
        %v290 = vsub.s32 0, %v289
        %v291 = vrot.slane %v286, %v290
        %v292 = vlaneseq
        %v293 = vshrl.u32 %v292, 7
        %v294 = vsub.s32 1, %v293
        %v295 = vrot.slane %v286, %v294
        %v298 = vadd.f32 %v267, %v291
        %v299 = vadd.f32 %v268, %v295
        %v300 = vadd.f32 %v284, 1.0
        %v301 = vadd.f32 %v285, 1.0
        %v302 = vmul.f32 %v300, 16.0
        %v303 = vmul.f32 %v301, 16.0
        %v304 = vsub.f32 %v302, 1.0
        %v305 = vsub.f32 %v303, 1.0
        %v306 = vmul.f32 %v304, 0.5
        %v307 = vmul.f32 %v305, 0.5
        %v308 = vadd.f32 %v298, 1.0
        %v309 = vadd.f32 %v299, 1.0
        %v310 = vmul.f32 %v308, 16.0
        %v311 = vmul.f32 %v309, 16.0
        %v312 = vsub.f32 %v310, 1.0
        %v313 = vsub.f32 %v311, 1.0
        %v314 = vmul.f32 %v312, 0.5
        %v315 = vmul.f32 %v313, 0.5
        %v316 = vfloor.f32 %v306
        %v317 = vfloor.f32 %v307
        %v318 = vfloor.f32 %v314
        %v319 = vfloor.f32 %v315
        %v320 = vsub.f32 %v306, %v316
        %v321 = vsub.f32 %v307, %v317
        %v322 = vsub.f32 1.0, %v320
        %v323 = vsub.f32 1.0, %v321
        %v324 = vsub.f32 %v314, %v318
        %v325 = vsub.f32 %v315, %v319
        %v326 = vsub.f32 1.0, %v324
        %v327 = vsub.f32 1.0, %v325
        %v328 = vcvt.f32.s32.to.zero.pseudo %v316
        %v329 = vcvt.f32.s32.to.zero.pseudo %v317
        %v330 = vcvt.f32.s32.to.zero.pseudo %v318
        %v331 = vcvt.f32.s32.to.zero.pseudo %v319
        %v332 = vlaneseq
        %v333 = vshrl.u32 %v332, 7
        %v334 = vadd.s32 %v333, 8
        %v335 = vadd.s32 %v333, 16
        %v336 = vadd.s32 %v333, 24
        %v337 = vadd.s32 %v333, 32
        %v338 = vadd.s32 %v333, 40
        %v339 = vadd.s32 %v333, 48
        %v340 = vadd.s32 %v333, 56
        %v341 = vadd.s32 %v333, 64
        %v342 = vadd.s32 %v333, 72
        %v343 = vadd.s32 %v333, 80
        %v344 = vadd.s32 %v333, 88
        %v345 = vadd.s32 %v333, 96
        %v346 = vadd.s32 %v333, 104
        %v347 = vadd.s32 %v333, 112
        %v348 = vadd.s32 %v333, 120
        %v349 = vadd.s32 %v333, 128
        %v350 = vadd.s32 %v333, 136
        %v351 = vadd.s32 %v333, 144
        %v352 = vadd.s32 %v333, 152
        %v353 = vadd.s32 %v333, 160
        %v354 = vadd.s32 %v333, 168
        %v355 = vadd.s32 %v333, 176
        %v356 = vadd.s32 %v333, 184
        %v357 = vadd.s32 %v333, 192
        %v358 = vadd.s32 %v333, 200
        %v359 = vadd.s32 %v333, 208
        %v360 = vadd.s32 %v333, 216
        %v361 = vadd.s32 %v333, 224
        %v362 = vadd.s32 %v333, 232
        %v363 = vadd.s32 %v333, 240
        %v364 = vadd.s32 %v333, 248
        %v365 = vmul.f32 %v326, %v322
        %v366 = vmul.f32 %v327, %v323
        %v367 = vadd.s32 %v328, 1
        %v368 = vadd.s32 %v329, 1
        %v369 = vmul.f32 %v326, %v320
        %v370 = vmul.f32 %v327, %v321
        %v371 = vadd.s32 %v330, 1
        %v372 = vadd.s32 %v331, 1
        %v373 = vmul.f32 %v324, %v322
        %v374 = vmul.f32 %v325, %v323
        %v375 = vmul.f32 %v324, %v320
        %v376 = vmul.f32 %v325, %v321
        %vm377 = vcmp.ge.s32.totalorder %v328, 0
        %vm378 = vcmp.ge.s32.totalorder %v329, 0
        %vm379 = vcmp.lt.s32.totalorder %v328, 16
        %vm380 = vcmp.lt.s32.totalorder %v329, 16
        %vm381 = vmand %vm377, %vm379
        %vm382 = vmand %vm378, %vm380
        %vm383 = vcmp.ge.s32.totalorder %v330, 0
        %vm384 = vcmp.ge.s32.totalorder %v331, 0
        %vm385 = vmand %vm381, %vm383
        %vm386 = vmand %vm382, %vm384
        %vm387 = vcmp.lt.s32.totalorder %v330, 16
        %vm388 = vcmp.lt.s32.totalorder %v331, 16
        %vm389 = vmand %vm385, %vm387
        %vm390 = vmand %vm386, %vm388
        %v391 = vsel %vm389, %v365, 0.0
        %v392 = vsel %vm390, %v366, 0.0
        %v393 = vmul.u32 %v330, 16
        %v394 = vmul.u32 %v331, 16
        %v395 = vadd.s32 %v393, %v328
        %v396 = vadd.s32 %v394, %v329
        %v397 = vlaneseq
        %v398 = vshrl.u32 %v397, 7
        %v399 = vsub.s32 0, %v398
        %v400 = vrot.slane %v395, %v399
        %v401 = vlaneseq
        %v402 = vshrl.u32 %v401, 7
        %v403 = vsub.s32 0, %v402
        %v404 = vrot.slane %v396, %v403
        %vm405 = vcmp.eq.s32.totalorder %v333, %v400
        %vm406 = vcmp.eq.s32.totalorder %v333, %v404
        %vm407 = vcmp.eq.s32.totalorder %v334, %v400
        %vm408 = vcmp.eq.s32.totalorder %v334, %v404
        %vm409 = vcmp.eq.s32.totalorder %v335, %v400
        %vm410 = vcmp.eq.s32.totalorder %v335, %v404
        %vm411 = vcmp.eq.s32.totalorder %v336, %v400
        %vm412 = vcmp.eq.s32.totalorder %v336, %v404
        %vm413 = vcmp.eq.s32.totalorder %v337, %v400
        %vm414 = vcmp.eq.s32.totalorder %v337, %v404
        %vm415 = vcmp.eq.s32.totalorder %v338, %v400
        %vm416 = vcmp.eq.s32.totalorder %v338, %v404
        %vm417 = vcmp.eq.s32.totalorder %v339, %v400
        %vm418 = vcmp.eq.s32.totalorder %v339, %v404
        %vm419 = vcmp.eq.s32.totalorder %v340, %v400
        %vm420 = vcmp.eq.s32.totalorder %v340, %v404
        %vm421 = vcmp.eq.s32.totalorder %v341, %v400
        %vm422 = vcmp.eq.s32.totalorder %v341, %v404
        %vm423 = vcmp.eq.s32.totalorder %v342, %v400
        %vm424 = vcmp.eq.s32.totalorder %v342, %v404
        %vm425 = vcmp.eq.s32.totalorder %v343, %v400
        %vm426 = vcmp.eq.s32.totalorder %v343, %v404
        %vm427 = vcmp.eq.s32.totalorder %v344, %v400
        %vm428 = vcmp.eq.s32.totalorder %v344, %v404
        %vm429 = vcmp.eq.s32.totalorder %v345, %v400
        %vm430 = vcmp.eq.s32.totalorder %v345, %v404
        %vm431 = vcmp.eq.s32.totalorder %v346, %v400
        %vm432 = vcmp.eq.s32.totalorder %v346, %v404
        %vm433 = vcmp.eq.s32.totalorder %v347, %v400
        %vm434 = vcmp.eq.s32.totalorder %v347, %v404
        %vm435 = vcmp.eq.s32.totalorder %v348, %v400
        %vm436 = vcmp.eq.s32.totalorder %v348, %v404
        %vm437 = vcmp.eq.s32.totalorder %v349, %v400
        %vm438 = vcmp.eq.s32.totalorder %v349, %v404
        %vm439 = vcmp.eq.s32.totalorder %v350, %v400
        %vm440 = vcmp.eq.s32.totalorder %v350, %v404
        %vm441 = vcmp.eq.s32.totalorder %v351, %v400
        %vm442 = vcmp.eq.s32.totalorder %v351, %v404
        %vm443 = vcmp.eq.s32.totalorder %v352, %v400
        %vm444 = vcmp.eq.s32.totalorder %v352, %v404
        %vm445 = vcmp.eq.s32.totalorder %v353, %v400
        %vm446 = vcmp.eq.s32.totalorder %v353, %v404
        %vm447 = vcmp.eq.s32.totalorder %v354, %v400
        %vm448 = vcmp.eq.s32.totalorder %v354, %v404
        %vm449 = vcmp.eq.s32.totalorder %v355, %v400
        %vm450 = vcmp.eq.s32.totalorder %v355, %v404
        %vm451 = vcmp.eq.s32.totalorder %v356, %v400
        %vm452 = vcmp.eq.s32.totalorder %v356, %v404
        %vm453 = vcmp.eq.s32.totalorder %v357, %v400
        %vm454 = vcmp.eq.s32.totalorder %v357, %v404
        %vm455 = vcmp.eq.s32.totalorder %v358, %v400
        %vm456 = vcmp.eq.s32.totalorder %v358, %v404
        %vm457 = vcmp.eq.s32.totalorder %v359, %v400
        %vm458 = vcmp.eq.s32.totalorder %v359, %v404
        %vm459 = vcmp.eq.s32.totalorder %v360, %v400
        %vm460 = vcmp.eq.s32.totalorder %v360, %v404
        %vm461 = vcmp.eq.s32.totalorder %v361, %v400
        %vm462 = vcmp.eq.s32.totalorder %v361, %v404
        %vm463 = vcmp.eq.s32.totalorder %v362, %v400
        %vm464 = vcmp.eq.s32.totalorder %v362, %v404
        %vm465 = vcmp.eq.s32.totalorder %v363, %v400
        %vm466 = vcmp.eq.s32.totalorder %v363, %v404
        %vm467 = vcmp.eq.s32.totalorder %v364, %v400
        %vm468 = vcmp.eq.s32.totalorder %v364, %v404
        %v469 = vlaneseq
        %v470 = vshrl.u32 %v469, 7
        %v471 = vsub.s32 0, %v470
        %v472 = vrot.slane %v391, %v471
        %v473 = vlaneseq
        %v474 = vshrl.u32 %v473, 7
        %v475 = vsub.s32 0, %v474
        %v476 = vrot.slane %v392, %v475
        %v477 = vsel %vm405, %v472, 0.0
        %v478 = vsel %vm406, %v476, 0.0
        %v479 = vsel %vm407, %v472, 0.0
        %v480 = vsel %vm408, %v476, 0.0
        %v481 = vsel %vm409, %v472, 0.0
        %v482 = vsel %vm410, %v476, 0.0
        %v483 = vsel %vm411, %v472, 0.0
        %v484 = vsel %vm412, %v476, 0.0
        %v485 = vsel %vm413, %v472, 0.0
        %v486 = vsel %vm414, %v476, 0.0
        %v487 = vsel %vm415, %v472, 0.0
        %v488 = vsel %vm416, %v476, 0.0
        %v489 = vsel %vm417, %v472, 0.0
        %v490 = vsel %vm418, %v476, 0.0
        %v491 = vsel %vm419, %v472, 0.0
        %v492 = vsel %vm420, %v476, 0.0
        %v493 = vsel %vm421, %v472, 0.0
        %v494 = vsel %vm422, %v476, 0.0
        %v495 = vsel %vm423, %v472, 0.0
        %v496 = vsel %vm424, %v476, 0.0
        %v497 = vsel %vm425, %v472, 0.0
        %v498 = vsel %vm426, %v476, 0.0
        %v499 = vsel %vm427, %v472, 0.0
        %v500 = vsel %vm428, %v476, 0.0
        %v501 = vsel %vm429, %v472, 0.0
        %v502 = vsel %vm430, %v476, 0.0
        %v503 = vsel %vm431, %v472, 0.0
        %v504 = vsel %vm432, %v476, 0.0
        %v505 = vsel %vm433, %v472, 0.0
        %v506 = vsel %vm434, %v476, 0.0
        %v507 = vsel %vm435, %v472, 0.0
        %v508 = vsel %vm436, %v476, 0.0
        %v509 = vsel %vm437, %v472, 0.0
        %v510 = vsel %vm438, %v476, 0.0
        %v511 = vsel %vm439, %v472, 0.0
        %v512 = vsel %vm440, %v476, 0.0
        %v513 = vsel %vm441, %v472, 0.0
        %v514 = vsel %vm442, %v476, 0.0
        %v515 = vsel %vm443, %v472, 0.0
        %v516 = vsel %vm444, %v476, 0.0
        %v517 = vsel %vm445, %v472, 0.0
        %v518 = vsel %vm446, %v476, 0.0
        %v519 = vsel %vm447, %v472, 0.0
        %v520 = vsel %vm448, %v476, 0.0
        %v521 = vsel %vm449, %v472, 0.0
        %v522 = vsel %vm450, %v476, 0.0
        %v523 = vsel %vm451, %v472, 0.0
        %v524 = vsel %vm452, %v476, 0.0
        %v525 = vsel %vm453, %v472, 0.0
        %v526 = vsel %vm454, %v476, 0.0
        %v527 = vsel %vm455, %v472, 0.0
        %v528 = vsel %vm456, %v476, 0.0
        %v529 = vsel %vm457, %v472, 0.0
        %v530 = vsel %vm458, %v476, 0.0
        %v531 = vsel %vm459, %v472, 0.0
        %v532 = vsel %vm460, %v476, 0.0
        %v533 = vsel %vm461, %v472, 0.0
        %v534 = vsel %vm462, %v476, 0.0
        %v535 = vsel %vm463, %v472, 0.0
        %v536 = vsel %vm464, %v476, 0.0
        %v537 = vsel %vm465, %v472, 0.0
        %v538 = vsel %vm466, %v476, 0.0
        %v539 = vsel %vm467, %v472, 0.0
        %v540 = vsel %vm468, %v476, 0.0
        %vm541 = vcmp.ge.s32.totalorder %v367, 0
        %vm542 = vcmp.ge.s32.totalorder %v368, 0
        %vm543 = vcmp.lt.s32.totalorder %v367, 16
        %vm544 = vcmp.lt.s32.totalorder %v368, 16
        %vm545 = vmand %vm541, %vm543
        %vm546 = vmand %vm542, %vm544
        %vm547 = vmand %vm545, %vm383
        %vm548 = vmand %vm546, %vm384
        %vm549 = vmand %vm547, %vm387
        %vm550 = vmand %vm548, %vm388
        %v551 = vsel %vm549, %v369, 0.0
        %v552 = vsel %vm550, %v370, 0.0
        %v553 = vadd.s32 %v393, %v367
        %v554 = vadd.s32 %v394, %v368
        %v555 = vlaneseq
        %v556 = vshrl.u32 %v555, 7
        %v557 = vsub.s32 0, %v556
        %v558 = vrot.slane %v553, %v557
        %v559 = vlaneseq
        %v560 = vshrl.u32 %v559, 7
        %v561 = vsub.s32 0, %v560
        %v562 = vrot.slane %v554, %v561
        %vm563 = vcmp.eq.s32.totalorder %v333, %v558
        %vm564 = vcmp.eq.s32.totalorder %v333, %v562
        %vm565 = vcmp.eq.s32.totalorder %v334, %v558
        %vm566 = vcmp.eq.s32.totalorder %v334, %v562
        %vm567 = vcmp.eq.s32.totalorder %v335, %v558
        %vm568 = vcmp.eq.s32.totalorder %v335, %v562
        %vm569 = vcmp.eq.s32.totalorder %v336, %v558
        %vm570 = vcmp.eq.s32.totalorder %v336, %v562
        %vm571 = vcmp.eq.s32.totalorder %v337, %v558
        %vm572 = vcmp.eq.s32.totalorder %v337, %v562
        %vm573 = vcmp.eq.s32.totalorder %v338, %v558
        %vm574 = vcmp.eq.s32.totalorder %v338, %v562
        %vm575 = vcmp.eq.s32.totalorder %v339, %v558
        %vm576 = vcmp.eq.s32.totalorder %v339, %v562
        %vm577 = vcmp.eq.s32.totalorder %v340, %v558
        %vm578 = vcmp.eq.s32.totalorder %v340, %v562
        %vm579 = vcmp.eq.s32.totalorder %v341, %v558
        %vm580 = vcmp.eq.s32.totalorder %v341, %v562
        %vm581 = vcmp.eq.s32.totalorder %v342, %v558
        %vm582 = vcmp.eq.s32.totalorder %v342, %v562
        %vm583 = vcmp.eq.s32.totalorder %v343, %v558
        %vm584 = vcmp.eq.s32.totalorder %v343, %v562
        %vm585 = vcmp.eq.s32.totalorder %v344, %v558
        %vm586 = vcmp.eq.s32.totalorder %v344, %v562
        %vm587 = vcmp.eq.s32.totalorder %v345, %v558
        %vm588 = vcmp.eq.s32.totalorder %v345, %v562
        %vm589 = vcmp.eq.s32.totalorder %v346, %v558
        %vm590 = vcmp.eq.s32.totalorder %v346, %v562
        %vm591 = vcmp.eq.s32.totalorder %v347, %v558
        %vm592 = vcmp.eq.s32.totalorder %v347, %v562
        %vm593 = vcmp.eq.s32.totalorder %v348, %v558
        %vm594 = vcmp.eq.s32.totalorder %v348, %v562
        %vm595 = vcmp.eq.s32.totalorder %v349, %v558
        %vm596 = vcmp.eq.s32.totalorder %v349, %v562
        %vm597 = vcmp.eq.s32.totalorder %v350, %v558
        %vm598 = vcmp.eq.s32.totalorder %v350, %v562
        %vm599 = vcmp.eq.s32.totalorder %v351, %v558
        %vm600 = vcmp.eq.s32.totalorder %v351, %v562
        %vm601 = vcmp.eq.s32.totalorder %v352, %v558
        %vm602 = vcmp.eq.s32.totalorder %v352, %v562
        %vm603 = vcmp.eq.s32.totalorder %v353, %v558
        %vm604 = vcmp.eq.s32.totalorder %v353, %v562
        %vm605 = vcmp.eq.s32.totalorder %v354, %v558
        %vm606 = vcmp.eq.s32.totalorder %v354, %v562
        %vm607 = vcmp.eq.s32.totalorder %v355, %v558
        %vm608 = vcmp.eq.s32.totalorder %v355, %v562
        %vm609 = vcmp.eq.s32.totalorder %v356, %v558
        %vm610 = vcmp.eq.s32.totalorder %v356, %v562
        %vm611 = vcmp.eq.s32.totalorder %v357, %v558
        %vm612 = vcmp.eq.s32.totalorder %v357, %v562
        %vm613 = vcmp.eq.s32.totalorder %v358, %v558
        %vm614 = vcmp.eq.s32.totalorder %v358, %v562
        %vm615 = vcmp.eq.s32.totalorder %v359, %v558
        %vm616 = vcmp.eq.s32.totalorder %v359, %v562
        %vm617 = vcmp.eq.s32.totalorder %v360, %v558
        %vm618 = vcmp.eq.s32.totalorder %v360, %v562
        %vm619 = vcmp.eq.s32.totalorder %v361, %v558
        %vm620 = vcmp.eq.s32.totalorder %v361, %v562
        %vm621 = vcmp.eq.s32.totalorder %v362, %v558
        %vm622 = vcmp.eq.s32.totalorder %v362, %v562
        %vm623 = vcmp.eq.s32.totalorder %v363, %v558
        %vm624 = vcmp.eq.s32.totalorder %v363, %v562
        %vm625 = vcmp.eq.s32.totalorder %v364, %v558
        %vm626 = vcmp.eq.s32.totalorder %v364, %v562
        %v627 = vlaneseq
        %v628 = vshrl.u32 %v627, 7
        %v629 = vsub.s32 0, %v628
        %v630 = vrot.slane %v551, %v629
        %v631 = vlaneseq
        %v632 = vshrl.u32 %v631, 7
        %v633 = vsub.s32 0, %v632
        %v634 = vrot.slane %v552, %v633
        %v635 = vsel %vm563, %v630, 0.0
        %v636 = vsel %vm564, %v634, 0.0
        %v637 = vsel %vm565, %v630, 0.0
        %v638 = vsel %vm566, %v634, 0.0
        %v639 = vsel %vm567, %v630, 0.0
        %v640 = vsel %vm568, %v634, 0.0
        %v641 = vsel %vm569, %v630, 0.0
        %v642 = vsel %vm570, %v634, 0.0
        %v643 = vsel %vm571, %v630, 0.0
        %v644 = vsel %vm572, %v634, 0.0
        %v645 = vsel %vm573, %v630, 0.0
        %v646 = vsel %vm574, %v634, 0.0
        %v647 = vsel %vm575, %v630, 0.0
        %v648 = vsel %vm576, %v634, 0.0
        %v649 = vsel %vm577, %v630, 0.0
        %v650 = vsel %vm578, %v634, 0.0
        %v651 = vsel %vm579, %v630, 0.0
        %v652 = vsel %vm580, %v634, 0.0
        %v653 = vsel %vm581, %v630, 0.0
        %v654 = vsel %vm582, %v634, 0.0
        %v655 = vsel %vm583, %v630, 0.0
        %v656 = vsel %vm584, %v634, 0.0
        %v657 = vsel %vm585, %v630, 0.0
        %v658 = vsel %vm586, %v634, 0.0
        %v659 = vsel %vm587, %v630, 0.0
        %v660 = vsel %vm588, %v634, 0.0
        %v661 = vsel %vm589, %v630, 0.0
        %v662 = vsel %vm590, %v634, 0.0
        %v663 = vsel %vm591, %v630, 0.0
        %v664 = vsel %vm592, %v634, 0.0
        %v665 = vsel %vm593, %v630, 0.0
        %v666 = vsel %vm594, %v634, 0.0
        %v667 = vsel %vm595, %v630, 0.0
        %v668 = vsel %vm596, %v634, 0.0
        %v669 = vsel %vm597, %v630, 0.0
        %v670 = vsel %vm598, %v634, 0.0
        %v671 = vsel %vm599, %v630, 0.0
        %v672 = vsel %vm600, %v634, 0.0
        %v673 = vsel %vm601, %v630, 0.0
        %v674 = vsel %vm602, %v634, 0.0
        %v675 = vsel %vm603, %v630, 0.0
        %v676 = vsel %vm604, %v634, 0.0
        %v677 = vsel %vm605, %v630, 0.0
        %v678 = vsel %vm606, %v634, 0.0
        %v679 = vsel %vm607, %v630, 0.0
        %v680 = vsel %vm608, %v634, 0.0
        %v681 = vsel %vm609, %v630, 0.0
        %v682 = vsel %vm610, %v634, 0.0
        %v683 = vsel %vm611, %v630, 0.0
        %v684 = vsel %vm612, %v634, 0.0
        %v685 = vsel %vm613, %v630, 0.0
        %v686 = vsel %vm614, %v634, 0.0
        %v687 = vsel %vm615, %v630, 0.0
        %v688 = vsel %vm616, %v634, 0.0
        %v689 = vsel %vm617, %v630, 0.0
        %v690 = vsel %vm618, %v634, 0.0
        %v691 = vsel %vm619, %v630, 0.0
        %v692 = vsel %vm620, %v634, 0.0
        %v693 = vsel %vm621, %v630, 0.0
        %v694 = vsel %vm622, %v634, 0.0
        %v695 = vsel %vm623, %v630, 0.0
        %v696 = vsel %vm624, %v634, 0.0
        %v697 = vsel %vm625, %v630, 0.0
        %v698 = vsel %vm626, %v634, 0.0
        %v699 = vadd.f32 %v477, %v635
        %v700 = vadd.f32 %v478, %v636
        %v701 = vadd.f32 %v479, %v637
        %v702 = vadd.f32 %v480, %v638
        %v703 = vadd.f32 %v481, %v639
        %v704 = vadd.f32 %v482, %v640
        %v705 = vadd.f32 %v483, %v641
        %v706 = vadd.f32 %v484, %v642
        %v707 = vadd.f32 %v485, %v643
        %v708 = vadd.f32 %v486, %v644
        %v709 = vadd.f32 %v487, %v645
        %v710 = vadd.f32 %v488, %v646
        %v711 = vadd.f32 %v489, %v647
        %v712 = vadd.f32 %v490, %v648
        %v713 = vadd.f32 %v491, %v649
        %v714 = vadd.f32 %v492, %v650
        %v715 = vadd.f32 %v493, %v651
        %v716 = vadd.f32 %v494, %v652
        %v717 = vadd.f32 %v495, %v653
        %v718 = vadd.f32 %v496, %v654
        %v719 = vadd.f32 %v497, %v655
        %v720 = vadd.f32 %v498, %v656
        %v721 = vadd.f32 %v499, %v657
        %v722 = vadd.f32 %v500, %v658
        %v723 = vadd.f32 %v501, %v659
        %v724 = vadd.f32 %v502, %v660
        %v725 = vadd.f32 %v503, %v661
        %v726 = vadd.f32 %v504, %v662
        %v727 = vadd.f32 %v505, %v663
        %v728 = vadd.f32 %v506, %v664
        %v729 = vadd.f32 %v507, %v665
        %v730 = vadd.f32 %v508, %v666
        %v731 = vadd.f32 %v509, %v667
        %v732 = vadd.f32 %v510, %v668
        %v733 = vadd.f32 %v511, %v669
        %v734 = vadd.f32 %v512, %v670
        %v735 = vadd.f32 %v513, %v671
        %v736 = vadd.f32 %v514, %v672
        %v737 = vadd.f32 %v515, %v673
        %v738 = vadd.f32 %v516, %v674
        %v739 = vadd.f32 %v517, %v675
        %v740 = vadd.f32 %v518, %v676
        %v741 = vadd.f32 %v519, %v677
        %v742 = vadd.f32 %v520, %v678
        %v743 = vadd.f32 %v521, %v679
        %v744 = vadd.f32 %v522, %v680
        %v745 = vadd.f32 %v523, %v681
        %v746 = vadd.f32 %v524, %v682
        %v747 = vadd.f32 %v525, %v683
        %v748 = vadd.f32 %v526, %v684
        %v749 = vadd.f32 %v527, %v685
        %v750 = vadd.f32 %v528, %v686
        %v751 = vadd.f32 %v529, %v687
        %v752 = vadd.f32 %v530, %v688
        %v753 = vadd.f32 %v531, %v689
        %v754 = vadd.f32 %v532, %v690
        %v755 = vadd.f32 %v533, %v691
        %v756 = vadd.f32 %v534, %v692
        %v757 = vadd.f32 %v535, %v693
        %v758 = vadd.f32 %v536, %v694
        %v759 = vadd.f32 %v537, %v695
        %v760 = vadd.f32 %v538, %v696
        %v761 = vadd.f32 %v539, %v697
        %v762 = vadd.f32 %v540, %v698
        %vm763 = vcmp.ge.s32.totalorder %v371, 0
        %vm764 = vcmp.ge.s32.totalorder %v372, 0
        %vm765 = vmand %vm381, %vm763
        %vm766 = vmand %vm382, %vm764
        %vm767 = vcmp.lt.s32.totalorder %v371, 16
        %vm768 = vcmp.lt.s32.totalorder %v372, 16
        %vm769 = vmand %vm765, %vm767
        %vm770 = vmand %vm766, %vm768
        %v771 = vsel %vm769, %v373, 0.0
        %v772 = vsel %vm770, %v374, 0.0
        %v773 = vmul.u32 %v371, 16
        %v774 = vmul.u32 %v372, 16
        %v775 = vadd.s32 %v773, %v328
        %v776 = vadd.s32 %v774, %v329
        %v777 = vlaneseq
        %v778 = vshrl.u32 %v777, 7
        %v779 = vsub.s32 0, %v778
        %v780 = vrot.slane %v775, %v779
        %v781 = vlaneseq
        %v782 = vshrl.u32 %v781, 7
        %v783 = vsub.s32 0, %v782
        %v784 = vrot.slane %v776, %v783
        %vm785 = vcmp.eq.s32.totalorder %v333, %v780
        %vm786 = vcmp.eq.s32.totalorder %v333, %v784
        %vm787 = vcmp.eq.s32.totalorder %v334, %v780
        %vm788 = vcmp.eq.s32.totalorder %v334, %v784
        %vm789 = vcmp.eq.s32.totalorder %v335, %v780
        %vm790 = vcmp.eq.s32.totalorder %v335, %v784
        %vm791 = vcmp.eq.s32.totalorder %v336, %v780
        %vm792 = vcmp.eq.s32.totalorder %v336, %v784
        %vm793 = vcmp.eq.s32.totalorder %v337, %v780
        %vm794 = vcmp.eq.s32.totalorder %v337, %v784
        %vm795 = vcmp.eq.s32.totalorder %v338, %v780
        %vm796 = vcmp.eq.s32.totalorder %v338, %v784
        %vm797 = vcmp.eq.s32.totalorder %v339, %v780
        %vm798 = vcmp.eq.s32.totalorder %v339, %v784
        %vm799 = vcmp.eq.s32.totalorder %v340, %v780
        %vm800 = vcmp.eq.s32.totalorder %v340, %v784
        %vm801 = vcmp.eq.s32.totalorder %v341, %v780
        %vm802 = vcmp.eq.s32.totalorder %v341, %v784
        %vm803 = vcmp.eq.s32.totalorder %v342, %v780
        %vm804 = vcmp.eq.s32.totalorder %v342, %v784
        %vm805 = vcmp.eq.s32.totalorder %v343, %v780
        %vm806 = vcmp.eq.s32.totalorder %v343, %v784
        %vm807 = vcmp.eq.s32.totalorder %v344, %v780
        %vm808 = vcmp.eq.s32.totalorder %v344, %v784
        %vm809 = vcmp.eq.s32.totalorder %v345, %v780
        %vm810 = vcmp.eq.s32.totalorder %v345, %v784
        %vm811 = vcmp.eq.s32.totalorder %v346, %v780
        %vm812 = vcmp.eq.s32.totalorder %v346, %v784
        %vm813 = vcmp.eq.s32.totalorder %v347, %v780
        %vm814 = vcmp.eq.s32.totalorder %v347, %v784
        %vm815 = vcmp.eq.s32.totalorder %v348, %v780
        %vm816 = vcmp.eq.s32.totalorder %v348, %v784
        %vm817 = vcmp.eq.s32.totalorder %v349, %v780
        %vm818 = vcmp.eq.s32.totalorder %v349, %v784
        %vm819 = vcmp.eq.s32.totalorder %v350, %v780
        %vm820 = vcmp.eq.s32.totalorder %v350, %v784
        %vm821 = vcmp.eq.s32.totalorder %v351, %v780
        %vm822 = vcmp.eq.s32.totalorder %v351, %v784
        %vm823 = vcmp.eq.s32.totalorder %v352, %v780
        %vm824 = vcmp.eq.s32.totalorder %v352, %v784
        %vm825 = vcmp.eq.s32.totalorder %v353, %v780
        %vm826 = vcmp.eq.s32.totalorder %v353, %v784
        %vm827 = vcmp.eq.s32.totalorder %v354, %v780
        %vm828 = vcmp.eq.s32.totalorder %v354, %v784
        %vm829 = vcmp.eq.s32.totalorder %v355, %v780
        %vm830 = vcmp.eq.s32.totalorder %v355, %v784
        %vm831 = vcmp.eq.s32.totalorder %v356, %v780
        %vm832 = vcmp.eq.s32.totalorder %v356, %v784
        %vm833 = vcmp.eq.s32.totalorder %v357, %v780
        %vm834 = vcmp.eq.s32.totalorder %v357, %v784
        %vm835 = vcmp.eq.s32.totalorder %v358, %v780
        %vm836 = vcmp.eq.s32.totalorder %v358, %v784
        %vm837 = vcmp.eq.s32.totalorder %v359, %v780
        %vm838 = vcmp.eq.s32.totalorder %v359, %v784
        %vm839 = vcmp.eq.s32.totalorder %v360, %v780
        %vm840 = vcmp.eq.s32.totalorder %v360, %v784
        %vm841 = vcmp.eq.s32.totalorder %v361, %v780
        %vm842 = vcmp.eq.s32.totalorder %v361, %v784
        %vm843 = vcmp.eq.s32.totalorder %v362, %v780
        %vm844 = vcmp.eq.s32.totalorder %v362, %v784
        %vm845 = vcmp.eq.s32.totalorder %v363, %v780
        %vm846 = vcmp.eq.s32.totalorder %v363, %v784
        %vm847 = vcmp.eq.s32.totalorder %v364, %v780
        %vm848 = vcmp.eq.s32.totalorder %v364, %v784
        %v849 = vlaneseq
        %v850 = vshrl.u32 %v849, 7
        %v851 = vsub.s32 0, %v850
        %v852 = vrot.slane %v771, %v851
        %v853 = vlaneseq
        %v854 = vshrl.u32 %v853, 7
        %v855 = vsub.s32 0, %v854
        %v856 = vrot.slane %v772, %v855
        %v857 = vsel %vm785, %v852, 0.0
        %v858 = vsel %vm786, %v856, 0.0
        %v859 = vsel %vm787, %v852, 0.0
        %v860 = vsel %vm788, %v856, 0.0
        %v861 = vsel %vm789, %v852, 0.0
        %v862 = vsel %vm790, %v856, 0.0
        %v863 = vsel %vm791, %v852, 0.0
        %v864 = vsel %vm792, %v856, 0.0
        %v865 = vsel %vm793, %v852, 0.0
        %v866 = vsel %vm794, %v856, 0.0
        %v867 = vsel %vm795, %v852, 0.0
        %v868 = vsel %vm796, %v856, 0.0
        %v869 = vsel %vm797, %v852, 0.0
        %v870 = vsel %vm798, %v856, 0.0
        %v871 = vsel %vm799, %v852, 0.0
        %v872 = vsel %vm800, %v856, 0.0
        %v873 = vsel %vm801, %v852, 0.0
        %v874 = vsel %vm802, %v856, 0.0
        %v875 = vsel %vm803, %v852, 0.0
        %v876 = vsel %vm804, %v856, 0.0
        %v877 = vsel %vm805, %v852, 0.0
        %v878 = vsel %vm806, %v856, 0.0
        %v879 = vsel %vm807, %v852, 0.0
        %v880 = vsel %vm808, %v856, 0.0
        %v881 = vsel %vm809, %v852, 0.0
        %v882 = vsel %vm810, %v856, 0.0
        %v883 = vsel %vm811, %v852, 0.0
        %v884 = vsel %vm812, %v856, 0.0
        %v885 = vsel %vm813, %v852, 0.0
        %v886 = vsel %vm814, %v856, 0.0
        %v887 = vsel %vm815, %v852, 0.0
        %v888 = vsel %vm816, %v856, 0.0
        %v889 = vsel %vm817, %v852, 0.0
        %v890 = vsel %vm818, %v856, 0.0
        %v891 = vsel %vm819, %v852, 0.0
        %v892 = vsel %vm820, %v856, 0.0
        %v893 = vsel %vm821, %v852, 0.0
        %v894 = vsel %vm822, %v856, 0.0
        %v895 = vsel %vm823, %v852, 0.0
        %v896 = vsel %vm824, %v856, 0.0
        %v897 = vsel %vm825, %v852, 0.0
        %v898 = vsel %vm826, %v856, 0.0
        %v899 = vsel %vm827, %v852, 0.0
        %v900 = vsel %vm828, %v856, 0.0
        %v901 = vsel %vm829, %v852, 0.0
        %v902 = vsel %vm830, %v856, 0.0
        %v903 = vsel %vm831, %v852, 0.0
        %v904 = vsel %vm832, %v856, 0.0
        %v905 = vsel %vm833, %v852, 0.0
        %v906 = vsel %vm834, %v856, 0.0
        %v907 = vsel %vm835, %v852, 0.0
        %v908 = vsel %vm836, %v856, 0.0
        %v909 = vsel %vm837, %v852, 0.0
        %v910 = vsel %vm838, %v856, 0.0
        %v911 = vsel %vm839, %v852, 0.0
        %v912 = vsel %vm840, %v856, 0.0
        %v913 = vsel %vm841, %v852, 0.0
        %v914 = vsel %vm842, %v856, 0.0
        %v915 = vsel %vm843, %v852, 0.0
        %v916 = vsel %vm844, %v856, 0.0
        %v917 = vsel %vm845, %v852, 0.0
        %v918 = vsel %vm846, %v856, 0.0
        %v919 = vsel %vm847, %v852, 0.0
        %v920 = vsel %vm848, %v856, 0.0
        %v921 = vadd.f32 %v699, %v857
        %v922 = vadd.f32 %v700, %v858
        %v923 = vadd.f32 %v701, %v859
        %v924 = vadd.f32 %v702, %v860
        %v925 = vadd.f32 %v703, %v861
        %v926 = vadd.f32 %v704, %v862
        %v927 = vadd.f32 %v705, %v863
        %v928 = vadd.f32 %v706, %v864
        %v929 = vadd.f32 %v707, %v865
        %v930 = vadd.f32 %v708, %v866
        %v931 = vadd.f32 %v709, %v867
        %v932 = vadd.f32 %v710, %v868
        %v933 = vadd.f32 %v711, %v869
        %v934 = vadd.f32 %v712, %v870
        %v935 = vadd.f32 %v713, %v871
        %v936 = vadd.f32 %v714, %v872
        %v937 = vadd.f32 %v715, %v873
        %v938 = vadd.f32 %v716, %v874
        %v939 = vadd.f32 %v717, %v875
        %v940 = vadd.f32 %v718, %v876
        %v941 = vadd.f32 %v719, %v877
        %v942 = vadd.f32 %v720, %v878
        %v943 = vadd.f32 %v721, %v879
        %v944 = vadd.f32 %v722, %v880
        %v945 = vadd.f32 %v723, %v881
        %v946 = vadd.f32 %v724, %v882
        %v947 = vadd.f32 %v725, %v883
        %v948 = vadd.f32 %v726, %v884
        %v949 = vadd.f32 %v727, %v885
        %v950 = vadd.f32 %v728, %v886
        %v951 = vadd.f32 %v729, %v887
        %v952 = vadd.f32 %v730, %v888
        %v953 = vadd.f32 %v731, %v889
        %v954 = vadd.f32 %v732, %v890
        %v955 = vadd.f32 %v733, %v891
        %v956 = vadd.f32 %v734, %v892
        %v957 = vadd.f32 %v735, %v893
        %v958 = vadd.f32 %v736, %v894
        %v959 = vadd.f32 %v737, %v895
        %v960 = vadd.f32 %v738, %v896
        %v961 = vadd.f32 %v739, %v897
        %v962 = vadd.f32 %v740, %v898
        %v963 = vadd.f32 %v741, %v899
        %v964 = vadd.f32 %v742, %v900
        %v965 = vadd.f32 %v743, %v901
        %v966 = vadd.f32 %v744, %v902
        %v967 = vadd.f32 %v745, %v903
        %v968 = vadd.f32 %v746, %v904
        %v969 = vadd.f32 %v747, %v905
        %v970 = vadd.f32 %v748, %v906
        %v971 = vadd.f32 %v749, %v907
        %v972 = vadd.f32 %v750, %v908
        %v973 = vadd.f32 %v751, %v909
        %v974 = vadd.f32 %v752, %v910
        %v975 = vadd.f32 %v753, %v911
        %v976 = vadd.f32 %v754, %v912
        %v977 = vadd.f32 %v755, %v913
        %v978 = vadd.f32 %v756, %v914
        %v979 = vadd.f32 %v757, %v915
        %v980 = vadd.f32 %v758, %v916
        %v981 = vadd.f32 %v759, %v917
        %v982 = vadd.f32 %v760, %v918
        %v983 = vadd.f32 %v761, %v919
        %v984 = vadd.f32 %v762, %v920
        %vm985 = vmand %vm545, %vm763
        %vm986 = vmand %vm546, %vm764
        %vm987 = vmand %vm985, %vm767
        %vm988 = vmand %vm986, %vm768
        %v989 = vsel %vm987, %v375, 0.0
        %v990 = vsel %vm988, %v376, 0.0
        %v991 = vadd.s32 %v773, %v367
        %v992 = vadd.s32 %v774, %v368
        %v993 = vlaneseq
        %v994 = vshrl.u32 %v993, 7
        %v995 = vsub.s32 0, %v994
        %v996 = vrot.slane %v991, %v995
        %v997 = vlaneseq
        %v998 = vshrl.u32 %v997, 7
        %v999 = vsub.s32 0, %v998
        %v1000 = vrot.slane %v992, %v999
        %vm1001 = vcmp.eq.s32.totalorder %v333, %v996
        %vm1002 = vcmp.eq.s32.totalorder %v333, %v1000
        %vm1003 = vcmp.eq.s32.totalorder %v334, %v996
        %vm1004 = vcmp.eq.s32.totalorder %v334, %v1000
        %vm1005 = vcmp.eq.s32.totalorder %v335, %v996
        %vm1006 = vcmp.eq.s32.totalorder %v335, %v1000
        %vm1007 = vcmp.eq.s32.totalorder %v336, %v996
        %vm1008 = vcmp.eq.s32.totalorder %v336, %v1000
        %vm1009 = vcmp.eq.s32.totalorder %v337, %v996
        %vm1010 = vcmp.eq.s32.totalorder %v337, %v1000
        %vm1011 = vcmp.eq.s32.totalorder %v338, %v996
        %vm1012 = vcmp.eq.s32.totalorder %v338, %v1000
        %vm1013 = vcmp.eq.s32.totalorder %v339, %v996
        %vm1014 = vcmp.eq.s32.totalorder %v339, %v1000
        %vm1015 = vcmp.eq.s32.totalorder %v340, %v996
        %vm1016 = vcmp.eq.s32.totalorder %v340, %v1000
        %vm1017 = vcmp.eq.s32.totalorder %v341, %v996
        %vm1018 = vcmp.eq.s32.totalorder %v341, %v1000
        %vm1019 = vcmp.eq.s32.totalorder %v342, %v996
        %vm1020 = vcmp.eq.s32.totalorder %v342, %v1000
        %vm1021 = vcmp.eq.s32.totalorder %v343, %v996
        %vm1022 = vcmp.eq.s32.totalorder %v343, %v1000
        %vm1023 = vcmp.eq.s32.totalorder %v344, %v996
        %vm1024 = vcmp.eq.s32.totalorder %v344, %v1000
        %vm1025 = vcmp.eq.s32.totalorder %v345, %v996
        %vm1026 = vcmp.eq.s32.totalorder %v345, %v1000
        %vm1027 = vcmp.eq.s32.totalorder %v346, %v996
        %vm1028 = vcmp.eq.s32.totalorder %v346, %v1000
        %vm1029 = vcmp.eq.s32.totalorder %v347, %v996
        %vm1030 = vcmp.eq.s32.totalorder %v347, %v1000
        %vm1031 = vcmp.eq.s32.totalorder %v348, %v996
        %vm1032 = vcmp.eq.s32.totalorder %v348, %v1000
        %vm1033 = vcmp.eq.s32.totalorder %v349, %v996
        %vm1034 = vcmp.eq.s32.totalorder %v349, %v1000
        %vm1035 = vcmp.eq.s32.totalorder %v350, %v996
        %vm1036 = vcmp.eq.s32.totalorder %v350, %v1000
        %vm1037 = vcmp.eq.s32.totalorder %v351, %v996
        %vm1038 = vcmp.eq.s32.totalorder %v351, %v1000
        %vm1039 = vcmp.eq.s32.totalorder %v352, %v996
        %vm1040 = vcmp.eq.s32.totalorder %v352, %v1000
        %vm1041 = vcmp.eq.s32.totalorder %v353, %v996
        %vm1042 = vcmp.eq.s32.totalorder %v353, %v1000
        %vm1043 = vcmp.eq.s32.totalorder %v354, %v996
        %vm1044 = vcmp.eq.s32.totalorder %v354, %v1000
        %vm1045 = vcmp.eq.s32.totalorder %v355, %v996
        %vm1046 = vcmp.eq.s32.totalorder %v355, %v1000
        %vm1047 = vcmp.eq.s32.totalorder %v356, %v996
        %vm1048 = vcmp.eq.s32.totalorder %v356, %v1000
        %vm1049 = vcmp.eq.s32.totalorder %v357, %v996
        %vm1050 = vcmp.eq.s32.totalorder %v357, %v1000
        %vm1051 = vcmp.eq.s32.totalorder %v358, %v996
        %vm1052 = vcmp.eq.s32.totalorder %v358, %v1000
        %vm1053 = vcmp.eq.s32.totalorder %v359, %v996
        %vm1054 = vcmp.eq.s32.totalorder %v359, %v1000
        %vm1055 = vcmp.eq.s32.totalorder %v360, %v996
        %vm1056 = vcmp.eq.s32.totalorder %v360, %v1000
        %vm1057 = vcmp.eq.s32.totalorder %v361, %v996
        %vm1058 = vcmp.eq.s32.totalorder %v361, %v1000
        %vm1059 = vcmp.eq.s32.totalorder %v362, %v996
        %vm1060 = vcmp.eq.s32.totalorder %v362, %v1000
        %vm1061 = vcmp.eq.s32.totalorder %v363, %v996
        %vm1062 = vcmp.eq.s32.totalorder %v363, %v1000
        %vm1063 = vcmp.eq.s32.totalorder %v364, %v996
        %vm1064 = vcmp.eq.s32.totalorder %v364, %v1000
        %v1065 = vlaneseq
        %v1066 = vshrl.u32 %v1065, 7
        %v1067 = vsub.s32 0, %v1066
        %v1068 = vrot.slane %v989, %v1067
        %v1069 = vlaneseq
        %v1070 = vshrl.u32 %v1069, 7
        %v1071 = vsub.s32 0, %v1070
        %v1072 = vrot.slane %v990, %v1071
        %v1073 = vsel %vm1001, %v1068, 0.0
        %v1074 = vsel %vm1002, %v1072, 0.0
        %v1075 = vsel %vm1003, %v1068, 0.0
        %v1076 = vsel %vm1004, %v1072, 0.0
        %v1077 = vsel %vm1005, %v1068, 0.0
        %v1078 = vsel %vm1006, %v1072, 0.0
        %v1079 = vsel %vm1007, %v1068, 0.0
        %v1080 = vsel %vm1008, %v1072, 0.0
        %v1081 = vsel %vm1009, %v1068, 0.0
        %v1082 = vsel %vm1010, %v1072, 0.0
        %v1083 = vsel %vm1011, %v1068, 0.0
        %v1084 = vsel %vm1012, %v1072, 0.0
        %v1085 = vsel %vm1013, %v1068, 0.0
        %v1086 = vsel %vm1014, %v1072, 0.0
        %v1087 = vsel %vm1015, %v1068, 0.0
        %v1088 = vsel %vm1016, %v1072, 0.0
        %v1089 = vsel %vm1017, %v1068, 0.0
        %v1090 = vsel %vm1018, %v1072, 0.0
        %v1091 = vsel %vm1019, %v1068, 0.0
        %v1092 = vsel %vm1020, %v1072, 0.0
        %v1093 = vsel %vm1021, %v1068, 0.0
        %v1094 = vsel %vm1022, %v1072, 0.0
        %v1095 = vsel %vm1023, %v1068, 0.0
        %v1096 = vsel %vm1024, %v1072, 0.0
        %v1097 = vsel %vm1025, %v1068, 0.0
        %v1098 = vsel %vm1026, %v1072, 0.0
        %v1099 = vsel %vm1027, %v1068, 0.0
        %v1100 = vsel %vm1028, %v1072, 0.0
        %v1101 = vsel %vm1029, %v1068, 0.0
        %v1102 = vsel %vm1030, %v1072, 0.0
        %v1103 = vsel %vm1031, %v1068, 0.0
        %v1104 = vsel %vm1032, %v1072, 0.0
        %v1105 = vsel %vm1033, %v1068, 0.0
        %v1106 = vsel %vm1034, %v1072, 0.0
        %v1107 = vsel %vm1035, %v1068, 0.0
        %v1108 = vsel %vm1036, %v1072, 0.0
        %v1109 = vsel %vm1037, %v1068, 0.0
        %v1110 = vsel %vm1038, %v1072, 0.0
        %v1111 = vsel %vm1039, %v1068, 0.0
        %v1112 = vsel %vm1040, %v1072, 0.0
        %v1113 = vsel %vm1041, %v1068, 0.0
        %v1114 = vsel %vm1042, %v1072, 0.0
        %v1115 = vsel %vm1043, %v1068, 0.0
        %v1116 = vsel %vm1044, %v1072, 0.0
        %v1117 = vsel %vm1045, %v1068, 0.0
        %v1118 = vsel %vm1046, %v1072, 0.0
        %v1119 = vsel %vm1047, %v1068, 0.0
        %v1120 = vsel %vm1048, %v1072, 0.0
        %v1121 = vsel %vm1049, %v1068, 0.0
        %v1122 = vsel %vm1050, %v1072, 0.0
        %v1123 = vsel %vm1051, %v1068, 0.0
        %v1124 = vsel %vm1052, %v1072, 0.0
        %v1125 = vsel %vm1053, %v1068, 0.0
        %v1126 = vsel %vm1054, %v1072, 0.0
        %v1127 = vsel %vm1055, %v1068, 0.0
        %v1128 = vsel %vm1056, %v1072, 0.0
        %v1129 = vsel %vm1057, %v1068, 0.0
        %v1130 = vsel %vm1058, %v1072, 0.0
        %v1131 = vsel %vm1059, %v1068, 0.0
        %v1132 = vsel %vm1060, %v1072, 0.0
        %v1133 = vsel %vm1061, %v1068, 0.0
        %v1134 = vsel %vm1062, %v1072, 0.0
        %v1135 = vsel %vm1063, %v1068, 0.0
        %v1136 = vsel %vm1064, %v1072, 0.0
        %v1137 = vadd.f32 %v921, %v1073
        %v1138 = vadd.f32 %v922, %v1074
        %v1139 = vadd.f32 %v923, %v1075
        %v1140 = vadd.f32 %v924, %v1076
        %v1141 = vadd.f32 %v925, %v1077
        %v1142 = vadd.f32 %v926, %v1078
        %v1143 = vadd.f32 %v927, %v1079
        %v1144 = vadd.f32 %v928, %v1080
        %v1145 = vadd.f32 %v929, %v1081
        %v1146 = vadd.f32 %v930, %v1082
        %v1147 = vadd.f32 %v931, %v1083
        %v1148 = vadd.f32 %v932, %v1084
        %v1149 = vadd.f32 %v933, %v1085
        %v1150 = vadd.f32 %v934, %v1086
        %v1151 = vadd.f32 %v935, %v1087
        %v1152 = vadd.f32 %v936, %v1088
        %v1153 = vadd.f32 %v937, %v1089
        %v1154 = vadd.f32 %v938, %v1090
        %v1155 = vadd.f32 %v939, %v1091
        %v1156 = vadd.f32 %v940, %v1092
        %v1157 = vadd.f32 %v941, %v1093
        %v1158 = vadd.f32 %v942, %v1094
        %v1159 = vadd.f32 %v943, %v1095
        %v1160 = vadd.f32 %v944, %v1096
        %v1161 = vadd.f32 %v945, %v1097
        %v1162 = vadd.f32 %v946, %v1098
        %v1163 = vadd.f32 %v947, %v1099
        %v1164 = vadd.f32 %v948, %v1100
        %v1165 = vadd.f32 %v949, %v1101
        %v1166 = vadd.f32 %v950, %v1102
        %v1167 = vadd.f32 %v951, %v1103
        %v1168 = vadd.f32 %v952, %v1104
        %v1169 = vadd.f32 %v953, %v1105
        %v1170 = vadd.f32 %v954, %v1106
        %v1171 = vadd.f32 %v955, %v1107
        %v1172 = vadd.f32 %v956, %v1108
        %v1173 = vadd.f32 %v957, %v1109
        %v1174 = vadd.f32 %v958, %v1110
        %v1175 = vadd.f32 %v959, %v1111
        %v1176 = vadd.f32 %v960, %v1112
        %v1177 = vadd.f32 %v961, %v1113
        %v1178 = vadd.f32 %v962, %v1114
        %v1179 = vadd.f32 %v963, %v1115
        %v1180 = vadd.f32 %v964, %v1116
        %v1181 = vadd.f32 %v965, %v1117
        %v1182 = vadd.f32 %v966, %v1118
        %v1183 = vadd.f32 %v967, %v1119
        %v1184 = vadd.f32 %v968, %v1120
        %v1185 = vadd.f32 %v969, %v1121
        %v1186 = vadd.f32 %v970, %v1122
        %v1187 = vadd.f32 %v971, %v1123
        %v1188 = vadd.f32 %v972, %v1124
        %v1189 = vadd.f32 %v973, %v1125
        %v1190 = vadd.f32 %v974, %v1126
        %v1191 = vadd.f32 %v975, %v1127
        %v1192 = vadd.f32 %v976, %v1128
        %v1193 = vadd.f32 %v977, %v1129
        %v1194 = vadd.f32 %v978, %v1130
        %v1195 = vadd.f32 %v979, %v1131
        %v1196 = vadd.f32 %v980, %v1132
        %v1197 = vadd.f32 %v981, %v1133
        %v1198 = vadd.f32 %v982, %v1134
        %v1199 = vadd.f32 %v983, %v1135
        %v1200 = vadd.f32 %v984, %v1136
        %v1201 = vld [vmem:[%s181] sm:$0xff]
        %v1202 = vld [vmem:[%s181 + $0x8] sm:$0xff]
        %1203 = vmatprep.subr.mxu0 %v1138
        %1204 = vmatpush1.msra.mxu0 %v1137
        %1205 = vmatprep.subr.mxu0 %v1140
        %1206 = vmatpush1.msra.mxu0 %v1139
        %1207 = vmatprep.subr.mxu0 %v1142
        %1208 = vmatpush1.msra.mxu0 %v1141
        %1209 = vmatprep.subr.mxu0 %v1144
        %1210 = vmatpush1.msra.mxu0 %v1143
        %1211 = vmatprep.subr.mxu0 %v1146
        %1212 = vmatpush1.msra.mxu0 %v1145
        %1213 = vmatprep.subr.mxu0 %v1148
        %1214 = vmatpush1.msra.mxu0 %v1147
        %1215 = vmatprep.subr.mxu0 %v1150
        %1216 = vmatpush1.msra.mxu0 %v1149
        %1217 = vmatprep.subr.mxu0 %v1152
        %1218 = vmatpush1.msra.mxu0 %v1151
        %1219 = vmatprep.subr.mxu0 %v1154
        %1220 = vmatpush1.msra.mxu0 %v1153
        %1221 = vmatprep.subr.mxu0 %v1156
        %1222 = vmatpush1.msra.mxu0 %v1155
        %1223 = vmatprep.subr.mxu0 %v1158
        %1224 = vmatpush1.msra.mxu0 %v1157
        %1225 = vmatprep.subr.mxu0 %v1160
        %1226 = vmatpush1.msra.mxu0 %v1159
        %1227 = vmatprep.subr.mxu0 %v1162
        %1228 = vmatpush1.msra.mxu0 %v1161
        %1229 = vmatprep.subr.mxu0 %v1164
        %1230 = vmatpush1.msra.mxu0 %v1163
        %1231 = vmatprep.subr.mxu0 %v1166
        %1232 = vmatpush1.msra.mxu0 %v1165
        %1233 = vmatprep.subr.mxu0 %v1168
        %1234 = vmatpush1.msra.mxu0 %v1167
        %1235 = vmatprep.subr.mxu0 %v1170
        %1236 = vmatpush1.msra.mxu0 %v1169
        %1237 = vmatprep.subr.mxu0 %v1172
        %1238 = vmatpush1.msra.mxu0 %v1171
        %1239 = vmatprep.subr.mxu0 %v1174
        %1240 = vmatpush1.msra.mxu0 %v1173
        %1241 = vmatprep.subr.mxu0 %v1176
        %1242 = vmatpush1.msra.mxu0 %v1175
        %1243 = vmatprep.subr.mxu0 %v1178
        %1244 = vmatpush1.msra.mxu0 %v1177
        %1245 = vmatprep.subr.mxu0 %v1180
        %1246 = vmatpush1.msra.mxu0 %v1179
        %1247 = vmatprep.subr.mxu0 %v1182
        %1248 = vmatpush1.msra.mxu0 %v1181
        %1249 = vmatprep.subr.mxu0 %v1184
        %1250 = vmatpush1.msra.mxu0 %v1183
        %1251 = vmatprep.subr.mxu0 %v1186
        %1252 = vmatpush1.msra.mxu0 %v1185
        %1253 = vmatprep.subr.mxu0 %v1188
        %1254 = vmatpush1.msra.mxu0 %v1187
        %1255 = vmatprep.subr.mxu0 %v1190
        %1256 = vmatpush1.msra.mxu0 %v1189
        %1257 = vmatprep.subr.mxu0 %v1192
        %1258 = vmatpush1.msra.mxu0 %v1191
        %1259 = vmatprep.subr.mxu0 %v1194
        %1260 = vmatpush1.msra.mxu0 %v1193
        %1261 = vmatprep.subr.mxu0 %v1196
        %1262 = vmatpush1.msra.mxu0 %v1195
        %1263 = vmatprep.subr.mxu0 %v1198
        %1264 = vmatpush1.msra.mxu0 %v1197
        %1265 = vmatprep.subr.mxu0 %v1200
        %1266 = vmatpush1.msra.mxu0 %v1199
        %1267 = vmatprep.mubr.f32.mxu0 %v1202
        %1268 = vmatmul.mubr.f32.gmra.mrb[0].mxu0 %v1201
        %v1269 = vpop.f32.mrb[0].mxu0
        %v1270 = vadd.f32 0.0, %v1269
        %v1271 = vpop.f32.mrb[0].mxu0
        %v1272 = vadd.f32 0.0, %v1271
        %1273 = vdwg.mxu0
        %1274 = vst [vmem:[%s215] sm:$0xff] %v1270
        %1275 = vst [vmem:[%s215 + $0x8] sm:$0xff] %v1272
        %s1276 = sand.u32 %s98, 1
        %s1277 = scalar_lea.sflag [#allocation4], %s1276
        %s1278 = sand.u32 %s98, 1
        %s1279 = smul.addr %s1278, 16
        %s1280 = scalar_lea.vmem [#allocation7], %s1279
        // Predicated region
        $region37: #{align_module_full_forward.3} parent=27 // pred_check
          %p1281 = pneg %p108
        $region38: #{align_module_full_forward.3} parent=27 // pred_check_branch
          %1283 = sbr.rel (%p1281) target = $region40
        $region39: #{align_module_full_forward.3} parent=27 // pred_region
          %s1284 = smul.u32 2, %s27
          %s1286 = ssub.s32 256, 256
          %1287 = vsyncadd %s1277, %s1286
          %s1288 = smul.addr %s26, 2
          %s1289 = sadd.s32 %s1284, %s1288
          %s1290 = smul.addr %s1289, 128
          %s1291 = scalar_lea.hbm %s2, %s1290
          %s1293 = sshll.u32 %s1280, 4
          %s1294 = int_to_ptr.vmem [resolvable:$true] %s1293
          %1296 = dma.vmem_to_hbm [thread:$0]  %s1294, 256, %s1291, %s1277
        $region40: #{align_module_full_forward.3} parent=27 // pred_fallthru
          _
      $region28: #{align_module_full_forward.3} parent=5 // pred_fallthru
        _
      %p1297 = scmp.le.s32.totalorder 2, %s17
      // Predicated region
      $region41: #{align_module_full_forward.3} parent=5 // pred_check
        %p1298 = pneg %p1297
      $region42: #{align_module_full_forward.3} parent=5 // pred_check_branch
        %1300 = sbr.rel (%p1298) target = $region44
      $region43: #{align_module_full_forward.3} parent=5 // pred_region
        %s1301 = ssub.s32 %s17, 2
        // Predicated region
        $region45: #{align_module_full_forward.3} parent=43 // pred_check
          %p1302 = pneg %p114
        $region46: #{align_module_full_forward.3} parent=43 // pred_check_branch
          %1304 = sbr.rel (%p1302) target = $region48
        $region47: #{align_module_full_forward.3} parent=43 // pred_region
          %s1305 = sand.u32 %s99, 1
          %s1306 = scalar_lea.sflag [#allocation4], %s1305
          %s1307 = sand.u32 %s99, 1
          %s1308 = smul.addr %s1307, 16
          %s1309 = scalar_lea.vmem [#allocation7], %s1308
          %1310 = dma.done %s1306, 256
        $region48: #{align_module_full_forward.3} parent=43 // pred_fallthru
          _
      $region44: #{align_module_full_forward.3} parent=5 // pred_fallthru
        _
    $region6: #{align_module_full_forward.3} parent=1 // loop_footer
      %s21 = sadd.s32 1, %s17
    $region7: #{align_module_full_forward.3} parent=1 // loop_footer_branch
      %16 = sbr.rel target = $region3
    $region8: #{align_module_full_forward.3} parent=1 // loop_exit
      _
    %1311 = vsyncpa [#allocation3], 1
    %s1312 = scalar_lea.sflag [#allocation3], 1
    %1313 = vsyncpa %s1312, 1
    %1314 = vsyncpa [#allocation6], 1
    %s1315 = scalar_lea.sflag [#allocation6], 1
    %1316 = vsyncpa %s1315, 1
    %1317 = vsyncpa [#allocation4], 1
    %s1318 = scalar_lea.sflag [#allocation4], 1
    %1319 = vsyncpa %s1318, 1

// kernel: align_module_full_forward.2
$region0: #{align_module_full_forward.2}
  #allocation0 [shape = 'u32[]', space=smem, size = 0x4, offset = 0x4, fixed_abs, tag = 'smem constant byte address 0x4 - core index']
  #allocation1 [shape = 'u32[144,128]{1,0:T(1,128)}', space=vmem, size = 0x12000, scoped, tag = 'internal scratch']
  #allocation2 [shape = 'f32[72,512]{1,0:T(8,128)}', space=vmem, size = 0x24000, scoped, tag = 'scratch operand']
  #allocation3 [shape = 'f32[36,512]{1,0:T(8,128)}', space=vmem, size = 0x14000, scoped, tag = 'scratch operand']
  %s0 = inlined_call_operand.hbm [shape: f32[8,512], index: 0, kind: input, shape index: {}]
  %s1 = inlined_call_operand.hbm [shape: f32[8,8], index: 1, kind: input, shape index: {}]
  %s2 = inlined_call_operand.hbm [shape: f32[4,72], index: 2, kind: input, shape index: {}]
  %s3 = inlined_call_operand.hbm [shape: f32[4,1], index: 3, kind: input, shape index: {}]
  %s4 = inlined_call_operand.hbm [shape: f32[4,1], index: 4, kind: input, shape index: {}]
  %s5 = inlined_call_operand.hbm [shape: f32[2,36], index: 5, kind: input, shape index: {}]
  %s6 = inlined_call_operand.hbm [shape: f32[2,2,256], index: 6, kind: output, shape index: {}]
  %s7 = sld [smem:[#allocation0]]
  $region58: #{align_module_full_forward.2} parent=0
    _
  %s9 = ssub.s32 1, %s7
  %s10 = scalar_select 0, %s9, %s7
  $region1: #{align_module_full_forward.2} parent=0
    #allocation4 [shape = 'u8[16384]{0}', space=vmem, size = 0x4000, scoped, tag = 'input window, operand 0, single buffered']
    #allocation5 [shape = 's32[1]{0}', space=sflag, size = 0x4, scoped, tag = 'scoped memory for align_module_full_forward.2']
    #allocation6 [shape = 's32[1]{0}', space=sflag, size = 0x4, scoped, tag = 'scoped memory for align_module_full_forward.2']
    #allocation7 [shape = 'u8[4096]{0}', space=vmem, size = 0x1000, scoped, tag = 'input window, operand 1, single buffered']
    #allocation8 [shape = 's32[1]{0}', space=sflag, size = 0x4, scoped, tag = 'scoped memory for align_module_full_forward.2']
    #allocation9 [shape = 'u8[2048]{0}', space=vmem, size = 0x800, scoped, tag = 'input window, operand 2, single buffered']
    #allocation10 [shape = 'u8[2048]{0}', space=vmem, size = 0x800, scoped, tag = 'input window, operand 3, single buffered']
    #allocation11 [shape = 's32[1]{0}', space=sflag, size = 0x4, scoped, tag = 'scoped memory for align_module_full_forward.2']
    #allocation12 [shape = 'u8[2048]{0}', space=vmem, size = 0x800, scoped, tag = 'input window, operand 4, single buffered']
    #allocation13 [shape = 'u8[1024]{0}', space=vmem, size = 0x400, scoped, tag = 'input window, operand 5, single buffered']
    #allocation14 [shape = 's32[1]{0}', space=sflag, size = 0x4, scoped, tag = 'scoped memory for align_module_full_forward.2']
    #allocation15 [shape = 'u8[4096]{0}', space=vmem, size = 0x1000, scoped, tag = 'output window, operand 0, single buffered']
    %11 = vsyncpa [#allocation5], 0
    %12 = vsyncpa [#allocation8], 0
    %13 = vsyncpa [#allocation11], 0
    %14 = vsyncpa [#allocation14], 0
    %15 = vsyncpa [#allocation6], 0
    // Predicated region
    $region2: #{align_module_full_forward.2} parent=1 // pred_check
      _
    $region3: #{align_module_full_forward.2} parent=1 // pred_check_branch
      %17 = sbr.rel (0) target = $region5
    $region4: #{align_module_full_forward.2} parent=1 // pred_region
      %s19 = ssub.s32 512, 512
      %20 = vsyncadd [#allocation5], %s19
      %s22 = sshll.u32 [#allocation4], 4
      %s23 = int_to_ptr.vmem [resolvable:$true] %s22
      %25 = dma.hbm_to_vmem [thread:$0]  %s0, 512, %s23, [#allocation5]
    $region5: #{align_module_full_forward.2} parent=1 // pred_fallthru
      _
    // Predicated region
    $region6: #{align_module_full_forward.2} parent=1 // pred_check
      _
    $region7: #{align_module_full_forward.2} parent=1 // pred_check_branch
      %27 = sbr.rel (0) target = $region9
    $region8: #{align_module_full_forward.2} parent=1 // pred_region
      %s29 = ssub.s32 128, 128
      %30 = vsyncadd [#allocation8], %s29
      %s32 = sshll.u32 [#allocation7], 4
      %s33 = int_to_ptr.vmem [resolvable:$true] %s32
      %35 = dma.hbm_to_vmem [thread:$0]  %s1, 128, %s33, [#allocation8]
    $region9: #{align_module_full_forward.2} parent=1 // pred_fallthru
      _
    // Predicated region
    $region10: #{align_module_full_forward.2} parent=1 // pred_check
      _
    $region11: #{align_module_full_forward.2} parent=1 // pred_check_branch
      %37 = sbr.rel (0) target = $region13
    $region12: #{align_module_full_forward.2} parent=1 // pred_region
      %s39 = ssub.s32 64, 64
      %40 = vsyncadd [#allocation8], %s39
      %s42 = sshll.u32 [#allocation9], 4
      %s43 = int_to_ptr.vmem [resolvable:$true] %s42
      %45 = dma.hbm_to_vmem [thread:$0]  %s2, 64, %s43, [#allocation8]
    $region13: #{align_module_full_forward.2} parent=1 // pred_fallthru
      _
    // Predicated region
    $region14: #{align_module_full_forward.2} parent=1 // pred_check
      _
    $region15: #{align_module_full_forward.2} parent=1 // pred_check_branch
      %47 = sbr.rel (0) target = $region17
    $region16: #{align_module_full_forward.2} parent=1 // pred_region
      %s49 = ssub.s32 64, 64
      %50 = vsyncadd [#allocation11], %s49
      %s52 = sshll.u32 [#allocation10], 4
      %s53 = int_to_ptr.vmem [resolvable:$true] %s52
      %55 = dma.hbm_to_vmem [thread:$0]  %s3, 64, %s53, [#allocation11]
    $region17: #{align_module_full_forward.2} parent=1 // pred_fallthru
      _
    // Predicated region
    $region18: #{align_module_full_forward.2} parent=1 // pred_check
      _
    $region19: #{align_module_full_forward.2} parent=1 // pred_check_branch
      %57 = sbr.rel (0) target = $region21
    $region20: #{align_module_full_forward.2} parent=1 // pred_region
      %s59 = ssub.s32 64, 64
      %60 = vsyncadd [#allocation11], %s59
      %s62 = sshll.u32 [#allocation12], 4
      %s63 = int_to_ptr.vmem [resolvable:$true] %s62
      %65 = dma.hbm_to_vmem [thread:$0]  %s4, 64, %s63, [#allocation11]
    $region21: #{align_module_full_forward.2} parent=1 // pred_fallthru
      _
    // Predicated region
    $region22: #{align_module_full_forward.2} parent=1 // pred_check
      _
    $region23: #{align_module_full_forward.2} parent=1 // pred_check_branch
      %67 = sbr.rel (0) target = $region25
    $region24: #{align_module_full_forward.2} parent=1 // pred_region
      %s69 = ssub.s32 32, 32
      %70 = vsyncadd [#allocation14], %s69
      %s72 = sshll.u32 [#allocation13], 4
      %s73 = int_to_ptr.vmem [resolvable:$true] %s72
      %75 = dma.hbm_to_vmem [thread:$0]  %s5, 32, %s73, [#allocation14]
    $region25: #{align_module_full_forward.2} parent=1 // pred_fallthru
      _
    // Predicated region
    $region26: #{align_module_full_forward.2} parent=1 // pred_check
      _
    $region27: #{align_module_full_forward.2} parent=1 // pred_check_branch
      %77 = sbr.rel (0) target = $region29
    $region28: #{align_module_full_forward.2} parent=1 // pred_region
      %78 = dma.done [#allocation5], 512
    $region29: #{align_module_full_forward.2} parent=1 // pred_fallthru
      _
    // Predicated region
    $region30: #{align_module_full_forward.2} parent=1 // pred_check
      _
    $region31: #{align_module_full_forward.2} parent=1 // pred_check_branch
      %80 = sbr.rel (0) target = $region33
    $region32: #{align_module_full_forward.2} parent=1 // pred_region
      %81 = dma.done [#allocation8], 128
    $region33: #{align_module_full_forward.2} parent=1 // pred_fallthru
      _
    // Predicated region
    $region34: #{align_module_full_forward.2} parent=1 // pred_check
      _
    $region35: #{align_module_full_forward.2} parent=1 // pred_check_branch
      %83 = sbr.rel (0) target = $region37
    $region36: #{align_module_full_forward.2} parent=1 // pred_region
      %84 = dma.done [#allocation8], 64
    $region37: #{align_module_full_forward.2} parent=1 // pred_fallthru
      _
    // Predicated region
    $region38: #{align_module_full_forward.2} parent=1 // pred_check
      _
    $region39: #{align_module_full_forward.2} parent=1 // pred_check_branch
      %86 = sbr.rel (0) target = $region41
    $region40: #{align_module_full_forward.2} parent=1 // pred_region
      %87 = dma.done [#allocation11], 64
    $region41: #{align_module_full_forward.2} parent=1 // pred_fallthru
      _
    // Predicated region
    $region42: #{align_module_full_forward.2} parent=1 // pred_check
      _
    $region43: #{align_module_full_forward.2} parent=1 // pred_check_branch
      %89 = sbr.rel (0) target = $region45
    $region44: #{align_module_full_forward.2} parent=1 // pred_region
      %90 = dma.done [#allocation11], 64
    $region45: #{align_module_full_forward.2} parent=1 // pred_fallthru
      _
    // Predicated region
    $region46: #{align_module_full_forward.2} parent=1 // pred_check
      _
    $region47: #{align_module_full_forward.2} parent=1 // pred_check_branch
      %92 = sbr.rel (0) target = $region49
    $region48: #{align_module_full_forward.2} parent=1 // pred_region
      %93 = dma.done [#allocation14], 32
    $region49: #{align_module_full_forward.2} parent=1 // pred_fallthru
      _
    %v94 = vld [vmem:[#allocation7] sm:$0xff]
    %v95 = vld [vmem:[#allocation9] sm:$0xf]
    %v96 = vld [vmem:[#allocation13] sm:$0x3]
    %v97 = vld [vmem:[#allocation10] sm:$0xf]
    %v98 = vld [vmem:[#allocation12] sm:$0xf]
    %v99 = vlaneseq
    %v100 = vand.u32 %v99, 127
    %v101 = vadd.s32 %v100, 128
    %v102 = vadd.s32 %v100, 256
    %v103 = vadd.s32 %v100, 384
    %v104 = vcvt.s32.f32 %v100
    %v105 = vcvt.s32.f32 %v101
    %v106 = vcvt.s32.f32 %v102
    %v107 = vcvt.s32.f32 %v103
    %v108 = vmul.f32 %v104, 0.0625
    %v109 = vmul.f32 %v105, 0.0625
    %v110 = vmul.f32 %v106, 0.0625
    %v111 = vmul.f32 %v107, 0.0625
    %v112 = vfloor.f32 %v108
    %v113 = vfloor.f32 %v109
    %v114 = vfloor.f32 %v110
    %v115 = vfloor.f32 %v111
    %v116 = vcvt.f32.s32.to.zero.pseudo %v112
    %v117 = vcvt.f32.s32.to.zero.pseudo %v113
    %v118 = vcvt.f32.s32.to.zero.pseudo %v114
    %v119 = vcvt.f32.s32.to.zero.pseudo %v115
    %v120 = vmul.u32 %v116, 16
    %v121 = vmul.u32 %v117, 16
    %v122 = vmul.u32 %v118, 16
    %v123 = vmul.u32 %v119, 16
    %v124 = vsub.s32 %v100, %v120
    %v125 = vsub.s32 %v101, %v121
    %v126 = vsub.s32 %v102, %v122
    %v127 = vsub.s32 %v103, %v123
    %vm128 = vcmp.lt.s32.totalorder %v124, 0
    %vm129 = vcmp.lt.s32.totalorder %v125, 0
    %vm130 = vcmp.lt.s32.totalorder %v126, 0
    %vm131 = vcmp.lt.s32.totalorder %v127, 0
    %v132 = vsub.s32 %v116, 1
    %v133 = vsub.s32 %v117, 1
    %v134 = vsub.s32 %v118, 1
    %v135 = vsub.s32 %v119, 1
    %v136 = vsel %vm128, %v132, %v116
    %v137 = vsel %vm129, %v133, %v117
    %v138 = vsel %vm130, %v134, %v118
    %v139 = vsel %vm131, %v135, %v119
    %v140 = vadd.s32 %v124, 16
    %v141 = vadd.s32 %v125, 16
    %v142 = vadd.s32 %v126, 16
    %v143 = vadd.s32 %v127, 16
    %v144 = vsel %vm128, %v140, %v124
    %v145 = vsel %vm129, %v141, %v125
    %v146 = vsel %vm130, %v142, %v126
    %v147 = vsel %vm131, %v143, %v127
    %vm148 = vcmp.ge.s32.totalorder %v144, 16
    %vm149 = vcmp.ge.s32.totalorder %v145, 16
    %vm150 = vcmp.ge.s32.totalorder %v146, 16
    %vm151 = vcmp.ge.s32.totalorder %v147, 16
    %v152 = vadd.s32 %v136, 1
    %v153 = vadd.s32 %v137, 1
    %v154 = vadd.s32 %v138, 1
    %v155 = vadd.s32 %v139, 1
    %v156 = vsel %vm148, %v152, %v136
    %v157 = vsel %vm149, %v153, %v137
    %v158 = vsel %vm150, %v154, %v138
    %v159 = vsel %vm151, %v155, %v139
    %v160 = vsub.s32 %v144, 16
    %v161 = vsub.s32 %v145, 16
    %v162 = vsub.s32 %v146, 16
    %v163 = vsub.s32 %v147, 16
    %v164 = vsel %vm148, %v160, %v144
    %v165 = vsel %vm149, %v161, %v145
    %v166 = vsel %vm150, %v162, %v146
    %v167 = vsel %vm151, %v163, %v147
    %v168 = vcvt.s32.f32 %v156
    %v169 = vcvt.s32.f32 %v157
    %v170 = vcvt.s32.f32 %v158
    %v171 = vcvt.s32.f32 %v159
    %v172 = vmul.f32 %v168, 0.0625
    %v173 = vmul.f32 %v169, 0.0625
    %v174 = vmul.f32 %v170, 0.0625
    %v175 = vmul.f32 %v171, 0.0625
    %v176 = vfloor.f32 %v172
    %v177 = vfloor.f32 %v173
    %v178 = vfloor.f32 %v174
    %v179 = vfloor.f32 %v175
    %v180 = vcvt.f32.s32.to.zero.pseudo %v176
    %v181 = vcvt.f32.s32.to.zero.pseudo %v177
    %v182 = vcvt.f32.s32.to.zero.pseudo %v178
    %v183 = vcvt.f32.s32.to.zero.pseudo %v179
    %v184 = vmul.u32 %v180, 16
    %v185 = vmul.u32 %v181, 16
    %v186 = vmul.u32 %v182, 16
    %v187 = vmul.u32 %v183, 16
    %v188 = vsub.s32 %v156, %v184
    %v189 = vsub.s32 %v157, %v185
    %v190 = vsub.s32 %v158, %v186
    %v191 = vsub.s32 %v159, %v187
    %vm192 = vcmp.lt.s32.totalorder %v188, 0
    %vm193 = vcmp.lt.s32.totalorder %v189, 0
    %vm194 = vcmp.lt.s32.totalorder %v190, 0
    %vm195 = vcmp.lt.s32.totalorder %v191, 0
    %v196 = vadd.s32 %v188, 16
    %v197 = vadd.s32 %v189, 16
    %v198 = vadd.s32 %v190, 16
    %v199 = vadd.s32 %v191, 16
    %v200 = vsel %vm192, %v196, %v188
    %v201 = vsel %vm193, %v197, %v189
    %v202 = vsel %vm194, %v198, %v190
    %v203 = vsel %vm195, %v199, %v191
    %vm204 = vcmp.ge.s32.totalorder %v200, 16
    %vm205 = vcmp.ge.s32.totalorder %v201, 16
    %vm206 = vcmp.ge.s32.totalorder %v202, 16
    %vm207 = vcmp.ge.s32.totalorder %v203, 16
    %v208 = vsub.s32 %v200, 16
    %v209 = vsub.s32 %v201, 16
    %v210 = vsub.s32 %v202, 16
    %v211 = vsub.s32 %v203, 16
    %v212 = vsel %vm204, %v208, %v200
    %v213 = vsel %vm205, %v209, %v201
    %v214 = vsel %vm206, %v210, %v202
    %v215 = vsel %vm207, %v211, %v203
    %vm216 = vcmp.ge.s32.totalorder %v164, 1
    %vm217 = vcmp.ge.s32.totalorder %v165, 1
    %vm218 = vcmp.ge.s32.totalorder %v166, 1
    %vm219 = vcmp.ge.s32.totalorder %v167, 1
    %vm220 = vcmp.ge.s32.totalorder %v212, 1
    %vm221 = vcmp.ge.s32.totalorder %v213, 1
    %vm222 = vcmp.ge.s32.totalorder %v214, 1
    %vm223 = vcmp.ge.s32.totalorder %v215, 1
    %vm224 = vmand %vm216, %vm220
    %vm225 = vmand %vm217, %vm221
    %vm226 = vmand %vm218, %vm222
    %vm227 = vmand %vm219, %vm223
    %v228 = vsel %vm224, 1, 0
    %v229 = vsel %vm225, 1, 0
    %v230 = vsel %vm226, 1, 0
    %v231 = vsel %vm227, 1, 0
    %v232 = vcvt.s32.f32 %v228
    %v233 = vcvt.s32.f32 %v229
    %v234 = vcvt.s32.f32 %v230
    %v235 = vcvt.s32.f32 %v231
    %v236 = vsel %vm220, 1, 0
    %v237 = vsel %vm221, 1, 0
    %v238 = vsel %vm222, 1, 0
    %v239 = vsel %vm223, 1, 0
    %v240 = vcvt.s32.f32 %v236
    %v241 = vcvt.s32.f32 %v237
    %v242 = vcvt.s32.f32 %v238
    %v243 = vcvt.s32.f32 %v239
    %vm244 = vcmp.lt.s32.totalorder %v164, 15
    %vm245 = vcmp.lt.s32.totalorder %v165, 15
    %vm246 = vcmp.lt.s32.totalorder %v166, 15
    %vm247 = vcmp.lt.s32.totalorder %v167, 15
    %vm248 = vmand %vm244, %vm220
    %vm249 = vmand %vm245, %vm221
    %vm250 = vmand %vm246, %vm222
    %vm251 = vmand %vm247, %vm223
    %v252 = vsel %vm248, 1, 0
    %v253 = vsel %vm249, 1, 0
    %v254 = vsel %vm250, 1, 0
    %v255 = vsel %vm251, 1, 0
    %v256 = vcvt.s32.f32 %v252
    %v257 = vcvt.s32.f32 %v253
    %v258 = vcvt.s32.f32 %v254
    %v259 = vcvt.s32.f32 %v255
    %v260 = vsel %vm216, 1, 0
    %v261 = vsel %vm217, 1, 0
    %v262 = vsel %vm218, 1, 0
    %v263 = vsel %vm219, 1, 0
    %v264 = vcvt.s32.f32 %v260
    %v265 = vcvt.s32.f32 %v261
    %v266 = vcvt.s32.f32 %v262
    %v267 = vcvt.s32.f32 %v263
    %v268 = vsel %vm244, 1, 0
    %v269 = vsel %vm245, 1, 0
    %v270 = vsel %vm246, 1, 0
    %v271 = vsel %vm247, 1, 0
    %v272 = vcvt.s32.f32 %v268
    %v273 = vcvt.s32.f32 %v269
    %v274 = vcvt.s32.f32 %v270
    %v275 = vcvt.s32.f32 %v271
    %vm276 = vcmp.lt.s32.totalorder %v212, 15
    %vm277 = vcmp.lt.s32.totalorder %v213, 15
    %vm278 = vcmp.lt.s32.totalorder %v214, 15
    %vm279 = vcmp.lt.s32.totalorder %v215, 15
    %vm280 = vmand %vm216, %vm276
    %vm281 = vmand %vm217, %vm277
    %vm282 = vmand %vm218, %vm278
    %vm283 = vmand %vm219, %vm279
    %v284 = vsel %vm280, 1, 0
    %v285 = vsel %vm281, 1, 0
    %v286 = vsel %vm282, 1, 0
    %v287 = vsel %vm283, 1, 0
    %v288 = vcvt.s32.f32 %v284
    %v289 = vcvt.s32.f32 %v285
    %v290 = vcvt.s32.f32 %v286
    %v291 = vcvt.s32.f32 %v287
    %v292 = vsel %vm276, 1, 0
    %v293 = vsel %vm277, 1, 0
    %v294 = vsel %vm278, 1, 0
    %v295 = vsel %vm279, 1, 0
    %v296 = vcvt.s32.f32 %v292
    %v297 = vcvt.s32.f32 %v293
    %v298 = vcvt.s32.f32 %v294
    %v299 = vcvt.s32.f32 %v295
    %vm300 = vmand %vm244, %vm276
    %vm301 = vmand %vm245, %vm277
    %vm302 = vmand %vm246, %vm278
    %vm303 = vmand %vm247, %vm279
    %v304 = vsel %vm300, 1, 0
    %v305 = vsel %vm301, 1, 0
    %v306 = vsel %vm302, 1, 0
    %v307 = vsel %vm303, 1, 0
    %v308 = vcvt.s32.f32 %v304
    %v309 = vcvt.s32.f32 %v305
    %v310 = vcvt.s32.f32 %v306
    %v311 = vcvt.s32.f32 %v307
    %v312 = vld [vmem:[#allocation4] sm:$0xff]
    %v313 = vld [vmem:[#allocation4 + $0x8] sm:$0xff]
    %v314 = vld [vmem:[#allocation4 + $0x10] sm:$0xff]
    %v315 = vld [vmem:[#allocation4 + $0x18] sm:$0xff]
    %vm316 = vcmask 64512
    %v318 = vsel %vm316, %v94, 0
    %320 = vmatprep.subr.mxu0 %v313
    %321 = vmatpush1.msra.mxu0 %v312
    %322 = vmatprep.subr.mxu0 0.0
    %323 = vmatpush1.msra.mxu0 0.0
    %324 = vmatprep.subr.mxu0 0.0
    %325 = vmatpush1.msra.mxu0 0.0
    %326 = vmatprep.subr.mxu0 0.0
    %327 = vmatpush1.msra.mxu0 0.0
    %328 = vmatprep.subr.mxu0 0.0
    %329 = vmatpush1.msra.mxu0 0.0
    %330 = vmatprep.subr.mxu0 0.0
    %331 = vmatpush1.msra.mxu0 0.0
    %332 = vmatprep.subr.mxu0 0.0
    %333 = vmatpush1.msra.mxu0 0.0
    %334 = vmatprep.subr.mxu0 0.0
    %335 = vmatpush1.msra.mxu0 0.0
    %336 = vmatprep.subr.mxu0 0.0
    %337 = vmatpush1.msra.mxu0 0.0
    %338 = vmatprep.subr.mxu0 0.0
    %339 = vmatpush1.msra.mxu0 0.0
    %340 = vmatprep.subr.mxu0 0.0
    %341 = vmatpush1.msra.mxu0 0.0
    %342 = vmatprep.subr.mxu0 0.0
    %343 = vmatpush1.msra.mxu0 0.0
    %344 = vmatprep.subr.mxu0 0.0
    %345 = vmatpush1.msra.mxu0 0.0
    %346 = vmatprep.subr.mxu0 0.0
    %347 = vmatpush1.msra.mxu0 0.0
    %348 = vmatprep.subr.mxu0 0.0
    %349 = vmatpush1.msra.mxu0 0.0
    %350 = vmatprep.subr.mxu0 0.0
    %351 = vmatpush1.msra.mxu0 0.0
    %352 = vmatprep.subr.mxu0 0.0
    %353 = vmatpush1.msra.mxu0 0.0
    %354 = vmatprep.subr.mxu0 0.0
    %355 = vmatpush1.msra.mxu0 0.0
    %356 = vmatprep.subr.mxu0 0.0
    %357 = vmatpush1.msra.mxu0 0.0
    %358 = vmatprep.subr.mxu0 0.0
    %359 = vmatpush1.msra.mxu0 0.0
    %360 = vmatprep.subr.mxu0 0.0
    %361 = vmatpush1.msra.mxu0 0.0
    %362 = vmatprep.subr.mxu0 0.0
    %363 = vmatpush1.msra.mxu0 0.0
    %364 = vmatprep.subr.mxu0 0.0
    %365 = vmatpush1.msra.mxu0 0.0
    %366 = vmatprep.subr.mxu0 0.0
    %367 = vmatpush1.msra.mxu0 0.0
    %368 = vmatprep.subr.mxu0 0.0
    %369 = vmatpush1.msra.mxu0 0.0
    %370 = vmatprep.subr.mxu0 0.0
    %371 = vmatpush1.msra.mxu0 0.0
    %372 = vmatprep.subr.mxu0 0.0
    %373 = vmatpush1.msra.mxu0 0.0
    %374 = vmatprep.subr.mxu0 0.0
    %375 = vmatpush1.msra.mxu0 0.0
    %376 = vmatprep.subr.mxu0 0.0
    %377 = vmatpush1.msra.mxu0 0.0
    %378 = vmatprep.subr.mxu0 0.0
    %379 = vmatpush1.msra.mxu0 0.0
    %380 = vmatprep.subr.mxu0 0.0
    %381 = vmatpush1.msra.mxu0 0.0
    %382 = vmatprep.subr.mxu0 0.0
    %383 = vmatpush1.msra.mxu0 0.0
    %384 = vmatprep.mubr.f32.mxu0 0.0
    %385 = vmatmul.mubr.f32.gmra.mrb[0].mxu0 %v318
    %v386 = vpop.f32.mrb[0].mxu0
    %v387 = vadd.f32 0.0, %v386
    %v388 = vpop.f32.mrb[0].mxu0
    %v389 = vadd.f32 0.0, %v388
    %390 = vdwg.mxu0
    %391 = vmatprep.subr.mxu0 %v315
    %392 = vmatpush1.msra.mxu0 %v314
    %393 = vmatprep.subr.mxu0 0.0
    %394 = vmatpush1.msra.mxu0 0.0
    %395 = vmatprep.subr.mxu0 0.0
    %396 = vmatpush1.msra.mxu0 0.0
    %397 = vmatprep.subr.mxu0 0.0
    %398 = vmatpush1.msra.mxu0 0.0
    %399 = vmatprep.subr.mxu0 0.0
    %400 = vmatpush1.msra.mxu0 0.0
    %401 = vmatprep.subr.mxu0 0.0
    %402 = vmatpush1.msra.mxu0 0.0
    %403 = vmatprep.subr.mxu0 0.0
    %404 = vmatpush1.msra.mxu0 0.0
    %405 = vmatprep.subr.mxu0 0.0
    %406 = vmatpush1.msra.mxu0 0.0
    %407 = vmatprep.subr.mxu0 0.0
    %408 = vmatpush1.msra.mxu0 0.0
    %409 = vmatprep.subr.mxu0 0.0
    %410 = vmatpush1.msra.mxu0 0.0
    %411 = vmatprep.subr.mxu0 0.0
    %412 = vmatpush1.msra.mxu0 0.0
    %413 = vmatprep.subr.mxu0 0.0
    %414 = vmatpush1.msra.mxu0 0.0
    %415 = vmatprep.subr.mxu0 0.0
    %416 = vmatpush1.msra.mxu0 0.0
    %417 = vmatprep.subr.mxu0 0.0
    %418 = vmatpush1.msra.mxu0 0.0
    %419 = vmatprep.subr.mxu0 0.0
    %420 = vmatpush1.msra.mxu0 0.0
    %421 = vmatprep.subr.mxu0 0.0
    %422 = vmatpush1.msra.mxu0 0.0
    %423 = vmatprep.subr.mxu0 0.0
    %424 = vmatpush1.msra.mxu0 0.0
    %425 = vmatprep.subr.mxu0 0.0
    %426 = vmatpush1.msra.mxu0 0.0
    %427 = vmatprep.subr.mxu0 0.0
    %428 = vmatpush1.msra.mxu0 0.0
    %429 = vmatprep.subr.mxu0 0.0
    %430 = vmatpush1.msra.mxu0 0.0
    %431 = vmatprep.subr.mxu0 0.0
    %432 = vmatpush1.msra.mxu0 0.0
    %433 = vmatprep.subr.mxu0 0.0
    %434 = vmatpush1.msra.mxu0 0.0
    %435 = vmatprep.subr.mxu0 0.0
    %436 = vmatpush1.msra.mxu0 0.0
    %437 = vmatprep.subr.mxu0 0.0
    %438 = vmatpush1.msra.mxu0 0.0
    %439 = vmatprep.subr.mxu0 0.0
    %440 = vmatpush1.msra.mxu0 0.0
    %441 = vmatprep.subr.mxu0 0.0
    %442 = vmatpush1.msra.mxu0 0.0
    %443 = vmatprep.subr.mxu0 0.0
    %444 = vmatpush1.msra.mxu0 0.0
    %445 = vmatprep.subr.mxu0 0.0
    %446 = vmatpush1.msra.mxu0 0.0
    %447 = vmatprep.subr.mxu0 0.0
    %448 = vmatpush1.msra.mxu0 0.0
    %449 = vmatprep.subr.mxu0 0.0
    %450 = vmatpush1.msra.mxu0 0.0
    %451 = vmatprep.subr.mxu0 0.0
    %452 = vmatpush1.msra.mxu0 0.0
    %453 = vmatprep.subr.mxu0 0.0
    %454 = vmatpush1.msra.mxu0 0.0
    %455 = vmatprep.mubr.f32.mxu0 0.0
    %456 = vmatmul.mubr.f32.gmra.mrb[0].mxu0 %v318
    %v457 = vpop.f32.mrb[0].mxu0
    %v458 = vadd.f32 0.0, %v457
    %v459 = vpop.f32.mrb[0].mxu0
    %v460 = vadd.f32 0.0, %v459
    %461 = vdwg.mxu0
    %462 = vrot.lane.b32.xlu0 %v387, 17
    %v463 = vpop.permute.xlu0 %462
    %464 = vrot.lane.b32.xlu0 %v389, 17
    %v465 = vpop.permute.xlu0 %464
    %466 = vrot.lane.b32.xlu0 %v458, 17
    %v467 = vpop.permute.xlu0 %466
    %468 = vrot.lane.b32.xlu0 %v460, 17
    %v469 = vpop.permute.xlu0 %468
    %vm470 = vcmp.lt.s32.totalorder %v100, 17
    %v471 = vsel %vm470, %v467, %v469
    %v472 = vsel %vm470, %v465, %v467
    %v473 = vsel %vm470, %v463, %v465
    %v474 = vsel %vm470, %v469, %v463
    %v475 = vmul.f32 %v474, %v232
    %v476 = vmul.f32 %v473, %v233
    %v477 = vmul.f32 %v472, %v234
    %v478 = vmul.f32 %v471, %v235
    %479 = vst [vmem:[#allocation2] sm:$0xff] %v475
    %480 = vst [vmem:[#allocation2 + $0x8] sm:$0xff] %v476
    %481 = vst [vmem:[#allocation2 + $0x10] sm:$0xff] %v477
    %482 = vst [vmem:[#allocation2 + $0x18] sm:$0xff] %v478
    %483 = vrot.lane.b32.xlu0 %v387, 16
    %v484 = vpop.permute.xlu0 %483
    %485 = vrot.lane.b32.xlu0 %v389, 16
    %v486 = vpop.permute.xlu0 %485
    %487 = vrot.lane.b32.xlu0 %v458, 16
    %v488 = vpop.permute.xlu0 %487
    %489 = vrot.lane.b32.xlu0 %v460, 16
    %v490 = vpop.permute.xlu0 %489
    %vm491 = vcmp.lt.s32.totalorder %v100, 16
    %v492 = vsel %vm491, %v488, %v490
    %v493 = vsel %vm491, %v486, %v488
    %v494 = vsel %vm491, %v484, %v486
    %v495 = vsel %vm491, %v490, %v484
    %v496 = vmul.f32 %v495, %v240
    %v497 = vmul.f32 %v494, %v241
    %v498 = vmul.f32 %v493, %v242
    %v499 = vmul.f32 %v492, %v243
    %500 = vst [vmem:[#allocation2 + $0x20] sm:$0xff] %v496
    %501 = vst [vmem:[#allocation2 + $0x28] sm:$0xff] %v497
    %502 = vst [vmem:[#allocation2 + $0x30] sm:$0xff] %v498
    %503 = vst [vmem:[#allocation2 + $0x38] sm:$0xff] %v499
    %504 = vrot.lane.b32.xlu0 %v387, 15
    %v505 = vpop.permute.xlu0 %504
    %506 = vrot.lane.b32.xlu0 %v389, 15
    %v507 = vpop.permute.xlu0 %506
    %508 = vrot.lane.b32.xlu0 %v458, 15
    %v509 = vpop.permute.xlu0 %508
    %510 = vrot.lane.b32.xlu0 %v460, 15
    %v511 = vpop.permute.xlu0 %510
    %vm512 = vcmp.lt.s32.totalorder %v100, 15
    %v513 = vsel %vm512, %v509, %v511
    %v514 = vsel %vm512, %v507, %v509
    %v515 = vsel %vm512, %v505, %v507
    %v516 = vsel %vm512, %v511, %v505
    %v517 = vmul.f32 %v516, %v256
    %v518 = vmul.f32 %v515, %v257
    %v519 = vmul.f32 %v514, %v258
    %v520 = vmul.f32 %v513, %v259
    %521 = vst [vmem:[#allocation2 + $0x40] sm:$0xff] %v517
    %522 = vst [vmem:[#allocation2 + $0x48] sm:$0xff] %v518
    %523 = vst [vmem:[#allocation2 + $0x50] sm:$0xff] %v519
    %524 = vst [vmem:[#allocation2 + $0x58] sm:$0xff] %v520
    %525 = vrot.lane.b32.xlu0 %v387, 1
    %v526 = vpop.permute.xlu0 %525
    %527 = vrot.lane.b32.xlu0 %v389, 1
    %v528 = vpop.permute.xlu0 %527
    %529 = vrot.lane.b32.xlu0 %v458, 1
    %v530 = vpop.permute.xlu0 %529
    %531 = vrot.lane.b32.xlu0 %v460, 1
    %v532 = vpop.permute.xlu0 %531
    %vm533 = vcmp.lt.s32.totalorder %v100, 1
    %v534 = vsel %vm533, %v530, %v532
    %v535 = vsel %vm533, %v528, %v530
    %v536 = vsel %vm533, %v526, %v528
    %v537 = vsel %vm533, %v532, %v526
    %v538 = vmul.f32 %v537, %v264
    %v539 = vmul.f32 %v536, %v265
    %v540 = vmul.f32 %v535, %v266
    %v541 = vmul.f32 %v534, %v267
    %542 = vst [vmem:[#allocation2 + $0x60] sm:$0xff] %v538
    %543 = vst [vmem:[#allocation2 + $0x68] sm:$0xff] %v539
    %544 = vst [vmem:[#allocation2 + $0x70] sm:$0xff] %v540
    %545 = vst [vmem:[#allocation2 + $0x78] sm:$0xff] %v541
    %546 = vst [vmem:[#allocation2 + $0x80] sm:$0xff] %v387
    %547 = vst [vmem:[#allocation2 + $0x88] sm:$0xff] %v389
    %548 = vst [vmem:[#allocation2 + $0x90] sm:$0xff] %v458
    %549 = vst [vmem:[#allocation2 + $0x98] sm:$0xff] %v460
    %550 = vrot.lane.b32.xlu0 %v387, 127
    %v551 = vpop.permute.xlu0 %550
    %552 = vrot.lane.b32.xlu0 %v389, 127
    %v553 = vpop.permute.xlu0 %552
    %554 = vrot.lane.b32.xlu0 %v458, 127
    %v555 = vpop.permute.xlu0 %554
    %556 = vrot.lane.b32.xlu0 %v460, 127
    %v557 = vpop.permute.xlu0 %556
    %vm558 = vcmp.lt.s32.totalorder %v100, 127
    %v559 = vsel %vm558, %v555, %v557
    %v560 = vsel %vm558, %v553, %v555
    %v561 = vsel %vm558, %v551, %v553
    %v562 = vsel %vm558, %v557, %v551
    %v563 = vmul.f32 %v561, %v272
    %v564 = vmul.f32 %v560, %v273
    %v565 = vmul.f32 %v559, %v274
    %v566 = vmul.f32 %v562, %v275
    %567 = vst [vmem:[#allocation2 + $0xa0] sm:$0xff] %v563
    %568 = vst [vmem:[#allocation2 + $0xa8] sm:$0xff] %v564
    %569 = vst [vmem:[#allocation2 + $0xb0] sm:$0xff] %v565
    %570 = vst [vmem:[#allocation2 + $0xb8] sm:$0xff] %v566
    %571 = vrot.lane.b32.xlu0 %v387, 113
    %v572 = vpop.permute.xlu0 %571
    %573 = vrot.lane.b32.xlu0 %v389, 113
    %v574 = vpop.permute.xlu0 %573
    %575 = vrot.lane.b32.xlu0 %v458, 113
    %v576 = vpop.permute.xlu0 %575
    %577 = vrot.lane.b32.xlu0 %v460, 113
    %v578 = vpop.permute.xlu0 %577
    %vm579 = vcmp.lt.s32.totalorder %v100, 113
    %v580 = vsel %vm579, %v576, %v578
    %v581 = vsel %vm579, %v574, %v576
    %v582 = vsel %vm579, %v572, %v574
    %v583 = vsel %vm579, %v578, %v572
    %v584 = vmul.f32 %v582, %v288
    %v585 = vmul.f32 %v581, %v289
    %v586 = vmul.f32 %v580, %v290
    %v587 = vmul.f32 %v583, %v291
    %588 = vst [vmem:[#allocation2 + $0xc0] sm:$0xff] %v584
    %589 = vst [vmem:[#allocation2 + $0xc8] sm:$0xff] %v585
    %590 = vst [vmem:[#allocation2 + $0xd0] sm:$0xff] %v586
    %591 = vst [vmem:[#allocation2 + $0xd8] sm:$0xff] %v587
    %592 = vrot.lane.b32.xlu0 %v387, 112
    %v593 = vpop.permute.xlu0 %592
    %594 = vrot.lane.b32.xlu0 %v389, 112
    %v595 = vpop.permute.xlu0 %594
    %596 = vrot.lane.b32.xlu0 %v458, 112
    %v597 = vpop.permute.xlu0 %596
    %598 = vrot.lane.b32.xlu0 %v460, 112
    %v599 = vpop.permute.xlu0 %598
    %vm600 = vcmp.lt.s32.totalorder %v100, 112
    %v601 = vsel %vm600, %v597, %v599
    %v602 = vsel %vm600, %v595, %v597
    %v603 = vsel %vm600, %v593, %v595
    %v604 = vsel %vm600, %v599, %v593
    %v605 = vmul.f32 %v603, %v296
    %v606 = vmul.f32 %v602, %v297
    %v607 = vmul.f32 %v601, %v298
    %v608 = vmul.f32 %v604, %v299
    %609 = vst [vmem:[#allocation2 + $0xe0] sm:$0xff] %v605
    %610 = vst [vmem:[#allocation2 + $0xe8] sm:$0xff] %v606
    %611 = vst [vmem:[#allocation2 + $0xf0] sm:$0xff] %v607
    %612 = vst [vmem:[#allocation2 + $0xf8] sm:$0xff] %v608
    %613 = vrot.lane.b32.xlu0 %v387, 111
    %v614 = vpop.permute.xlu0 %613
    %615 = vrot.lane.b32.xlu0 %v389, 111
    %v616 = vpop.permute.xlu0 %615
    %617 = vrot.lane.b32.xlu0 %v458, 111
    %v618 = vpop.permute.xlu0 %617
    %619 = vrot.lane.b32.xlu0 %v460, 111
    %v620 = vpop.permute.xlu0 %619
    %vm621 = vcmp.lt.s32.totalorder %v100, 111
    %v622 = vsel %vm621, %v618, %v620
    %v623 = vsel %vm621, %v616, %v618
    %v624 = vsel %vm621, %v614, %v616
    %v625 = vsel %vm621, %v620, %v614
    %v626 = vmul.f32 %v624, %v308
    %v627 = vmul.f32 %v623, %v309
    %v628 = vmul.f32 %v622, %v310
    %v629 = vmul.f32 %v625, %v311
    %630 = vst [vmem:[#allocation2 + $0x100] sm:$0xff] %v626
    %631 = vst [vmem:[#allocation2 + $0x108] sm:$0xff] %v627
    %632 = vst [vmem:[#allocation2 + $0x110] sm:$0xff] %v628
    %633 = vst [vmem:[#allocation2 + $0x118] sm:$0xff] %v629
    %v634 = vld [vmem:[#allocation2] sm:$0xff]
    %v635 = vld [vmem:[#allocation2 + $0x8] sm:$0xff]
    %v636 = vld [vmem:[#allocation2 + $0x10] sm:$0xff]
    %v637 = vld [vmem:[#allocation2 + $0x18] sm:$0xff]
    %v638 = vld [vmem:[#allocation2 + $0x20] sm:$0xff]
    %v639 = vld [vmem:[#allocation2 + $0x28] sm:$0xff]
    %v640 = vld [vmem:[#allocation2 + $0x30] sm:$0xff]
    %v641 = vld [vmem:[#allocation2 + $0x38] sm:$0xff]
    %v642 = vld [vmem:[#allocation2 + $0x40] sm:$0xff]
    %v643 = vld [vmem:[#allocation2 + $0x48] sm:$0xff]
    %v644 = vld [vmem:[#allocation2 + $0x50] sm:$0xff]
    %v645 = vld [vmem:[#allocation2 + $0x58] sm:$0xff]
    %v646 = vld [vmem:[#allocation2 + $0x60] sm:$0xff]
    %v647 = vld [vmem:[#allocation2 + $0x68] sm:$0xff]
    %v648 = vld [vmem:[#allocation2 + $0x70] sm:$0xff]
    %v649 = vld [vmem:[#allocation2 + $0x78] sm:$0xff]
    %v650 = vld [vmem:[#allocation2 + $0x80] sm:$0xff]
    %v651 = vld [vmem:[#allocation2 + $0x88] sm:$0xff]
    %v652 = vld [vmem:[#allocation2 + $0x90] sm:$0xff]
    %v653 = vld [vmem:[#allocation2 + $0x98] sm:$0xff]
    %v654 = vld [vmem:[#allocation2 + $0xa0] sm:$0xff]
    %v655 = vld [vmem:[#allocation2 + $0xa8] sm:$0xff]
    %v656 = vld [vmem:[#allocation2 + $0xb0] sm:$0xff]
    %v657 = vld [vmem:[#allocation2 + $0xb8] sm:$0xff]
    %v658 = vld [vmem:[#allocation2 + $0xc0] sm:$0xff]
    %v659 = vld [vmem:[#allocation2 + $0xc8] sm:$0xff]
    %v660 = vld [vmem:[#allocation2 + $0xd0] sm:$0xff]
    %v661 = vld [vmem:[#allocation2 + $0xd8] sm:$0xff]
    %v662 = vld [vmem:[#allocation2 + $0xe0] sm:$0xff]
    %v663 = vld [vmem:[#allocation2 + $0xe8] sm:$0xff]
    %v664 = vld [vmem:[#allocation2 + $0xf0] sm:$0xff]
    %v665 = vld [vmem:[#allocation2 + $0xf8] sm:$0xff]
    %v666 = vld [vmem:[#allocation2 + $0x100] sm:$0xff]
    %v667 = vld [vmem:[#allocation2 + $0x108] sm:$0xff]
    %v668 = vld [vmem:[#allocation2 + $0x110] sm:$0xff]
    %v669 = vld [vmem:[#allocation2 + $0x118] sm:$0xff]
    %vm670 = vcmask 588800
    %v672 = vsel %vm670, %v95, 0
    %674 = vmatprep.subr.mxu0 %v635
    %675 = vmatpush1.msra.mxu0 %v634
    %676 = vmatprep.subr.mxu0 %v639
    %677 = vmatpush1.msra.mxu0 %v638
    %678 = vmatprep.subr.mxu0 %v643
    %679 = vmatpush1.msra.mxu0 %v642
    %680 = vmatprep.subr.mxu0 %v647
    %681 = vmatpush1.msra.mxu0 %v646
    %682 = vmatprep.subr.mxu0 %v651
    %683 = vmatpush1.msra.mxu0 %v650
    %684 = vmatprep.subr.mxu0 %v655
    %685 = vmatpush1.msra.mxu0 %v654
    %686 = vmatprep.subr.mxu0 %v659
    %687 = vmatpush1.msra.mxu0 %v658
    %688 = vmatprep.subr.mxu0 %v663
    %689 = vmatpush1.msra.mxu0 %v662
    %690 = vmatprep.subr.mxu0 %v667
    %691 = vmatpush1.msra.mxu0 %v666
    %692 = vmatprep.subr.mxu0 0.0
    %693 = vmatpush1.msra.mxu0 0.0
    %694 = vmatprep.subr.mxu0 0.0
    %695 = vmatpush1.msra.mxu0 0.0
    %696 = vmatprep.subr.mxu0 0.0
    %697 = vmatpush1.msra.mxu0 0.0
    %698 = vmatprep.subr.mxu0 0.0
    %699 = vmatpush1.msra.mxu0 0.0
    %700 = vmatprep.subr.mxu0 0.0
    %701 = vmatpush1.msra.mxu0 0.0
    %702 = vmatprep.subr.mxu0 0.0
    %703 = vmatpush1.msra.mxu0 0.0
    %704 = vmatprep.subr.mxu0 0.0
    %705 = vmatpush1.msra.mxu0 0.0
    %706 = vmatprep.subr.mxu0 0.0
    %707 = vmatpush1.msra.mxu0 0.0
    %708 = vmatprep.subr.mxu0 0.0
    %709 = vmatpush1.msra.mxu0 0.0
    %710 = vmatprep.subr.mxu0 0.0
    %711 = vmatpush1.msra.mxu0 0.0
    %712 = vmatprep.subr.mxu0 0.0
    %713 = vmatpush1.msra.mxu0 0.0
    %714 = vmatprep.subr.mxu0 0.0
    %715 = vmatpush1.msra.mxu0 0.0
    %716 = vmatprep.subr.mxu0 0.0
    %717 = vmatpush1.msra.mxu0 0.0
    %718 = vmatprep.subr.mxu0 0.0
    %719 = vmatpush1.msra.mxu0 0.0
    %720 = vmatprep.subr.mxu0 0.0
    %721 = vmatpush1.msra.mxu0 0.0
    %722 = vmatprep.subr.mxu0 0.0
    %723 = vmatpush1.msra.mxu0 0.0
    %724 = vmatprep.subr.mxu0 0.0
    %725 = vmatpush1.msra.mxu0 0.0
    %726 = vmatprep.subr.mxu0 0.0
    %727 = vmatpush1.msra.mxu0 0.0
    %728 = vmatprep.subr.mxu0 0.0
    %729 = vmatpush1.msra.mxu0 0.0
    %730 = vmatprep.subr.mxu0 0.0
    %731 = vmatpush1.msra.mxu0 0.0
    %732 = vmatprep.subr.mxu0 0.0
    %733 = vmatpush1.msra.mxu0 0.0
    %734 = vmatprep.subr.mxu0 0.0
    %735 = vmatpush1.msra.mxu0 0.0
    %736 = vmatprep.subr.mxu0 0.0
    %737 = vmatpush1.msra.mxu0 0.0
    %738 = vmatprep.mubr.f32.mxu0 0.0
    %739 = vmatmul.mubr.f32.gmra.mrb[0].mxu0 %v672
    %v740 = vpop.f32.mrb[0].mxu0
    %v741 = vadd.f32 0.0, %v740
    %v742 = vpop.f32.mrb[0].mxu0
    %v743 = vadd.f32 0.0, %v742
    %744 = vdwg.mxu0
    %745 = vmatprep.subr.mxu0 %v637
    %746 = vmatpush1.msra.mxu0 %v636
    %747 = vmatprep.subr.mxu0 %v641
    %748 = vmatpush1.msra.mxu0 %v640
    %749 = vmatprep.subr.mxu0 %v645
    %750 = vmatpush1.msra.mxu0 %v644
    %751 = vmatprep.subr.mxu0 %v649
    %752 = vmatpush1.msra.mxu0 %v648
    %753 = vmatprep.subr.mxu0 %v653
    %754 = vmatpush1.msra.mxu0 %v652
    %755 = vmatprep.subr.mxu0 %v657
    %756 = vmatpush1.msra.mxu0 %v656
    %757 = vmatprep.subr.mxu0 %v661
    %758 = vmatpush1.msra.mxu0 %v660
    %759 = vmatprep.subr.mxu0 %v665
    %760 = vmatpush1.msra.mxu0 %v664
    %761 = vmatprep.subr.mxu0 %v669
    %762 = vmatpush1.msra.mxu0 %v668
    %763 = vmatprep.subr.mxu0 0.0
    %764 = vmatpush1.msra.mxu0 0.0
    %765 = vmatprep.subr.mxu0 0.0
    %766 = vmatpush1.msra.mxu0 0.0
    %767 = vmatprep.subr.mxu0 0.0
    %768 = vmatpush1.msra.mxu0 0.0
    %769 = vmatprep.subr.mxu0 0.0
    %770 = vmatpush1.msra.mxu0 0.0
    %771 = vmatprep.subr.mxu0 0.0
    %772 = vmatpush1.msra.mxu0 0.0
    %773 = vmatprep.subr.mxu0 0.0
    %774 = vmatpush1.msra.mxu0 0.0
    %775 = vmatprep.subr.mxu0 0.0
    %776 = vmatpush1.msra.mxu0 0.0
    %777 = vmatprep.subr.mxu0 0.0
    %778 = vmatpush1.msra.mxu0 0.0
    %779 = vmatprep.subr.mxu0 0.0
    %780 = vmatpush1.msra.mxu0 0.0
    %781 = vmatprep.subr.mxu0 0.0
    %782 = vmatpush1.msra.mxu0 0.0
    %783 = vmatprep.subr.mxu0 0.0
    %784 = vmatpush1.msra.mxu0 0.0
    %785 = vmatprep.subr.mxu0 0.0
    %786 = vmatpush1.msra.mxu0 0.0
    %787 = vmatprep.subr.mxu0 0.0
    %788 = vmatpush1.msra.mxu0 0.0
    %789 = vmatprep.subr.mxu0 0.0
    %790 = vmatpush1.msra.mxu0 0.0
    %791 = vmatprep.subr.mxu0 0.0
    %792 = vmatpush1.msra.mxu0 0.0
    %793 = vmatprep.subr.mxu0 0.0
    %794 = vmatpush1.msra.mxu0 0.0
    %795 = vmatprep.subr.mxu0 0.0
    %796 = vmatpush1.msra.mxu0 0.0
    %797 = vmatprep.subr.mxu0 0.0
    %798 = vmatpush1.msra.mxu0 0.0
    %799 = vmatprep.subr.mxu0 0.0
    %800 = vmatpush1.msra.mxu0 0.0
    %801 = vmatprep.subr.mxu0 0.0
    %802 = vmatpush1.msra.mxu0 0.0
    %803 = vmatprep.subr.mxu0 0.0
    %804 = vmatpush1.msra.mxu0 0.0
    %805 = vmatprep.subr.mxu0 0.0
    %806 = vmatpush1.msra.mxu0 0.0
    %807 = vmatprep.subr.mxu0 0.0
    %808 = vmatpush1.msra.mxu0 0.0
    %809 = vmatprep.mubr.f32.mxu0 0.0
    %810 = vmatmul.mubr.f32.gmra.mrb[0].mxu0 %v672
    %v811 = vpop.f32.mrb[0].mxu0
    %v812 = vadd.f32 0.0, %v811
    %v813 = vpop.f32.mrb[0].mxu0
    %v814 = vadd.f32 0.0, %v813
    %815 = vdwg.mxu0
    %vm816 = vcmask 1043456
    %v817 = vsel %vm816, %v741, 0.0
    %v818 = vsel %vm816, %v743, 0.0
    %v819 = vadd.f32 %v817, %v818
    %v820 = vsel %vm816, %v812, 0.0
    %v821 = vadd.f32 %v819, %v820
    %v822 = vsel %vm816, %v814, 0.0
    %v823 = vadd.f32 %v821, %v822
    %824 = vadd.xlane.f32.xlu0 %v823
    %v825 = vpop.xlane.xlu0 %824
    %v826 = vmul.f32 %v825, 0.001953125
    %v827 = vmul.f32 %v741, %v741
    %v828 = vmul.f32 %v743, %v743
    %v829 = vmul.f32 %v812, %v812
    %v830 = vmul.f32 %v814, %v814
    %v831 = vsel %vm816, %v827, 0.0
    %v832 = vsel %vm816, %v828, 0.0
    %v833 = vadd.f32 %v831, %v832
    %v834 = vsel %vm816, %v829, 0.0
    %v835 = vadd.f32 %v833, %v834
    %v836 = vsel %vm816, %v830, 0.0
    %v837 = vadd.f32 %v835, %v836
    %838 = vadd.xlane.f32.xlu0 %v837
    %v839 = vpop.xlane.xlu0 %838
    %v840 = vmul.f32 %v839, 0.001953125
    %v841 = vmul.f32 %v826, %v826
    %v842 = vsub.f32 %v840, %v841
    %v843 = vmax.f32 %v842, 0.0
    %v844 = vadd.f32 %v843, 1e-05
    %v845 = vrsqrt.pop %v844
    %v846 = vmul.f32 %v97, %v845
    %v847 = vmul.f32 %v826, %v846
    %v848 = vsub.f32 %v98, %v847
    %850 = vset.pattern.permute.xlu0 0
    %851 = vperm.xlu0 %850, %v846
    %v852 = vpop.permute.xlu0 %851
    %v854 = vmul.f32 %v741, %v852
    %v855 = vmul.f32 %v743, %v852
    %v856 = vmul.f32 %v812, %v852
    %v857 = vmul.f32 %v814, %v852
    %859 = vset.pattern.permute.xlu0 0
    %860 = vperm.xlu0 %859, %v848
    %v861 = vpop.permute.xlu0 %860
    %v863 = vadd.f32 %v854, %v861
    %v864 = vadd.f32 %v855, %v861
    %v865 = vadd.f32 %v856, %v861
    %v866 = vadd.f32 %v857, %v861
    %v867 = vmax.f32 %v863, 0.0
    %v868 = vmax.f32 %v864, 0.0
    %v869 = vmax.f32 %v865, 0.0
    %v870 = vmax.f32 %v866, 0.0
    %871 = vrot.lane.b32.xlu0 %v867, 17
    %v872 = vpop.permute.xlu0 %871
    %873 = vrot.lane.b32.xlu0 %v868, 17
    %v874 = vpop.permute.xlu0 %873
    %875 = vrot.lane.b32.xlu0 %v869, 17
    %v876 = vpop.permute.xlu0 %875
    %877 = vrot.lane.b32.xlu0 %v870, 17
    %v878 = vpop.permute.xlu0 %877
    %v879 = vsel %vm470, %v876, %v878
    %v880 = vsel %vm470, %v874, %v876
    %v881 = vsel %vm470, %v872, %v874
    %v882 = vsel %vm470, %v878, %v872
    %v883 = vmul.f32 %v882, %v232
    %v884 = vmul.f32 %v881, %v233
    %v885 = vmul.f32 %v880, %v234
    %v886 = vmul.f32 %v879, %v235
    %887 = vst [vmem:[#allocation3] sm:$0xf] %v883
    %888 = vst [vmem:[#allocation3 + $0x8] sm:$0xf] %v884
    %889 = vst [vmem:[#allocation3 + $0x10] sm:$0xf] %v885
    %890 = vst [vmem:[#allocation3 + $0x18] sm:$0xf] %v886
    %891 = vrot.lane.b32.xlu0 %v867, 16
    %v892 = vpop.permute.xlu0 %891
    %893 = vrot.lane.b32.xlu0 %v868, 16
    %v894 = vpop.permute.xlu0 %893
    %895 = vrot.lane.b32.xlu0 %v869, 16
    %v896 = vpop.permute.xlu0 %895
    %897 = vrot.lane.b32.xlu0 %v870, 16
    %v898 = vpop.permute.xlu0 %897
    %v899 = vsel %vm491, %v896, %v898
    %v900 = vsel %vm491, %v894, %v896
    %v901 = vsel %vm491, %v892, %v894
    %v902 = vsel %vm491, %v898, %v892
    %v903 = vmul.f32 %v902, %v240
    %v904 = vmul.f32 %v901, %v241
    %v905 = vmul.f32 %v900, %v242
    %v906 = vmul.f32 %v899, %v243
    %v911 = vrot.slane %v903, 4
    %v912 = vrot.slane %v904, 4
    %v913 = vrot.slane %v905, 4
    %v914 = vrot.slane %v906, 4
    %919 = vst [vmem:[#allocation3] sm:$0xf0] %v911
    %920 = vst [vmem:[#allocation3 + $0x8] sm:$0xf0] %v912
    %921 = vst [vmem:[#allocation3 + $0x10] sm:$0xf0] %v913
    %922 = vst [vmem:[#allocation3 + $0x18] sm:$0xf0] %v914
    %923 = vrot.lane.b32.xlu0 %v867, 15
    %v924 = vpop.permute.xlu0 %923
    %925 = vrot.lane.b32.xlu0 %v868, 15
    %v926 = vpop.permute.xlu0 %925
    %927 = vrot.lane.b32.xlu0 %v869, 15
    %v928 = vpop.permute.xlu0 %927
    %929 = vrot.lane.b32.xlu0 %v870, 15
    %v930 = vpop.permute.xlu0 %929
    %v931 = vsel %vm512, %v928, %v930
    %v932 = vsel %vm512, %v926, %v928
    %v933 = vsel %vm512, %v924, %v926
    %v934 = vsel %vm512, %v930, %v924
    %v935 = vmul.f32 %v934, %v256
    %v936 = vmul.f32 %v933, %v257
    %v937 = vmul.f32 %v932, %v258
    %v938 = vmul.f32 %v931, %v259
    %939 = vst [vmem:[#allocation3 + $0x20] sm:$0xf] %v935
    %940 = vst [vmem:[#allocation3 + $0x28] sm:$0xf] %v936
    %941 = vst [vmem:[#allocation3 + $0x30] sm:$0xf] %v937
    %942 = vst [vmem:[#allocation3 + $0x38] sm:$0xf] %v938
    %943 = vrot.lane.b32.xlu0 %v867, 1
    %v944 = vpop.permute.xlu0 %943
    %945 = vrot.lane.b32.xlu0 %v868, 1
    %v946 = vpop.permute.xlu0 %945
    %947 = vrot.lane.b32.xlu0 %v869, 1
    %v948 = vpop.permute.xlu0 %947
    %949 = vrot.lane.b32.xlu0 %v870, 1
    %v950 = vpop.permute.xlu0 %949
    %v951 = vsel %vm533, %v948, %v950
    %v952 = vsel %vm533, %v946, %v948
    %v953 = vsel %vm533, %v944, %v946
    %v954 = vsel %vm533, %v950, %v944
    %v955 = vmul.f32 %v954, %v264
    %v956 = vmul.f32 %v953, %v265
    %v957 = vmul.f32 %v952, %v266
    %v958 = vmul.f32 %v951, %v267
    %v963 = vrot.slane %v955, 4
    %v964 = vrot.slane %v956, 4
    %v965 = vrot.slane %v957, 4
    %v966 = vrot.slane %v958, 4
    %971 = vst [vmem:[#allocation3 + $0x20] sm:$0xf0] %v963
    %972 = vst [vmem:[#allocation3 + $0x28] sm:$0xf0] %v964
    %973 = vst [vmem:[#allocation3 + $0x30] sm:$0xf0] %v965
    %974 = vst [vmem:[#allocation3 + $0x38] sm:$0xf0] %v966
    %975 = vst [vmem:[#allocation3 + $0x40] sm:$0xf] %v867
    %976 = vst [vmem:[#allocation3 + $0x48] sm:$0xf] %v868
    %977 = vst [vmem:[#allocation3 + $0x50] sm:$0xf] %v869
    %978 = vst [vmem:[#allocation3 + $0x58] sm:$0xf] %v870
    %979 = vrot.lane.b32.xlu0 %v867, 127
    %v980 = vpop.permute.xlu0 %979
    %981 = vrot.lane.b32.xlu0 %v868, 127
    %v982 = vpop.permute.xlu0 %981
    %983 = vrot.lane.b32.xlu0 %v869, 127
    %v984 = vpop.permute.xlu0 %983
    %985 = vrot.lane.b32.xlu0 %v870, 127
    %v986 = vpop.permute.xlu0 %985
    %v987 = vsel %vm558, %v984, %v986
    %v988 = vsel %vm558, %v982, %v984
    %v989 = vsel %vm558, %v980, %v982
    %v990 = vsel %vm558, %v986, %v980
    %v991 = vmul.f32 %v989, %v272
    %v992 = vmul.f32 %v988, %v273
    %v993 = vmul.f32 %v987, %v274
    %v994 = vmul.f32 %v990, %v275
    %v999 = vrot.slane %v991, 4
    %v1000 = vrot.slane %v992, 4
    %v1001 = vrot.slane %v993, 4
    %v1002 = vrot.slane %v994, 4
    %1007 = vst [vmem:[#allocation3 + $0x40] sm:$0xf0] %v999
    %1008 = vst [vmem:[#allocation3 + $0x48] sm:$0xf0] %v1000
    %1009 = vst [vmem:[#allocation3 + $0x50] sm:$0xf0] %v1001
    %1010 = vst [vmem:[#allocation3 + $0x58] sm:$0xf0] %v1002
    %1011 = vrot.lane.b32.xlu0 %v867, 113
    %v1012 = vpop.permute.xlu0 %1011
    %1013 = vrot.lane.b32.xlu0 %v868, 113
    %v1014 = vpop.permute.xlu0 %1013
    %1015 = vrot.lane.b32.xlu0 %v869, 113
    %v1016 = vpop.permute.xlu0 %1015
    %1017 = vrot.lane.b32.xlu0 %v870, 113
    %v1018 = vpop.permute.xlu0 %1017
    %v1019 = vsel %vm579, %v1016, %v1018
    %v1020 = vsel %vm579, %v1014, %v1016
    %v1021 = vsel %vm579, %v1012, %v1014
    %v1022 = vsel %vm579, %v1018, %v1012
    %v1023 = vmul.f32 %v1021, %v288
    %v1024 = vmul.f32 %v1020, %v289
    %v1025 = vmul.f32 %v1019, %v290
    %v1026 = vmul.f32 %v1022, %v291
    %1027 = vst [vmem:[#allocation3 + $0x60] sm:$0xf] %v1023
    %1028 = vst [vmem:[#allocation3 + $0x68] sm:$0xf] %v1024
    %1029 = vst [vmem:[#allocation3 + $0x70] sm:$0xf] %v1025
    %1030 = vst [vmem:[#allocation3 + $0x78] sm:$0xf] %v1026
    %1031 = vrot.lane.b32.xlu0 %v867, 112
    %v1032 = vpop.permute.xlu0 %1031
    %1033 = vrot.lane.b32.xlu0 %v868, 112
    %v1034 = vpop.permute.xlu0 %1033
    %1035 = vrot.lane.b32.xlu0 %v869, 112
    %v1036 = vpop.permute.xlu0 %1035
    %1037 = vrot.lane.b32.xlu0 %v870, 112
    %v1038 = vpop.permute.xlu0 %1037
    %v1039 = vsel %vm600, %v1036, %v1038
    %v1040 = vsel %vm600, %v1034, %v1036
    %v1041 = vsel %vm600, %v1032, %v1034
    %v1042 = vsel %vm600, %v1038, %v1032
    %v1043 = vmul.f32 %v1041, %v296
    %v1044 = vmul.f32 %v1040, %v297
    %v1045 = vmul.f32 %v1039, %v298
    %v1046 = vmul.f32 %v1042, %v299
    %v1051 = vrot.slane %v1043, 4
    %v1052 = vrot.slane %v1044, 4
    %v1053 = vrot.slane %v1045, 4
    %v1054 = vrot.slane %v1046, 4
    %1059 = vst [vmem:[#allocation3 + $0x60] sm:$0xf0] %v1051
    %1060 = vst [vmem:[#allocation3 + $0x68] sm:$0xf0] %v1052
    %1061 = vst [vmem:[#allocation3 + $0x70] sm:$0xf0] %v1053
    %1062 = vst [vmem:[#allocation3 + $0x78] sm:$0xf0] %v1054
    %1063 = vrot.lane.b32.xlu0 %v867, 111
    %v1064 = vpop.permute.xlu0 %1063
    %1065 = vrot.lane.b32.xlu0 %v868, 111
    %v1066 = vpop.permute.xlu0 %1065
    %1067 = vrot.lane.b32.xlu0 %v869, 111
    %v1068 = vpop.permute.xlu0 %1067
    %1069 = vrot.lane.b32.xlu0 %v870, 111
    %v1070 = vpop.permute.xlu0 %1069
    %v1071 = vsel %vm621, %v1068, %v1070
    %v1072 = vsel %vm621, %v1066, %v1068
    %v1073 = vsel %vm621, %v1064, %v1066
    %v1074 = vsel %vm621, %v1070, %v1064
    %v1075 = vmul.f32 %v1073, %v308
    %v1076 = vmul.f32 %v1072, %v309
    %v1077 = vmul.f32 %v1071, %v310
    %v1078 = vmul.f32 %v1074, %v311
    %1079 = vst [vmem:[#allocation3 + $0x80] sm:$0xf] %v1075
    %1080 = vst [vmem:[#allocation3 + $0x88] sm:$0xf] %v1076
    %1081 = vst [vmem:[#allocation3 + $0x90] sm:$0xf] %v1077
    %1082 = vst [vmem:[#allocation3 + $0x98] sm:$0xf] %v1078
    %v1083 = vld [vmem:[#allocation3] sm:$0xff]
    %v1084 = vld [vmem:[#allocation3 + $0x8] sm:$0xff]
    %v1085 = vld [vmem:[#allocation3 + $0x10] sm:$0xff]
    %v1086 = vld [vmem:[#allocation3 + $0x18] sm:$0xff]
    %v1087 = vld [vmem:[#allocation3 + $0x20] sm:$0xff]
    %v1088 = vld [vmem:[#allocation3 + $0x28] sm:$0xff]
    %v1089 = vld [vmem:[#allocation3 + $0x30] sm:$0xff]
    %v1090 = vld [vmem:[#allocation3 + $0x38] sm:$0xff]
    %v1091 = vld [vmem:[#allocation3 + $0x40] sm:$0xff]
    %v1092 = vld [vmem:[#allocation3 + $0x48] sm:$0xff]
    %v1093 = vld [vmem:[#allocation3 + $0x50] sm:$0xff]
    %v1094 = vld [vmem:[#allocation3 + $0x58] sm:$0xff]
    %v1095 = vld [vmem:[#allocation3 + $0x60] sm:$0xff]
    %v1096 = vld [vmem:[#allocation3 + $0x68] sm:$0xff]
    %v1097 = vld [vmem:[#allocation3 + $0x70] sm:$0xff]
    %v1098 = vld [vmem:[#allocation3 + $0x78] sm:$0xff]
    %v1099 = vld [vmem:[#allocation3 + $0x80] sm:$0xf]
    %v1100 = vld [vmem:[#allocation3 + $0x88] sm:$0xf]
    %v1101 = vld [vmem:[#allocation3 + $0x90] sm:$0xf]
    %v1102 = vld [vmem:[#allocation3 + $0x98] sm:$0xf]
    %vm1103 = vcmask 293888
    %v1105 = vsel %vm1103, %v96, 0
    %v1108 = vsel %vm816, %v1099, 0
    %v1111 = vsel %vm816, %v1100, 0
    %v1114 = vsel %vm816, %v1101, 0
    %v1117 = vsel %vm816, %v1102, 0
    %1119 = vmatprep.subr.mxu0 %v1084
    %1120 = vmatpush1.msra.mxu0 %v1083
    %1121 = vmatprep.subr.mxu0 %v1088
    %1122 = vmatpush1.msra.mxu0 %v1087
    %1123 = vmatprep.subr.mxu0 %v1092
    %1124 = vmatpush1.msra.mxu0 %v1091
    %1125 = vmatprep.subr.mxu0 %v1096
    %1126 = vmatpush1.msra.mxu0 %v1095
    %1127 = vmatprep.subr.mxu0 %v1111
    %1128 = vmatpush1.msra.mxu0 %v1108
    %1129 = vmatprep.subr.mxu0 0.0
    %1130 = vmatpush1.msra.mxu0 0.0
    %1131 = vmatprep.subr.mxu0 0.0
    %1132 = vmatpush1.msra.mxu0 0.0
    %1133 = vmatprep.subr.mxu0 0.0
    %1134 = vmatpush1.msra.mxu0 0.0
    %1135 = vmatprep.subr.mxu0 0.0
    %1136 = vmatpush1.msra.mxu0 0.0
    %1137 = vmatprep.subr.mxu0 0.0
    %1138 = vmatpush1.msra.mxu0 0.0
    %1139 = vmatprep.subr.mxu0 0.0
    %1140 = vmatpush1.msra.mxu0 0.0
    %1141 = vmatprep.subr.mxu0 0.0
    %1142 = vmatpush1.msra.mxu0 0.0
    %1143 = vmatprep.subr.mxu0 0.0
    %1144 = vmatpush1.msra.mxu0 0.0
    %1145 = vmatprep.subr.mxu0 0.0
    %1146 = vmatpush1.msra.mxu0 0.0
    %1147 = vmatprep.subr.mxu0 0.0
    %1148 = vmatpush1.msra.mxu0 0.0
    %1149 = vmatprep.subr.mxu0 0.0
    %1150 = vmatpush1.msra.mxu0 0.0
    %1151 = vmatprep.subr.mxu0 0.0
    %1152 = vmatpush1.msra.mxu0 0.0
    %1153 = vmatprep.subr.mxu0 0.0
    %1154 = vmatpush1.msra.mxu0 0.0
    %1155 = vmatprep.subr.mxu0 0.0
    %1156 = vmatpush1.msra.mxu0 0.0
    %1157 = vmatprep.subr.mxu0 0.0
    %1158 = vmatpush1.msra.mxu0 0.0
    %1159 = vmatprep.subr.mxu0 0.0
    %1160 = vmatpush1.msra.mxu0 0.0
    %1161 = vmatprep.subr.mxu0 0.0
    %1162 = vmatpush1.msra.mxu0 0.0
    %1163 = vmatprep.subr.mxu0 0.0
    %1164 = vmatpush1.msra.mxu0 0.0
    %1165 = vmatprep.subr.mxu0 0.0
    %1166 = vmatpush1.msra.mxu0 0.0
    %1167 = vmatprep.subr.mxu0 0.0
    %1168 = vmatpush1.msra.mxu0 0.0
    %1169 = vmatprep.subr.mxu0 0.0
    %1170 = vmatpush1.msra.mxu0 0.0
    %1171 = vmatprep.subr.mxu0 0.0
    %1172 = vmatpush1.msra.mxu0 0.0
    %1173 = vmatprep.subr.mxu0 0.0
    %1174 = vmatpush1.msra.mxu0 0.0
    %1175 = vmatprep.subr.mxu0 0.0
    %1176 = vmatpush1.msra.mxu0 0.0
    %1177 = vmatprep.subr.mxu0 0.0
    %1178 = vmatpush1.msra.mxu0 0.0
    %1179 = vmatprep.subr.mxu0 0.0
    %1180 = vmatpush1.msra.mxu0 0.0
    %1181 = vmatprep.subr.mxu0 0.0
    %1182 = vmatpush1.msra.mxu0 0.0
    %1183 = vmatprep.mubr.f32.mxu0 0.0
    %1184 = vmatmul.mubr.f32.gmra.mrb[0].mxu0 %v1105
    %v1185 = vpop.f32.mrb[0].mxu0
    %v1186 = vadd.f32 0.0, %v1185
    %v1187 = vpop.f32.mrb[0].mxu0
    %v1188 = vadd.f32 0.0, %v1187
    %1189 = vdwg.mxu0
    %1190 = vmatprep.subr.mxu0 %v1086
    %1191 = vmatpush1.msra.mxu0 %v1085
    %1192 = vmatprep.subr.mxu0 %v1090
    %1193 = vmatpush1.msra.mxu0 %v1089
    %1194 = vmatprep.subr.mxu0 %v1094
    %1195 = vmatpush1.msra.mxu0 %v1093
    %1196 = vmatprep.subr.mxu0 %v1098
    %1197 = vmatpush1.msra.mxu0 %v1097
    %1198 = vmatprep.subr.mxu0 %v1117
    %1199 = vmatpush1.msra.mxu0 %v1114
    %1200 = vmatprep.subr.mxu0 0.0
    %1201 = vmatpush1.msra.mxu0 0.0
    %1202 = vmatprep.subr.mxu0 0.0
    %1203 = vmatpush1.msra.mxu0 0.0
    %1204 = vmatprep.subr.mxu0 0.0
    %1205 = vmatpush1.msra.mxu0 0.0
    %1206 = vmatprep.subr.mxu0 0.0
    %1207 = vmatpush1.msra.mxu0 0.0
    %1208 = vmatprep.subr.mxu0 0.0
    %1209 = vmatpush1.msra.mxu0 0.0
    %1210 = vmatprep.subr.mxu0 0.0
    %1211 = vmatpush1.msra.mxu0 0.0
    %1212 = vmatprep.subr.mxu0 0.0
    %1213 = vmatpush1.msra.mxu0 0.0
    %1214 = vmatprep.subr.mxu0 0.0
    %1215 = vmatpush1.msra.mxu0 0.0
    %1216 = vmatprep.subr.mxu0 0.0
    %1217 = vmatpush1.msra.mxu0 0.0
    %1218 = vmatprep.subr.mxu0 0.0
    %1219 = vmatpush1.msra.mxu0 0.0
    %1220 = vmatprep.subr.mxu0 0.0
    %1221 = vmatpush1.msra.mxu0 0.0
    %1222 = vmatprep.subr.mxu0 0.0
    %1223 = vmatpush1.msra.mxu0 0.0
    %1224 = vmatprep.subr.mxu0 0.0
    %1225 = vmatpush1.msra.mxu0 0.0
    %1226 = vmatprep.subr.mxu0 0.0
    %1227 = vmatpush1.msra.mxu0 0.0
    %1228 = vmatprep.subr.mxu0 0.0
    %1229 = vmatpush1.msra.mxu0 0.0
    %1230 = vmatprep.subr.mxu0 0.0
    %1231 = vmatpush1.msra.mxu0 0.0
    %1232 = vmatprep.subr.mxu0 0.0
    %1233 = vmatpush1.msra.mxu0 0.0
    %1234 = vmatprep.subr.mxu0 0.0
    %1235 = vmatpush1.msra.mxu0 0.0
    %1236 = vmatprep.subr.mxu0 0.0
    %1237 = vmatpush1.msra.mxu0 0.0
    %1238 = vmatprep.subr.mxu0 0.0
    %1239 = vmatpush1.msra.mxu0 0.0
    %1240 = vmatprep.subr.mxu0 0.0
    %1241 = vmatpush1.msra.mxu0 0.0
    %1242 = vmatprep.subr.mxu0 0.0
    %1243 = vmatpush1.msra.mxu0 0.0
    %1244 = vmatprep.subr.mxu0 0.0
    %1245 = vmatpush1.msra.mxu0 0.0
    %1246 = vmatprep.subr.mxu0 0.0
    %1247 = vmatpush1.msra.mxu0 0.0
    %1248 = vmatprep.subr.mxu0 0.0
    %1249 = vmatpush1.msra.mxu0 0.0
    %1250 = vmatprep.subr.mxu0 0.0
    %1251 = vmatpush1.msra.mxu0 0.0
    %1252 = vmatprep.subr.mxu0 0.0
    %1253 = vmatpush1.msra.mxu0 0.0
    %1254 = vmatprep.mubr.f32.mxu0 0.0
    %1255 = vmatmul.mubr.f32.gmra.mrb[0].mxu0 %v1105
    %v1256 = vpop.f32.mrb[0].mxu0
    %v1257 = vadd.f32 0.0, %v1256
    %v1258 = vpop.f32.mrb[0].mxu0
    %v1259 = vadd.f32 0.0, %v1258
    %1260 = vdwg.mxu0
    %v1263 = vcombine.low %v1186, %v1188
    %v1265 = vunpack.c.l.s4 1983009808
    %v1266 = vunpack.c.0.s8 %v1265
    %v1267 = vlaneseq
    %v1268 = vshrl.u32 %v1267, 7
    %v1269 = vsub.s32 %v1266, %v1268
    %v1270 = vrot.slane %v1263, %v1269
    %1272 = vst [vmem:[#allocation15] sm:$0xf] %v1270
    %v1275 = vcombine.low %v1257, %v1259
    %v1277 = vunpack.c.l.s4 1983009808
    %v1278 = vunpack.c.0.s8 %v1277
    %v1279 = vlaneseq
    %v1280 = vshrl.u32 %v1279, 7
    %v1281 = vsub.s32 %v1278, %v1280
    %v1282 = vrot.slane %v1275, %v1281
    %s1284 = scalar_lea.vmem [#allocation15], 4
    %1285 = vst [vmem:[%s1284] sm:$0xf] %v1282
    // Predicated region
    $region50: #{align_module_full_forward.2} parent=1 // pred_check
      _
    $region51: #{align_module_full_forward.2} parent=1 // pred_check_branch
      %1287 = sbr.rel (0) target = $region53
    $region52: #{align_module_full_forward.2} parent=1 // pred_region
      %s1289 = ssub.s32 128, 128
      %1290 = vsyncadd [#allocation6], %s1289
      %s1291 = sshll.u32 [#allocation15], 4
      %s1292 = int_to_ptr.vmem [resolvable:$true] %s1291
      %1297 = dma.vmem_to_hbm [thread:$0]  %s1292, 128, %s6, [#allocation6], 64, 64, 4
    $region53: #{align_module_full_forward.2} parent=1 // pred_fallthru
      _
    // Predicated region
    $region54: #{align_module_full_forward.2} parent=1 // pred_check
      _
    $region55: #{align_module_full_forward.2} parent=1 // pred_check_branch
      %1299 = sbr.rel (0) target = $region57
    $region56: #{align_module_full_forward.2} parent=1 // pred_region
      %1300 = dma.done [#allocation6], 128
    $region57: #{align_module_full_forward.2} parent=1 // pred_fallthru
      _
    %1301 = vsyncpa [#allocation5], 1
    %1302 = vsyncpa [#allocation8], 1
    %1303 = vsyncpa [#allocation11], 1
    %1304 = vsyncpa [#allocation14], 1
    %1305 = vsyncpa [#allocation6], 1

</llo_original>
